<compile_context>
chip_gen: v7x
topology: tpu7x:2x2x1
jax: 0.10.0
libtpu: 0.0.40
codegen_flags: <defaults>
</compile_context>

<pallas_src>
import math
import jax
import jax.numpy as jnp
from jax.experimental import pallas as pl
from jax.experimental.pallas import tpu as pltpu

IN_DIM = 28 * 28
OUT_DIM = 28 * 28
IN_PAD = 896   # 7 * 128 lane-dense input width
OUT_PAD = 896  # 7 * 128 lane-dense output width

# Original torch module layer structure.
LAYer = None  # (unused placeholder to keep linters quiet)
LAYER_DIMS = [IN_DIM, 512, 256, 128, 64, 32, 64, 128, 256, 512, OUT_DIM]
RELU_AFTER = [True, True, True, True, False, True, True, True, True, False]
NUM_LAYERS = 10

# After folding layers 4 & 5 (no nonlinearity between them) into one 64->64 matmul:
NUM_KERNEL_LAYERS = 9
KERNEL_RELU = [True] * 8 + [False]


def _round_up(n, m):
    return (n + m - 1) // m * m


def _choose_batch_tiling(B):
    """Balanced batch tiles: <=512 rows each, >=2 tiles when there is enough work
    (so v7x's second TensorCore is used), rows rounded to 16 (bf16 sublane pack)."""
    MAX_TB = 512
    min_tiles = 2 if B >= 32 else 1
    nt = max(pl.cdiv(B, MAX_TB), min_tiles)
    tb = _round_up(pl.cdiv(B, nt), 16)
    nt = pl.cdiv(B, tb)
    return tb, nt * tb


def autoencoder_kernel(x_ref, *refs):
    """refs = (w0..w8, b0..b8, out).  x_ref: (TB, 896) bf16, out: (TB, 896) bf16."""
    n = NUM_KERNEL_LAYERS
    w_refs = refs[:n]
    b_refs = refs[n:2 * n]
    o_ref = refs[2 * n]

    h = x_ref[...]  # bf16 LHS
    for i in range(n):
        acc = jnp.dot(h, w_refs[i][...], preferred_element_type=jnp.float32)
        acc = acc + b_refs[i][...]          # f32 bias add
        if KERNEL_RELU[i]:
            acc = jnp.maximum(acc, 0.0)     # f32 ReLU
        if i + 1 < n:
            h = acc.astype(jnp.bfloat16)    # bf16 LHS for next MXU pass
        else:
            o_ref[...] = acc.astype(o_ref.dtype)  # bf16 lane-dense store


def init_params(key):
    """Deterministic init mimicking torch.nn.Linear default U(-1/sqrt(fan_in), +1/sqrt(fan_in))."""
    weights, biases = [], []
    for i in range(NUM_LAYERS):
        fan_in, fan_out = LAYER_DIMS[i], LAYER_DIMS[i + 1]
        key, kw, kb = jax.random.split(key, 3)
        bound = 1.0 / math.sqrt(fan_in)
        w = jax.random.uniform(kw, (fan_in, fan_out), jnp.float32, -bound, bound)
        b = jax.random.uniform(kb, (1, fan_out), jnp.float32, -bound, bound)
        weights.append(w)
        biases.append(b)
    return weights, biases


def prepare_params(weights, biases):
    """One-time prep (call at model setup, NOT per forward):
    fold the ReLU-free 64->32->64 pair, zero-pad 784->896 input / output dims and
    64->128 hidden dims (all exact), cast weights to bf16."""
    # Layer 4 (64->32, no ReLU) followed by layer 5 (32->64): exact fold.
    w45 = weights[4] @ weights[5]                 # (64, 64)
    b45 = biases[4] @ weights[5] + biases[5]      # (1, 64)
    ws = list(weights[:4]) + [w45] + list(weights[6:])
    bs = list(biases[:4]) + [b45] + list(biases[6:])

    # Lane-dense input: pad w0 fan_in 784 -> 896 with zero rows (x columns padded in wrapper).
    ws[0] = jnp.pad(ws[0], ((0, IN_PAD - IN_DIM), (0, 0)))

    # Pad the 64-wide hidden dims to 128.  Exact: padded weight rows/cols and bias
    # entries are zero, and ReLU(0) = 0, so the padded lanes stay exactly zero.
    ws[3] = jnp.pad(ws[3], ((0, 0), (0, 64)))     # 128->64  becomes 128->128
    bs[3] = jnp.pad(bs[3], ((0, 0), (0, 64)))
    ws[4] = jnp.pad(ws[4], ((0, 64), (0, 64)))    # folded 64->64 becomes 128->128
    bs[4] = jnp.pad(bs[4], ((0, 0), (0, 64)))
    ws[5] = jnp.pad(ws[5], ((0, 64), (0, 0)))     # 64->128 becomes 128->128

    # Lane-dense output: pad 784 -> 896 with zero columns (sliced off in the wrapper).
    ws[-1] = jnp.pad(ws[-1], ((0, 0), (0, OUT_PAD - OUT_DIM)))
    bs[-1] = jnp.pad(bs[-1], ((0, 0), (0, OUT_PAD - OUT_DIM)))

    ws = [w.astype(jnp.bfloat16) for w in ws]     # halve weight DMA, native MXU dtype
    bs = [b.astype(jnp.float32) for b in bs]      # biases stay f32 (tiny)
    # TODO(synk): optionally cast ws[0]/ws[-1] to fp8 on v7x (gated on measured accuracy).
    return ws, bs


def deep_autoencoder_forward(x, prep_weights, prep_biases):
    """x: any shape with leading batch dim; flattened to (B, 784) like x.view(x.size(0), -1).
    prep_weights / prep_biases must come from prepare_params (done once at setup)."""
    B = x.shape[0]
    x2 = x.reshape(B, -1)
    assert x2.shape[1] == IN_DIM, f"expected {IN_DIM} features, got {x2.shape[1]}"

    TB, padded_B = _choose_batch_tiling(B)

    xb = x2.astype(jnp.bfloat16)
    xb = jnp.pad(xb, ((0, padded_B - B), (0, IN_PAD - IN_DIM)))

    grid = (padded_B // TB,)
    in_specs = [pl.BlockSpec((TB, IN_PAD), lambda i: (i, 0))]
    # Weights/biases: full-array blocks revisited every grid step -> DMA'd once, VMEM-resident.
    in_specs += [pl.BlockSpec(w.shape, lambda i: (0, 0)) for w in prep_weights]
    in_specs += [pl.BlockSpec(b.shape, lambda i: (0, 0)) for b in prep_biases]
    out_spec = pl.BlockSpec((TB, OUT_PAD), lambda i: (i, 0))

    fn = pl.pallas_call(
        autoencoder_kernel,
        out_shape=jax.ShapeDtypeStruct((padded_B, OUT_PAD), jnp.bfloat16),
        grid=grid,
        in_specs=in_specs,
        out_specs=out_spec,
        compiler_params=pltpu.CompilerParams(
            dimension_semantics=("parallel",),      # shard batch tiles across TCs on v7x
            vmem_limit_bytes=32 * 1024 * 1024,      # TB=512 footprint also fits v5e
        ),
    )
    out = fn(xb, *prep_weights, *prep_biases)
    # Slice off batch/feature padding and upcast to f32 (fuses with the slice).
    return out[:B, :OUT_DIM].astype(jnp.float32)


def reference_prepared(x, kw, kb):
    """Pure-JAX reference following the same prepared (folded, padded, bf16) compute path."""
    B = x.shape[0]
    h = x.reshape(B, -1).astype(jnp.float32)
    h = jnp.pad(h, ((0, 0), (0, IN_PAD - IN_DIM))).astype(jnp.bfloat16)
    n = len(kw)
    for i in range(n):
        acc = jnp.dot(h, kw[i], preferred_element_type=jnp.float32) + kb[i]
        if KERNEL_RELU[i]:
            acc = jnp.maximum(acc, 0.0)
        if i + 1 < n:
            h = acc.astype(jnp.bfloat16)
        else:
            h = acc.astype(jnp.bfloat16).astype(jnp.float32)
    return h[:, :OUT_DIM]


def reference_spec_f32(x, weights, biases):
    """Full-precision reference matching the original torch module exactly (unfolded, f32)."""
    h = x.reshape(x.shape[0], -1).astype(jnp.float32)
    for i in range(NUM_LAYERS):
        h = h @ weights[i] + biases[i]
        if RELU_AFTER[i]:
            h = jnp.maximum(h, 0.0)
    return h


if __name__ == "__main__":
    key = jax.random.PRNGKey(0)
    key, kx = jax.random.split(key)

    # MNIST-like input: (batch=2, channels=1, 28, 28), flattened by forward().
    x = jax.random.normal(kx, (2, 1, 28, 28), dtype=jnp.float32)

    weights, biases = init_params(key)
    # One-time parameter prep (fold / pad / bf16 cast), hoisted out of the forward path.
    kw, kb = prepare_params(weights, biases)

    out = deep_autoencoder_forward(x, kw, kb)
    out = jax.block_until_ready(out)
    assert out.shape == (2, 784), out.shape

    # Tight check vs. a reference that follows the same bf16/f32 compute path.
    ref = reference_prepared(x, kw, kb)
    assert jnp.allclose(out, ref, atol=1e-2, rtol=1e-2), "mismatch vs bf16 reference"

    # Loose sanity check vs. the exact f32 module semantics (bf16 + fold drift only).
    ref32 = reference_spec_f32(x, weights, biases)
    assert float(jnp.max(jnp.abs(out - ref32))) < 0.2, "drift vs f32 spec reference too large"

    print("KERNEL_OK")
</pallas_src>

<mosaic_0001>
module attributes {stable_mosaic.version = 11 : i64} {
  func.func @autoencoder_kernel(%arg0: i32, %arg1: memref<16x896xbf16, #tpu.memory_space<vmem>>, %arg2: memref<896x512xbf16, #tpu.memory_space<vmem>>, %arg3: memref<512x256xbf16, #tpu.memory_space<vmem>>, %arg4: memref<256x128xbf16, #tpu.memory_space<vmem>>, %arg5: memref<128x128xbf16, #tpu.memory_space<vmem>>, %arg6: memref<128x128xbf16, #tpu.memory_space<vmem>>, %arg7: memref<128x128xbf16, #tpu.memory_space<vmem>>, %arg8: memref<128x256xbf16, #tpu.memory_space<vmem>>, %arg9: memref<256x512xbf16, #tpu.memory_space<vmem>>, %arg10: memref<512x896xbf16, #tpu.memory_space<vmem>>, %arg11: memref<1x512xf32, #tpu.memory_space<vmem>>, %arg12: memref<1x256xf32, #tpu.memory_space<vmem>>, %arg13: memref<1x128xf32, #tpu.memory_space<vmem>>, %arg14: memref<1x128xf32, #tpu.memory_space<vmem>>, %arg15: memref<1x128xf32, #tpu.memory_space<vmem>>, %arg16: memref<1x128xf32, #tpu.memory_space<vmem>>, %arg17: memref<1x256xf32, #tpu.memory_space<vmem>>, %arg18: memref<1x512xf32, #tpu.memory_space<vmem>>, %arg19: memref<1x896xf32, #tpu.memory_space<vmem>>, %arg20: memref<16x896xbf16, #tpu.memory_space<vmem>>) attributes {dimension_semantics = [#tpu.dimension_semantics<parallel>], iteration_bounds = array<i64: 1>, scalar_prefetch = 0 : i64, scratch_operands = 0 : i64, tpu.core_type = #tpu.core_type<tc>, window_params = [{transform_indices = @transform_0, window_bounds = array<i64: 16, 896>}, {pipeline_mode = #tpu.pipeline_mode<synchronous>, transform_indices = @transform_1, window_bounds = array<i64: 896, 512>}, {pipeline_mode = #tpu.pipeline_mode<synchronous>, transform_indices = @transform_2, window_bounds = array<i64: 512, 256>}, {pipeline_mode = #tpu.pipeline_mode<synchronous>, transform_indices = @transform_3, window_bounds = array<i64: 256, 128>}, {pipeline_mode = #tpu.pipeline_mode<synchronous>, transform_indices = @transform_4, window_bounds = array<i64: 128, 128>}, {pipeline_mode = #tpu.pipeline_mode<synchronous>, transform_indices = @transform_5, window_bounds = array<i64: 128, 128>}, {pipeline_mode = #tpu.pipeline_mode<synchronous>, transform_indices = @transform_6, window_bounds = array<i64: 128, 128>}, {pipeline_mode = #tpu.pipeline_mode<synchronous>, transform_indices = @transform_7, window_bounds = array<i64: 128, 256>}, {pipeline_mode = #tpu.pipeline_mode<synchronous>, transform_indices = @transform_8, window_bounds = array<i64: 256, 512>}, {pipeline_mode = #tpu.pipeline_mode<synchronous>, transform_indices = @transform_9, window_bounds = array<i64: 512, 896>}, {pipeline_mode = #tpu.pipeline_mode<synchronous>, transform_indices = @transform_10, window_bounds = array<i64: 1, 512>}, {pipeline_mode = #tpu.pipeline_mode<synchronous>, transform_indices = @transform_11, window_bounds = array<i64: 1, 256>}, {pipeline_mode = #tpu.pipeline_mode<synchronous>, transform_indices = @transform_12, window_bounds = array<i64: 1, 128>}, {pipeline_mode = #tpu.pipeline_mode<synchronous>, transform_indices = @transform_13, window_bounds = array<i64: 1, 128>}, {pipeline_mode = #tpu.pipeline_mode<synchronous>, transform_indices = @transform_14, window_bounds = array<i64: 1, 128>}, {pipeline_mode = #tpu.pipeline_mode<synchronous>, transform_indices = @transform_15, window_bounds = array<i64: 1, 128>}, {pipeline_mode = #tpu.pipeline_mode<synchronous>, transform_indices = @transform_16, window_bounds = array<i64: 1, 256>}, {pipeline_mode = #tpu.pipeline_mode<synchronous>, transform_indices = @transform_17, window_bounds = array<i64: 1, 512>}, {pipeline_mode = #tpu.pipeline_mode<synchronous>, transform_indices = @transform_18, window_bounds = array<i64: 1, 896>}, {transform_indices = @transform_19, window_bounds = array<i64: 16, 896>}]} {
    %c0 = arith.constant 0 : index
    %c0_0 = arith.constant 0 : index
    %0 = vector.load %arg1[%c0, %c0_0] : memref<16x896xbf16, #tpu.memory_space<vmem>>, vector<16x896xbf16>
    %c0_1 = arith.constant 0 : index
    %c0_2 = arith.constant 0 : index
    %1 = vector.load %arg2[%c0_1, %c0_2] : memref<896x512xbf16, #tpu.memory_space<vmem>>, vector<896x512xbf16>
    %cst = arith.constant dense<0.000000e+00> : vector<16x512xf32>
    %2 = tpu.matmul %0, %1, %cst {dimension_numbers = #tpu.dot_dimension_numbers<[1], [0], [0], [1], [0, 0, 1, 1], [], []>} : vector<16x896xbf16>, vector<896x512xbf16>, vector<16x512xf32> -> vector<16x512xf32>
    %c0_3 = arith.constant 0 : index
    %c0_4 = arith.constant 0 : index
    %3 = vector.load %arg11[%c0_3, %c0_4] : memref<1x512xf32, #tpu.memory_space<vmem>>, vector<1x512xf32>
    %4 = vector.broadcast %3 : vector<1x512xf32> to vector<16x512xf32>
    %5 = arith.addf %2, %4 : vector<16x512xf32>
    %cst_5 = arith.constant 0.000000e+00 : f32
    %6 = vector.broadcast %cst_5 : f32 to vector<16x512xf32>
    %7 = arith.maximumf %5, %6 : vector<16x512xf32>
    %8 = arith.truncf %7 : vector<16x512xf32> to vector<16x512xbf16>
    %c0_6 = arith.constant 0 : index
    %c0_7 = arith.constant 0 : index
    %9 = vector.load %arg3[%c0_6, %c0_7] : memref<512x256xbf16, #tpu.memory_space<vmem>>, vector<512x256xbf16>
    %cst_8 = arith.constant dense<0.000000e+00> : vector<16x256xf32>
    %10 = tpu.matmul %8, %9, %cst_8 {dimension_numbers = #tpu.dot_dimension_numbers<[1], [0], [0], [1], [0, 0, 1, 1], [], []>} : vector<16x512xbf16>, vector<512x256xbf16>, vector<16x256xf32> -> vector<16x256xf32>
    %c0_9 = arith.constant 0 : index
    %c0_10 = arith.constant 0 : index
    %11 = vector.load %arg12[%c0_9, %c0_10] : memref<1x256xf32, #tpu.memory_space<vmem>>, vector<1x256xf32>
    %12 = vector.broadcast %11 : vector<1x256xf32> to vector<16x256xf32>
    %13 = arith.addf %10, %12 : vector<16x256xf32>
    %cst_11 = arith.constant 0.000000e+00 : f32
    %14 = vector.broadcast %cst_11 : f32 to vector<16x256xf32>
    %15 = arith.maximumf %13, %14 : vector<16x256xf32>
    %16 = arith.truncf %15 : vector<16x256xf32> to vector<16x256xbf16>
    %c0_12 = arith.constant 0 : index
    %c0_13 = arith.constant 0 : index
    %17 = vector.load %arg4[%c0_12, %c0_13] : memref<256x128xbf16, #tpu.memory_space<vmem>>, vector<256x128xbf16>
    %cst_14 = arith.constant dense<0.000000e+00> : vector<16x128xf32>
    %18 = tpu.matmul %16, %17, %cst_14 {dimension_numbers = #tpu.dot_dimension_numbers<[1], [0], [0], [1], [0, 0, 1, 1], [], []>} : vector<16x256xbf16>, vector<256x128xbf16>, vector<16x128xf32> -> vector<16x128xf32>
    %c0_15 = arith.constant 0 : index
    %c0_16 = arith.constant 0 : index
    %19 = vector.load %arg13[%c0_15, %c0_16] : memref<1x128xf32, #tpu.memory_space<vmem>>, vector<1x128xf32>
    %20 = vector.broadcast %19 : vector<1x128xf32> to vector<16x128xf32>
    %21 = arith.addf %18, %20 : vector<16x128xf32>
    %cst_17 = arith.constant 0.000000e+00 : f32
    %22 = vector.broadcast %cst_17 : f32 to vector<16x128xf32>
    %23 = arith.maximumf %21, %22 : vector<16x128xf32>
    %24 = arith.truncf %23 : vector<16x128xf32> to vector<16x128xbf16>
    %c0_18 = arith.constant 0 : index
    %c0_19 = arith.constant 0 : index
    %25 = vector.load %arg5[%c0_18, %c0_19] : memref<128x128xbf16, #tpu.memory_space<vmem>>, vector<128x128xbf16>
    %cst_20 = arith.constant dense<0.000000e+00> : vector<16x128xf32>
    %26 = tpu.matmul %24, %25, %cst_20 {dimension_numbers = #tpu.dot_dimension_numbers<[1], [0], [0], [1], [0, 0, 1, 1], [], []>} : vector<16x128xbf16>, vector<128x128xbf16>, vector<16x128xf32> -> vector<16x128xf32>
    %c0_21 = arith.constant 0 : index
    %c0_22 = arith.constant 0 : index
    %27 = vector.load %arg14[%c0_21, %c0_22] : memref<1x128xf32, #tpu.memory_space<vmem>>, vector<1x128xf32>
    %28 = vector.broadcast %27 : vector<1x128xf32> to vector<16x128xf32>
    %29 = arith.addf %26, %28 : vector<16x128xf32>
    %cst_23 = arith.constant 0.000000e+00 : f32
    %30 = vector.broadcast %cst_23 : f32 to vector<16x128xf32>
    %31 = arith.maximumf %29, %30 : vector<16x128xf32>
    %32 = arith.truncf %31 : vector<16x128xf32> to vector<16x128xbf16>
    %c0_24 = arith.constant 0 : index
    %c0_25 = arith.constant 0 : index
    %33 = vector.load %arg6[%c0_24, %c0_25] : memref<128x128xbf16, #tpu.memory_space<vmem>>, vector<128x128xbf16>
    %cst_26 = arith.constant dense<0.000000e+00> : vector<16x128xf32>
    %34 = tpu.matmul %32, %33, %cst_26 {dimension_numbers = #tpu.dot_dimension_numbers<[1], [0], [0], [1], [0, 0, 1, 1], [], []>} : vector<16x128xbf16>, vector<128x128xbf16>, vector<16x128xf32> -> vector<16x128xf32>
    %c0_27 = arith.constant 0 : index
    %c0_28 = arith.constant 0 : index
    %35 = vector.load %arg15[%c0_27, %c0_28] : memref<1x128xf32, #tpu.memory_space<vmem>>, vector<1x128xf32>
    %36 = vector.broadcast %35 : vector<1x128xf32> to vector<16x128xf32>
    %37 = arith.addf %34, %36 : vector<16x128xf32>
    %cst_29 = arith.constant 0.000000e+00 : f32
    %38 = vector.broadcast %cst_29 : f32 to vector<16x128xf32>
    %39 = arith.maximumf %37, %38 : vector<16x128xf32>
    %40 = arith.truncf %39 : vector<16x128xf32> to vector<16x128xbf16>
    %c0_30 = arith.constant 0 : index
    %c0_31 = arith.constant 0 : index
    %41 = vector.load %arg7[%c0_30, %c0_31] : memref<128x128xbf16, #tpu.memory_space<vmem>>, vector<128x128xbf16>
    %cst_32 = arith.constant dense<0.000000e+00> : vector<16x128xf32>
    %42 = tpu.matmul %40, %41, %cst_32 {dimension_numbers = #tpu.dot_dimension_numbers<[1], [0], [0], [1], [0, 0, 1, 1], [], []>} : vector<16x128xbf16>, vector<128x128xbf16>, vector<16x128xf32> -> vector<16x128xf32>
    %c0_33 = arith.constant 0 : index
    %c0_34 = arith.constant 0 : index
    %43 = vector.load %arg16[%c0_33, %c0_34] : memref<1x128xf32, #tpu.memory_space<vmem>>, vector<1x128xf32>
    %44 = vector.broadcast %43 : vector<1x128xf32> to vector<16x128xf32>
    %45 = arith.addf %42, %44 : vector<16x128xf32>
    %cst_35 = arith.constant 0.000000e+00 : f32
    %46 = vector.broadcast %cst_35 : f32 to vector<16x128xf32>
    %47 = arith.maximumf %45, %46 : vector<16x128xf32>
    %48 = arith.truncf %47 : vector<16x128xf32> to vector<16x128xbf16>
    %c0_36 = arith.constant 0 : index
    %c0_37 = arith.constant 0 : index
    %49 = vector.load %arg8[%c0_36, %c0_37] : memref<128x256xbf16, #tpu.memory_space<vmem>>, vector<128x256xbf16>
    %cst_38 = arith.constant dense<0.000000e+00> : vector<16x256xf32>
    %50 = tpu.matmul %48, %49, %cst_38 {dimension_numbers = #tpu.dot_dimension_numbers<[1], [0], [0], [1], [0, 0, 1, 1], [], []>} : vector<16x128xbf16>, vector<128x256xbf16>, vector<16x256xf32> -> vector<16x256xf32>
    %c0_39 = arith.constant 0 : index
    %c0_40 = arith.constant 0 : index
    %51 = vector.load %arg17[%c0_39, %c0_40] : memref<1x256xf32, #tpu.memory_space<vmem>>, vector<1x256xf32>
    %52 = vector.broadcast %51 : vector<1x256xf32> to vector<16x256xf32>
    %53 = arith.addf %50, %52 : vector<16x256xf32>
    %cst_41 = arith.constant 0.000000e+00 : f32
    %54 = vector.broadcast %cst_41 : f32 to vector<16x256xf32>
    %55 = arith.maximumf %53, %54 : vector<16x256xf32>
    %56 = arith.truncf %55 : vector<16x256xf32> to vector<16x256xbf16>
    %c0_42 = arith.constant 0 : index
    %c0_43 = arith.constant 0 : index
    %57 = vector.load %arg9[%c0_42, %c0_43] : memref<256x512xbf16, #tpu.memory_space<vmem>>, vector<256x512xbf16>
    %cst_44 = arith.constant dense<0.000000e+00> : vector<16x512xf32>
    %58 = tpu.matmul %56, %57, %cst_44 {dimension_numbers = #tpu.dot_dimension_numbers<[1], [0], [0], [1], [0, 0, 1, 1], [], []>} : vector<16x256xbf16>, vector<256x512xbf16>, vector<16x512xf32> -> vector<16x512xf32>
    %c0_45 = arith.constant 0 : index
    %c0_46 = arith.constant 0 : index
    %59 = vector.load %arg18[%c0_45, %c0_46] : memref<1x512xf32, #tpu.memory_space<vmem>>, vector<1x512xf32>
    %60 = vector.broadcast %59 : vector<1x512xf32> to vector<16x512xf32>
    %61 = arith.addf %58, %60 : vector<16x512xf32>
    %cst_47 = arith.constant 0.000000e+00 : f32
    %62 = vector.broadcast %cst_47 : f32 to vector<16x512xf32>
    %63 = arith.maximumf %61, %62 : vector<16x512xf32>
    %64 = arith.truncf %63 : vector<16x512xf32> to vector<16x512xbf16>
    %c0_48 = arith.constant 0 : index
    %c0_49 = arith.constant 0 : index
    %65 = vector.load %arg10[%c0_48, %c0_49] : memref<512x896xbf16, #tpu.memory_space<vmem>>, vector<512x896xbf16>
    %cst_50 = arith.constant dense<0.000000e+00> : vector<16x896xf32>
    %66 = tpu.matmul %64, %65, %cst_50 {dimension_numbers = #tpu.dot_dimension_numbers<[1], [0], [0], [1], [0, 0, 1, 1], [], []>} : vector<16x512xbf16>, vector<512x896xbf16>, vector<16x896xf32> -> vector<16x896xf32>
    %c0_51 = arith.constant 0 : index
    %c0_52 = arith.constant 0 : index
    %67 = vector.load %arg19[%c0_51, %c0_52] : memref<1x896xf32, #tpu.memory_space<vmem>>, vector<1x896xf32>
    %68 = vector.broadcast %67 : vector<1x896xf32> to vector<16x896xf32>
    %69 = arith.addf %66, %68 : vector<16x896xf32>
    %70 = arith.truncf %69 : vector<16x896xf32> to vector<16x896xbf16>
    %c0_53 = arith.constant 0 : index
    %c0_54 = arith.constant 0 : index
    %71 = vector.load %arg20[%c0_53, %c0_54] : memref<16x896xbf16, #tpu.memory_space<vmem>>, vector<16x896xbf16>
    tpu.vector_store %arg20[%c0_53, %c0_54], %70 {strides = array<i32>} : memref<16x896xbf16, #tpu.memory_space<vmem>>, vector<16x896xbf16>,
    return
  }
  func.func @transform_0(%arg0: i32) -> (i32, i32) {
    %c0_i32 = arith.constant 0 : i32
    %c0_i32_0 = arith.constant 0 : i32
    return %arg0, %c0_i32 : i32, i32
  }
  func.func @transform_1(%arg0: i32) -> (i32, i32) {
    %c0_i32 = arith.constant 0 : i32
    %c0_i32_0 = arith.constant 0 : i32
    %c0_i32_1 = arith.constant 0 : i32
    return %c0_i32, %c0_i32_0 : i32, i32
  }
  func.func @transform_2(%arg0: i32) -> (i32, i32) {
    %c0_i32 = arith.constant 0 : i32
    %c0_i32_0 = arith.constant 0 : i32
    %c0_i32_1 = arith.constant 0 : i32
    return %c0_i32, %c0_i32_0 : i32, i32
  }
  func.func @transform_3(%arg0: i32) -> (i32, i32) {
    %c0_i32 = arith.constant 0 : i32
    %c0_i32_0 = arith.constant 0 : i32
    %c0_i32_1 = arith.constant 0 : i32
    return %c0_i32, %c0_i32_0 : i32, i32
  }
  func.func @transform_4(%arg0: i32) -> (i32, i32) {
    %c0_i32 = arith.constant 0 : i32
    %c0_i32_0 = arith.constant 0 : i32
    %c0_i32_1 = arith.constant 0 : i32
    return %c0_i32, %c0_i32_0 : i32, i32
  }
  func.func @transform_5(%arg0: i32) -> (i32, i32) {
    %c0_i32 = arith.constant 0 : i32
    %c0_i32_0 = arith.constant 0 : i32
    %c0_i32_1 = arith.constant 0 : i32
    return %c0_i32, %c0_i32_0 : i32, i32
  }
  func.func @transform_6(%arg0: i32) -> (i32, i32) {
    %c0_i32 = arith.constant 0 : i32
    %c0_i32_0 = arith.constant 0 : i32
    %c0_i32_1 = arith.constant 0 : i32
    return %c0_i32, %c0_i32_0 : i32, i32
  }
  func.func @transform_7(%arg0: i32) -> (i32, i32) {
    %c0_i32 = arith.constant 0 : i32
    %c0_i32_0 = arith.constant 0 : i32
    %c0_i32_1 = arith.constant 0 : i32
    return %c0_i32, %c0_i32_0 : i32, i32
  }
  func.func @transform_8(%arg0: i32) -> (i32, i32) {
    %c0_i32 = arith.constant 0 : i32
    %c0_i32_0 = arith.constant 0 : i32
    %c0_i32_1 = arith.constant 0 : i32
    return %c0_i32, %c0_i32_0 : i32, i32
  }
  func.func @transform_9(%arg0: i32) -> (i32, i32) {
    %c0_i32 = arith.constant 0 : i32
    %c0_i32_0 = arith.constant 0 : i32
    %c0_i32_1 = arith.constant 0 : i32
    return %c0_i32, %c0_i32_0 : i32, i32
  }
  func.func @transform_10(%arg0: i32) -> (i32, i32) {
    %c0_i32 = arith.constant 0 : i32
    %c0_i32_0 = arith.constant 0 : i32
    %c0_i32_1 = arith.constant 0 : i32
    return %c0_i32, %c0_i32_0 : i32, i32
  }
  func.func @transform_11(%arg0: i32) -> (i32, i32) {
    %c0_i32 = arith.constant 0 : i32
    %c0_i32_0 = arith.constant 0 : i32
    %c0_i32_1 = arith.constant 0 : i32
    return %c0_i32, %c0_i32_0 : i32, i32
  }
  func.func @transform_12(%arg0: i32) -> (i32, i32) {
    %c0_i32 = arith.constant 0 : i32
    %c0_i32_0 = arith.constant 0 : i32
    %c0_i32_1 = arith.constant 0 : i32
    return %c0_i32, %c0_i32_0 : i32, i32
  }
  func.func @transform_13(%arg0: i32) -> (i32, i32) {
    %c0_i32 = arith.constant 0 : i32
    %c0_i32_0 = arith.constant 0 : i32
    %c0_i32_1 = arith.constant 0 : i32
    return %c0_i32, %c0_i32_0 : i32, i32
  }
  func.func @transform_14(%arg0: i32) -> (i32, i32) {
    %c0_i32 = arith.constant 0 : i32
    %c0_i32_0 = arith.constant 0 : i32
    %c0_i32_1 = arith.constant 0 : i32
    return %c0_i32, %c0_i32_0 : i32, i32
  }
  func.func @transform_15(%arg0: i32) -> (i32, i32) {
    %c0_i32 = arith.constant 0 : i32
    %c0_i32_0 = arith.constant 0 : i32
    %c0_i32_1 = arith.constant 0 : i32
    return %c0_i32, %c0_i32_0 : i32, i32
  }
  func.func @transform_16(%arg0: i32) -> (i32, i32) {
    %c0_i32 = arith.constant 0 : i32
    %c0_i32_0 = arith.constant 0 : i32
    %c0_i32_1 = arith.constant 0 : i32
    return %c0_i32, %c0_i32_0 : i32, i32
  }
  func.func @transform_17(%arg0: i32) -> (i32, i32) {
    %c0_i32 = arith.constant 0 : i32
    %c0_i32_0 = arith.constant 0 : i32
    %c0_i32_1 = arith.constant 0 : i32
    return %c0_i32, %c0_i32_0 : i32, i32
  }
  func.func @transform_18(%arg0: i32) -> (i32, i32) {
    %c0_i32 = arith.constant 0 : i32
    %c0_i32_0 = arith.constant 0 : i32
    %c0_i32_1 = arith.constant 0 : i32
    return %c0_i32, %c0_i32_0 : i32, i32
  }
  func.func @transform_19(%arg0: i32) -> (i32, i32) {
    %c0_i32 = arith.constant 0 : i32
    %c0_i32_0 = arith.constant 0 : i32
    return %arg0, %c0_i32 : i32, i32
  }
}

</mosaic_0001>

<llo_original>
// kernel: tpu_custom_call.1
$region0: #{tpu_custom_call.1}
  #allocation0 [shape = 'u32[]', space=smem, size = 0x4, offset = 0x4, fixed_abs, tag = 'smem constant byte address 0x4 - core index']
  #allocation1 [shape = 'u32[144,128]{1,0:T(1,128)}', space=vmem, size = 0x12000, scoped, tag = 'internal scratch']
  %s0 = inlined_call_operand.hbm [shape: bf16[16,896], index: 0, kind: input, shape index: {}]
  %s1 = inlined_call_operand.hbm [shape: bf16[896,512], index: 1, kind: input, shape index: {}]
  %s2 = inlined_call_operand.hbm [shape: bf16[512,256], index: 2, kind: input, shape index: {}]
  %s3 = inlined_call_operand.hbm [shape: bf16[256,128], index: 3, kind: input, shape index: {}]
  %s4 = inlined_call_operand.hbm [shape: bf16[128,128], index: 4, kind: input, shape index: {}]
  %s5 = inlined_call_operand.hbm [shape: bf16[128,128], index: 5, kind: input, shape index: {}]
  %s6 = inlined_call_operand.hbm [shape: bf16[128,128], index: 6, kind: input, shape index: {}]
  %s7 = inlined_call_operand.hbm [shape: bf16[128,256], index: 7, kind: input, shape index: {}]
  %s8 = inlined_call_operand.hbm [shape: bf16[256,512], index: 8, kind: input, shape index: {}]
  %s9 = inlined_call_operand.hbm [shape: bf16[512,896], index: 9, kind: input, shape index: {}]
  %s10 = inlined_call_operand.vmem [shape: f32[1,512], index: 10, kind: input, shape index: {}]
  %s11 = inlined_call_operand.vmem [shape: f32[1,256], index: 11, kind: input, shape index: {}]
  %s12 = inlined_call_operand.vmem [shape: f32[1,128], index: 12, kind: input, shape index: {}]
  %s13 = inlined_call_operand.vmem [shape: f32[1,128], index: 13, kind: input, shape index: {}]
  %s14 = inlined_call_operand.vmem [shape: f32[1,128], index: 14, kind: input, shape index: {}]
  %s15 = inlined_call_operand.vmem [shape: f32[1,128], index: 15, kind: input, shape index: {}]
  %s16 = inlined_call_operand.vmem [shape: f32[1,256], index: 16, kind: input, shape index: {}]
  %s17 = inlined_call_operand.vmem [shape: f32[1,512], index: 17, kind: input, shape index: {}]
  %s18 = inlined_call_operand.vmem [shape: f32[1,896], index: 18, kind: input, shape index: {}]
  %s19 = inlined_call_operand.hbm [shape: bf16[16,896], index: 19, kind: output, shape index: {}]
  %s20 = sld [smem:[#allocation0]]
  $region126: #{tpu_custom_call.1} parent=0
    _
  %s22 = ssub.s32 1, %s20
  %s23 = scalar_select 0, %s22, %s20
  $region1: #{tpu_custom_call.1} parent=0
    #allocation2 [shape = 'u8[28672]{0}', space=vmem, size = 0x7000, scoped, tag = 'input window, operand 0, single buffered']
    #allocation3 [shape = 's32[1]{0}', space=sflag, size = 0x4, scoped, tag = 'scoped memory for tpu_custom_call.1']
    #allocation4 [shape = 's32[1]{0}', space=sflag, size = 0x4, scoped, tag = 'scoped memory for tpu_custom_call.1']
    #allocation5 [shape = 'u8[917504]{0}', space=vmem, size = 0xe0000, scoped, tag = 'input window, operand 1, single buffered']
    #allocation6 [shape = 's32[1]{0}', space=sflag, size = 0x4, scoped, tag = 'scoped memory for tpu_custom_call.1']
    #allocation7 [shape = 'u8[262144]{0}', space=vmem, size = 0x40000, scoped, tag = 'input window, operand 2, single buffered']
    #allocation8 [shape = 'u8[65536]{0}', space=vmem, size = 0x10000, scoped, tag = 'input window, operand 3, single buffered']
    #allocation9 [shape = 's32[1]{0}', space=sflag, size = 0x4, scoped, tag = 'scoped memory for tpu_custom_call.1']
    #allocation10 [shape = 'u8[32768]{0}', space=vmem, size = 0x8000, scoped, tag = 'input window, operand 4, single buffered']
    #allocation11 [shape = 'u8[32768]{0}', space=vmem, size = 0x8000, scoped, tag = 'input window, operand 5, single buffered']
    #allocation12 [shape = 's32[1]{0}', space=sflag, size = 0x4, scoped, tag = 'scoped memory for tpu_custom_call.1']
    #allocation13 [shape = 'u8[32768]{0}', space=vmem, size = 0x8000, scoped, tag = 'input window, operand 6, single buffered']
    #allocation14 [shape = 'u8[65536]{0}', space=vmem, size = 0x10000, scoped, tag = 'input window, operand 7, single buffered']
    #allocation15 [shape = 's32[1]{0}', space=sflag, size = 0x4, scoped, tag = 'scoped memory for tpu_custom_call.1']
    #allocation16 [shape = 'u8[262144]{0}', space=vmem, size = 0x40000, scoped, tag = 'input window, operand 8, single buffered']
    #allocation17 [shape = 'u8[917504]{0}', space=vmem, size = 0xe0000, scoped, tag = 'input window, operand 9, single buffered']
    #allocation18 [shape = 's32[1]{0}', space=sflag, size = 0x4, scoped, tag = 'scoped memory for tpu_custom_call.1']
    #allocation19 [shape = 'u8[28672]{0}', space=vmem, size = 0x7000, scoped, tag = 'output window, operand 0, single buffered']
    %24 = vsyncpa [#allocation3], 0
    %25 = vsyncpa [#allocation6], 0
    %26 = vsyncpa [#allocation9], 0
    %27 = vsyncpa [#allocation12], 0
    %28 = vsyncpa [#allocation15], 0
    %29 = vsyncpa [#allocation18], 0
    %30 = vsyncpa [#allocation4], 0
    // Predicated region
    $region2: #{tpu_custom_call.1} parent=1 // pred_check
      _
    $region3: #{tpu_custom_call.1} parent=1 // pred_check_branch
      %32 = sbr.rel (0) target = $region5
    $region4: #{tpu_custom_call.1} parent=1 // pred_region
      %s34 = ssub.s32 896, 896
      %35 = vsyncadd [#allocation3], %s34
      %s36 = sshll.u32 [#allocation2], 4
      %s37 = int_to_ptr.vmem [resolvable:$true] %s36
      %42 = dma.hbm_to_vmem [thread:$0]  %s0, 896, %s37, [#allocation3], 448, 448, 28
    $region5: #{tpu_custom_call.1} parent=1 // pred_fallthru
      _
    // Predicated region
    $region6: #{tpu_custom_call.1} parent=1 // pred_check
      _
    $region7: #{tpu_custom_call.1} parent=1 // pred_check_branch
      %44 = sbr.rel (0) target = $region9
    $region8: #{tpu_custom_call.1} parent=1 // pred_region
      %s46 = ssub.s32 28672, 28672
      %47 = vsyncadd [#allocation6], %s46
      %s48 = sshll.u32 [#allocation5], 4
      %s49 = int_to_ptr.vmem [resolvable:$true] %s48
      %54 = dma.hbm_to_vmem [thread:$0]  %s1, 28672, %s49, [#allocation6], 256, 256, 16
    $region9: #{tpu_custom_call.1} parent=1 // pred_fallthru
      _
    // Predicated region
    $region10: #{tpu_custom_call.1} parent=1 // pred_check
      _
    $region11: #{tpu_custom_call.1} parent=1 // pred_check_branch
      %56 = sbr.rel (0) target = $region13
    $region12: #{tpu_custom_call.1} parent=1 // pred_region
      %s58 = ssub.s32 8192, 8192
      %59 = vsyncadd [#allocation6], %s58
      %s60 = sshll.u32 [#allocation7], 4
      %s61 = int_to_ptr.vmem [resolvable:$true] %s60
      %66 = dma.hbm_to_vmem [thread:$0]  %s2, 8192, %s61, [#allocation6], 128, 128, 8
    $region13: #{tpu_custom_call.1} parent=1 // pred_fallthru
      _
    // Predicated region
    $region14: #{tpu_custom_call.1} parent=1 // pred_check
      _
    $region15: #{tpu_custom_call.1} parent=1 // pred_check_branch
      %68 = sbr.rel (0) target = $region17
    $region16: #{tpu_custom_call.1} parent=1 // pred_region
      %s70 = ssub.s32 2048, 2048
      %71 = vsyncadd [#allocation9], %s70
      %s72 = sshll.u32 [#allocation8], 4
      %s73 = int_to_ptr.vmem [resolvable:$true] %s72
      %78 = dma.hbm_to_vmem [thread:$0]  %s3, 2048, %s73, [#allocation9], 64, 64, 4
    $region17: #{tpu_custom_call.1} parent=1 // pred_fallthru
      _
    // Predicated region
    $region18: #{tpu_custom_call.1} parent=1 // pred_check
      _
    $region19: #{tpu_custom_call.1} parent=1 // pred_check_branch
      %80 = sbr.rel (0) target = $region21
    $region20: #{tpu_custom_call.1} parent=1 // pred_region
      %s82 = ssub.s32 1024, 1024
      %83 = vsyncadd [#allocation9], %s82
      %s84 = sshll.u32 [#allocation10], 4
      %s85 = int_to_ptr.vmem [resolvable:$true] %s84
      %90 = dma.hbm_to_vmem [thread:$0]  %s4, 1024, %s85, [#allocation9], 64, 64, 4
    $region21: #{tpu_custom_call.1} parent=1 // pred_fallthru
      _
    // Predicated region
    $region22: #{tpu_custom_call.1} parent=1 // pred_check
      _
    $region23: #{tpu_custom_call.1} parent=1 // pred_check_branch
      %92 = sbr.rel (0) target = $region25
    $region24: #{tpu_custom_call.1} parent=1 // pred_region
      %s94 = ssub.s32 1024, 1024
      %95 = vsyncadd [#allocation12], %s94
      %s96 = sshll.u32 [#allocation11], 4
      %s97 = int_to_ptr.vmem [resolvable:$true] %s96
      %102 = dma.hbm_to_vmem [thread:$0]  %s5, 1024, %s97, [#allocation12], 64, 64, 4
    $region25: #{tpu_custom_call.1} parent=1 // pred_fallthru
      _
    // Predicated region
    $region26: #{tpu_custom_call.1} parent=1 // pred_check
      _
    $region27: #{tpu_custom_call.1} parent=1 // pred_check_branch
      %104 = sbr.rel (0) target = $region29
    $region28: #{tpu_custom_call.1} parent=1 // pred_region
      %s106 = ssub.s32 1024, 1024
      %107 = vsyncadd [#allocation12], %s106
      %s108 = sshll.u32 [#allocation13], 4
      %s109 = int_to_ptr.vmem [resolvable:$true] %s108
      %114 = dma.hbm_to_vmem [thread:$0]  %s6, 1024, %s109, [#allocation12], 64, 64, 4
    $region29: #{tpu_custom_call.1} parent=1 // pred_fallthru
      _
    // Predicated region
    $region30: #{tpu_custom_call.1} parent=1 // pred_check
      _
    $region31: #{tpu_custom_call.1} parent=1 // pred_check_branch
      %116 = sbr.rel (0) target = $region33
    $region32: #{tpu_custom_call.1} parent=1 // pred_region
      %s118 = ssub.s32 2048, 2048
      %119 = vsyncadd [#allocation15], %s118
      %s120 = sshll.u32 [#allocation14], 4
      %s121 = int_to_ptr.vmem [resolvable:$true] %s120
      %126 = dma.hbm_to_vmem [thread:$0]  %s7, 2048, %s121, [#allocation15], 128, 128, 8
    $region33: #{tpu_custom_call.1} parent=1 // pred_fallthru
      _
    // Predicated region
    $region34: #{tpu_custom_call.1} parent=1 // pred_check
      _
    $region35: #{tpu_custom_call.1} parent=1 // pred_check_branch
      %128 = sbr.rel (0) target = $region37
    $region36: #{tpu_custom_call.1} parent=1 // pred_region
      %s130 = ssub.s32 8192, 8192
      %131 = vsyncadd [#allocation15], %s130
      %s132 = sshll.u32 [#allocation16], 4
      %s133 = int_to_ptr.vmem [resolvable:$true] %s132
      %138 = dma.hbm_to_vmem [thread:$0]  %s8, 8192, %s133, [#allocation15], 256, 256, 16
    $region37: #{tpu_custom_call.1} parent=1 // pred_fallthru
      _
    // Predicated region
    $region38: #{tpu_custom_call.1} parent=1 // pred_check
      _
    $region39: #{tpu_custom_call.1} parent=1 // pred_check_branch
      %140 = sbr.rel (0) target = $region41
    $region40: #{tpu_custom_call.1} parent=1 // pred_region
      %s142 = ssub.s32 28672, 28672
      %143 = vsyncadd [#allocation18], %s142
      %s144 = sshll.u32 [#allocation17], 4
      %s145 = int_to_ptr.vmem [resolvable:$true] %s144
      %150 = dma.hbm_to_vmem [thread:$0]  %s9, 28672, %s145, [#allocation18], 448, 448, 28
    $region41: #{tpu_custom_call.1} parent=1 // pred_fallthru
      _
    // Predicated region
    $region42: #{tpu_custom_call.1} parent=1 // pred_check
      _
    $region43: #{tpu_custom_call.1} parent=1 // pred_check_branch
      %152 = sbr.rel (0) target = $region45
    $region44: #{tpu_custom_call.1} parent=1 // pred_region
      _
    $region45: #{tpu_custom_call.1} parent=1 // pred_fallthru
      _
    // Predicated region
    $region46: #{tpu_custom_call.1} parent=1 // pred_check
      _
    $region47: #{tpu_custom_call.1} parent=1 // pred_check_branch
      %154 = sbr.rel (0) target = $region49
    $region48: #{tpu_custom_call.1} parent=1 // pred_region
      _
    $region49: #{tpu_custom_call.1} parent=1 // pred_fallthru
      _
    // Predicated region
    $region50: #{tpu_custom_call.1} parent=1 // pred_check
      _
    $region51: #{tpu_custom_call.1} parent=1 // pred_check_branch
      %156 = sbr.rel (0) target = $region53
    $region52: #{tpu_custom_call.1} parent=1 // pred_region
      _
    $region53: #{tpu_custom_call.1} parent=1 // pred_fallthru
      _
    // Predicated region
    $region54: #{tpu_custom_call.1} parent=1 // pred_check
      _
    $region55: #{tpu_custom_call.1} parent=1 // pred_check_branch
      %158 = sbr.rel (0) target = $region57
    $region56: #{tpu_custom_call.1} parent=1 // pred_region
      _
    $region57: #{tpu_custom_call.1} parent=1 // pred_fallthru
      _
    // Predicated region
    $region58: #{tpu_custom_call.1} parent=1 // pred_check
      _
    $region59: #{tpu_custom_call.1} parent=1 // pred_check_branch
      %160 = sbr.rel (0) target = $region61
    $region60: #{tpu_custom_call.1} parent=1 // pred_region
      _
    $region61: #{tpu_custom_call.1} parent=1 // pred_fallthru
      _
    // Predicated region
    $region62: #{tpu_custom_call.1} parent=1 // pred_check
      _
    $region63: #{tpu_custom_call.1} parent=1 // pred_check_branch
      %162 = sbr.rel (0) target = $region65
    $region64: #{tpu_custom_call.1} parent=1 // pred_region
      _
    $region65: #{tpu_custom_call.1} parent=1 // pred_fallthru
      _
    // Predicated region
    $region66: #{tpu_custom_call.1} parent=1 // pred_check
      _
    $region67: #{tpu_custom_call.1} parent=1 // pred_check_branch
      %164 = sbr.rel (0) target = $region69
    $region68: #{tpu_custom_call.1} parent=1 // pred_region
      _
    $region69: #{tpu_custom_call.1} parent=1 // pred_fallthru
      _
    // Predicated region
    $region70: #{tpu_custom_call.1} parent=1 // pred_check
      _
    $region71: #{tpu_custom_call.1} parent=1 // pred_check_branch
      %166 = sbr.rel (0) target = $region73
    $region72: #{tpu_custom_call.1} parent=1 // pred_region
      _
    $region73: #{tpu_custom_call.1} parent=1 // pred_fallthru
      _
    // Predicated region
    $region74: #{tpu_custom_call.1} parent=1 // pred_check
      _
    $region75: #{tpu_custom_call.1} parent=1 // pred_check_branch
      %168 = sbr.rel (0) target = $region77
    $region76: #{tpu_custom_call.1} parent=1 // pred_region
      _
    $region77: #{tpu_custom_call.1} parent=1 // pred_fallthru
      _
    // Predicated region
    $region78: #{tpu_custom_call.1} parent=1 // pred_check
      _
    $region79: #{tpu_custom_call.1} parent=1 // pred_check_branch
      %170 = sbr.rel (0) target = $region81
    $region80: #{tpu_custom_call.1} parent=1 // pred_region
      %171 = dma.done [#allocation3], 896
    $region81: #{tpu_custom_call.1} parent=1 // pred_fallthru
      _
    // Predicated region
    $region82: #{tpu_custom_call.1} parent=1 // pred_check
      _
    $region83: #{tpu_custom_call.1} parent=1 // pred_check_branch
      %173 = sbr.rel (0) target = $region85
    $region84: #{tpu_custom_call.1} parent=1 // pred_region
      %174 = dma.done [#allocation6], 28672
    $region85: #{tpu_custom_call.1} parent=1 // pred_fallthru
      _
    // Predicated region
    $region86: #{tpu_custom_call.1} parent=1 // pred_check
      _
    $region87: #{tpu_custom_call.1} parent=1 // pred_check_branch
      %176 = sbr.rel (0) target = $region89
    $region88: #{tpu_custom_call.1} parent=1 // pred_region
      %177 = dma.done [#allocation6], 8192
    $region89: #{tpu_custom_call.1} parent=1 // pred_fallthru
      _
    // Predicated region
    $region90: #{tpu_custom_call.1} parent=1 // pred_check
      _
    $region91: #{tpu_custom_call.1} parent=1 // pred_check_branch
      %179 = sbr.rel (0) target = $region93
    $region92: #{tpu_custom_call.1} parent=1 // pred_region
      %180 = dma.done [#allocation9], 2048
    $region93: #{tpu_custom_call.1} parent=1 // pred_fallthru
      _
    // Predicated region
    $region94: #{tpu_custom_call.1} parent=1 // pred_check
      _
    $region95: #{tpu_custom_call.1} parent=1 // pred_check_branch
      %182 = sbr.rel (0) target = $region97
    $region96: #{tpu_custom_call.1} parent=1 // pred_region
      %183 = dma.done [#allocation9], 1024
    $region97: #{tpu_custom_call.1} parent=1 // pred_fallthru
      _
    // Predicated region
    $region98: #{tpu_custom_call.1} parent=1 // pred_check
      _
    $region99: #{tpu_custom_call.1} parent=1 // pred_check_branch
      %185 = sbr.rel (0) target = $region101
    $region100: #{tpu_custom_call.1} parent=1 // pred_region
      %186 = dma.done [#allocation12], 1024
    $region101: #{tpu_custom_call.1} parent=1 // pred_fallthru
      _
    // Predicated region
    $region102: #{tpu_custom_call.1} parent=1 // pred_check
      _
    $region103: #{tpu_custom_call.1} parent=1 // pred_check_branch
      %188 = sbr.rel (0) target = $region105
    $region104: #{tpu_custom_call.1} parent=1 // pred_region
      %189 = dma.done [#allocation12], 1024
    $region105: #{tpu_custom_call.1} parent=1 // pred_fallthru
      _
    // Predicated region
    $region106: #{tpu_custom_call.1} parent=1 // pred_check
      _
    $region107: #{tpu_custom_call.1} parent=1 // pred_check_branch
      %191 = sbr.rel (0) target = $region109
    $region108: #{tpu_custom_call.1} parent=1 // pred_region
      %192 = dma.done [#allocation15], 2048
    $region109: #{tpu_custom_call.1} parent=1 // pred_fallthru
      _
    // Predicated region
    $region110: #{tpu_custom_call.1} parent=1 // pred_check
      _
    $region111: #{tpu_custom_call.1} parent=1 // pred_check_branch
      %194 = sbr.rel (0) target = $region113
    $region112: #{tpu_custom_call.1} parent=1 // pred_region
      %195 = dma.done [#allocation15], 8192
    $region113: #{tpu_custom_call.1} parent=1 // pred_fallthru
      _
    // Predicated region
    $region114: #{tpu_custom_call.1} parent=1 // pred_check
      _
    $region115: #{tpu_custom_call.1} parent=1 // pred_check_branch
      %197 = sbr.rel (0) target = $region117
    $region116: #{tpu_custom_call.1} parent=1 // pred_region
      %198 = dma.done [#allocation18], 28672
    $region117: #{tpu_custom_call.1} parent=1 // pred_fallthru
      _
    %v200 = vld [vmem:[#allocation2] sm:$0xff]
    %v201 = vld [vmem:[#allocation2 + $0x8] sm:$0xff]
    %v202 = vld [vmem:[#allocation2 + $0x10] sm:$0xff]
    %v203 = vld [vmem:[#allocation2 + $0x18] sm:$0xf]
    %v204 = vld [vmem:[#allocation2 + $0x1c] sm:$0xff]
    %v205 = vld [vmem:[#allocation2 + $0x24] sm:$0xff]
    %v206 = vld [vmem:[#allocation2 + $0x2c] sm:$0xff]
    %v207 = vld [vmem:[#allocation2 + $0x34] sm:$0xf]
    %v208 = vld [vmem:[#allocation5] sm:$0xff]
    %v209 = vld [vmem:[#allocation5 + $0x8] sm:$0xff]
    %v210 = vld [vmem:[#allocation5 + $0x10] sm:$0xff]
    %v211 = vld [vmem:[#allocation5 + $0x18] sm:$0xff]
    %v212 = vld [vmem:[#allocation5 + $0x20] sm:$0xff]
    %v213 = vld [vmem:[#allocation5 + $0x28] sm:$0xff]
    %v214 = vld [vmem:[#allocation5 + $0x30] sm:$0xff]
    %v215 = vld [vmem:[#allocation5 + $0x38] sm:$0xff]
    %v216 = vld [vmem:[#allocation5 + $0x40] sm:$0xff]
    %v217 = vld [vmem:[#allocation5 + $0x48] sm:$0xff]
    %v218 = vld [vmem:[#allocation5 + $0x50] sm:$0xff]
    %v219 = vld [vmem:[#allocation5 + $0x58] sm:$0xff]
    %v220 = vld [vmem:[#allocation5 + $0x60] sm:$0xff]
    %v221 = vld [vmem:[#allocation5 + $0x68] sm:$0xff]
    %v222 = vld [vmem:[#allocation5 + $0x70] sm:$0xff]
    %v223 = vld [vmem:[#allocation5 + $0x78] sm:$0xff]
    %v224 = vld [vmem:[#allocation5 + $0x80] sm:$0xff]
    %v225 = vld [vmem:[#allocation5 + $0x88] sm:$0xff]
    %v226 = vld [vmem:[#allocation5 + $0x90] sm:$0xff]
    %v227 = vld [vmem:[#allocation5 + $0x98] sm:$0xff]
    %v228 = vld [vmem:[#allocation5 + $0xa0] sm:$0xff]
    %v229 = vld [vmem:[#allocation5 + $0xa8] sm:$0xff]
    %v230 = vld [vmem:[#allocation5 + $0xb0] sm:$0xff]
    %v231 = vld [vmem:[#allocation5 + $0xb8] sm:$0xff]
    %v232 = vld [vmem:[#allocation5 + $0xc0] sm:$0xff]
    %v233 = vld [vmem:[#allocation5 + $0xc8] sm:$0xff]
    %v234 = vld [vmem:[#allocation5 + $0xd0] sm:$0xff]
    %v235 = vld [vmem:[#allocation5 + $0xd8] sm:$0xff]
    %v236 = vld [vmem:[#allocation5 + $0xe0] sm:$0xff]
    %v237 = vld [vmem:[#allocation5 + $0xe8] sm:$0xff]
    %v238 = vld [vmem:[#allocation5 + $0xf0] sm:$0xff]
    %v239 = vld [vmem:[#allocation5 + $0xf8] sm:$0xff]
    %v240 = vld [vmem:[#allocation5 + $0x100] sm:$0xff]
    %v241 = vld [vmem:[#allocation5 + $0x108] sm:$0xff]
    %v242 = vld [vmem:[#allocation5 + $0x110] sm:$0xff]
    %v243 = vld [vmem:[#allocation5 + $0x118] sm:$0xff]
    %v244 = vld [vmem:[#allocation5 + $0x120] sm:$0xff]
    %v245 = vld [vmem:[#allocation5 + $0x128] sm:$0xff]
    %v246 = vld [vmem:[#allocation5 + $0x130] sm:$0xff]
    %v247 = vld [vmem:[#allocation5 + $0x138] sm:$0xff]
    %v248 = vld [vmem:[#allocation5 + $0x140] sm:$0xff]
    %v249 = vld [vmem:[#allocation5 + $0x148] sm:$0xff]
    %v250 = vld [vmem:[#allocation5 + $0x150] sm:$0xff]
    %v251 = vld [vmem:[#allocation5 + $0x158] sm:$0xff]
    %v252 = vld [vmem:[#allocation5 + $0x160] sm:$0xff]
    %v253 = vld [vmem:[#allocation5 + $0x168] sm:$0xff]
    %v254 = vld [vmem:[#allocation5 + $0x170] sm:$0xff]
    %v255 = vld [vmem:[#allocation5 + $0x178] sm:$0xff]
    %v256 = vld [vmem:[#allocation5 + $0x180] sm:$0xff]
    %v257 = vld [vmem:[#allocation5 + $0x188] sm:$0xff]
    %v258 = vld [vmem:[#allocation5 + $0x190] sm:$0xff]
    %v259 = vld [vmem:[#allocation5 + $0x198] sm:$0xff]
    %v260 = vld [vmem:[#allocation5 + $0x1a0] sm:$0xff]
    %v261 = vld [vmem:[#allocation5 + $0x1a8] sm:$0xff]
    %v262 = vld [vmem:[#allocation5 + $0x1b0] sm:$0xff]
    %v263 = vld [vmem:[#allocation5 + $0x1b8] sm:$0xff]
    %v264 = vld [vmem:[#allocation5 + $0x1c0] sm:$0xff]
    %v265 = vld [vmem:[#allocation5 + $0x1c8] sm:$0xff]
    %v266 = vld [vmem:[#allocation5 + $0x1d0] sm:$0xff]
    %v267 = vld [vmem:[#allocation5 + $0x1d8] sm:$0xff]
    %v268 = vld [vmem:[#allocation5 + $0x1e0] sm:$0xff]
    %v269 = vld [vmem:[#allocation5 + $0x1e8] sm:$0xff]
    %v270 = vld [vmem:[#allocation5 + $0x1f0] sm:$0xff]
    %v271 = vld [vmem:[#allocation5 + $0x1f8] sm:$0xff]
    %v272 = vld [vmem:[#allocation5 + $0x200] sm:$0xff]
    %v273 = vld [vmem:[#allocation5 + $0x208] sm:$0xff]
    %v274 = vld [vmem:[#allocation5 + $0x210] sm:$0xff]
    %v275 = vld [vmem:[#allocation5 + $0x218] sm:$0xff]
    %v276 = vld [vmem:[#allocation5 + $0x220] sm:$0xff]
    %v277 = vld [vmem:[#allocation5 + $0x228] sm:$0xff]
    %v278 = vld [vmem:[#allocation5 + $0x230] sm:$0xff]
    %v279 = vld [vmem:[#allocation5 + $0x238] sm:$0xff]
    %v280 = vld [vmem:[#allocation5 + $0x240] sm:$0xff]
    %v281 = vld [vmem:[#allocation5 + $0x248] sm:$0xff]
    %v282 = vld [vmem:[#allocation5 + $0x250] sm:$0xff]
    %v283 = vld [vmem:[#allocation5 + $0x258] sm:$0xff]
    %v284 = vld [vmem:[#allocation5 + $0x260] sm:$0xff]
    %v285 = vld [vmem:[#allocation5 + $0x268] sm:$0xff]
    %v286 = vld [vmem:[#allocation5 + $0x270] sm:$0xff]
    %v287 = vld [vmem:[#allocation5 + $0x278] sm:$0xff]
    %v288 = vld [vmem:[#allocation5 + $0x280] sm:$0xff]
    %v289 = vld [vmem:[#allocation5 + $0x288] sm:$0xff]
    %v290 = vld [vmem:[#allocation5 + $0x290] sm:$0xff]
    %v291 = vld [vmem:[#allocation5 + $0x298] sm:$0xff]
    %v292 = vld [vmem:[#allocation5 + $0x2a0] sm:$0xff]
    %v293 = vld [vmem:[#allocation5 + $0x2a8] sm:$0xff]
    %v294 = vld [vmem:[#allocation5 + $0x2b0] sm:$0xff]
    %v295 = vld [vmem:[#allocation5 + $0x2b8] sm:$0xff]
    %v296 = vld [vmem:[#allocation5 + $0x2c0] sm:$0xff]
    %v297 = vld [vmem:[#allocation5 + $0x2c8] sm:$0xff]
    %v298 = vld [vmem:[#allocation5 + $0x2d0] sm:$0xff]
    %v299 = vld [vmem:[#allocation5 + $0x2d8] sm:$0xff]
    %v300 = vld [vmem:[#allocation5 + $0x2e0] sm:$0xff]
    %v301 = vld [vmem:[#allocation5 + $0x2e8] sm:$0xff]
    %v302 = vld [vmem:[#allocation5 + $0x2f0] sm:$0xff]
    %v303 = vld [vmem:[#allocation5 + $0x2f8] sm:$0xff]
    %v304 = vld [vmem:[#allocation5 + $0x300] sm:$0xff]
    %v305 = vld [vmem:[#allocation5 + $0x308] sm:$0xff]
    %v306 = vld [vmem:[#allocation5 + $0x310] sm:$0xff]
    %v307 = vld [vmem:[#allocation5 + $0x318] sm:$0xff]
    %v308 = vld [vmem:[#allocation5 + $0x320] sm:$0xff]
    %v309 = vld [vmem:[#allocation5 + $0x328] sm:$0xff]
    %v310 = vld [vmem:[#allocation5 + $0x330] sm:$0xff]
    %v311 = vld [vmem:[#allocation5 + $0x338] sm:$0xff]
    %v312 = vld [vmem:[#allocation5 + $0x340] sm:$0xff]
    %v313 = vld [vmem:[#allocation5 + $0x348] sm:$0xff]
    %v314 = vld [vmem:[#allocation5 + $0x350] sm:$0xff]
    %v315 = vld [vmem:[#allocation5 + $0x358] sm:$0xff]
    %v316 = vld [vmem:[#allocation5 + $0x360] sm:$0xff]
    %v317 = vld [vmem:[#allocation5 + $0x368] sm:$0xff]
    %v318 = vld [vmem:[#allocation5 + $0x370] sm:$0xff]
    %v319 = vld [vmem:[#allocation5 + $0x378] sm:$0xff]
    %v320 = vld [vmem:[#allocation5 + $0x380] sm:$0xff]
    %v321 = vld [vmem:[#allocation5 + $0x388] sm:$0xff]
    %v322 = vld [vmem:[#allocation5 + $0x390] sm:$0xff]
    %v323 = vld [vmem:[#allocation5 + $0x398] sm:$0xff]
    %v324 = vld [vmem:[#allocation5 + $0x3a0] sm:$0xff]
    %v325 = vld [vmem:[#allocation5 + $0x3a8] sm:$0xff]
    %v326 = vld [vmem:[#allocation5 + $0x3b0] sm:$0xff]
    %v327 = vld [vmem:[#allocation5 + $0x3b8] sm:$0xff]
    %v328 = vld [vmem:[#allocation5 + $0x3c0] sm:$0xff]
    %v329 = vld [vmem:[#allocation5 + $0x3c8] sm:$0xff]
    %v330 = vld [vmem:[#allocation5 + $0x3d0] sm:$0xff]
    %v331 = vld [vmem:[#allocation5 + $0x3d8] sm:$0xff]
    %v332 = vld [vmem:[#allocation5 + $0x3e0] sm:$0xff]
    %v333 = vld [vmem:[#allocation5 + $0x3e8] sm:$0xff]
    %v334 = vld [vmem:[#allocation5 + $0x3f0] sm:$0xff]
    %v335 = vld [vmem:[#allocation5 + $0x3f8] sm:$0xff]
    %v336 = vld [vmem:[#allocation5 + $0x400] sm:$0xff]
    %v337 = vld [vmem:[#allocation5 + $0x408] sm:$0xff]
    %v338 = vld [vmem:[#allocation5 + $0x410] sm:$0xff]
    %v339 = vld [vmem:[#allocation5 + $0x418] sm:$0xff]
    %v340 = vld [vmem:[#allocation5 + $0x420] sm:$0xff]
    %v341 = vld [vmem:[#allocation5 + $0x428] sm:$0xff]
    %v342 = vld [vmem:[#allocation5 + $0x430] sm:$0xff]
    %v343 = vld [vmem:[#allocation5 + $0x438] sm:$0xff]
    %v344 = vld [vmem:[#allocation5 + $0x440] sm:$0xff]
    %v345 = vld [vmem:[#allocation5 + $0x448] sm:$0xff]
    %v346 = vld [vmem:[#allocation5 + $0x450] sm:$0xff]
    %v347 = vld [vmem:[#allocation5 + $0x458] sm:$0xff]
    %v348 = vld [vmem:[#allocation5 + $0x460] sm:$0xff]
    %v349 = vld [vmem:[#allocation5 + $0x468] sm:$0xff]
    %v350 = vld [vmem:[#allocation5 + $0x470] sm:$0xff]
    %v351 = vld [vmem:[#allocation5 + $0x478] sm:$0xff]
    %v352 = vld [vmem:[#allocation5 + $0x480] sm:$0xff]
    %v353 = vld [vmem:[#allocation5 + $0x488] sm:$0xff]
    %v354 = vld [vmem:[#allocation5 + $0x490] sm:$0xff]
    %v355 = vld [vmem:[#allocation5 + $0x498] sm:$0xff]
    %v356 = vld [vmem:[#allocation5 + $0x4a0] sm:$0xff]
    %v357 = vld [vmem:[#allocation5 + $0x4a8] sm:$0xff]
    %v358 = vld [vmem:[#allocation5 + $0x4b0] sm:$0xff]
    %v359 = vld [vmem:[#allocation5 + $0x4b8] sm:$0xff]
    %v360 = vld [vmem:[#allocation5 + $0x4c0] sm:$0xff]
    %v361 = vld [vmem:[#allocation5 + $0x4c8] sm:$0xff]
    %v362 = vld [vmem:[#allocation5 + $0x4d0] sm:$0xff]
    %v363 = vld [vmem:[#allocation5 + $0x4d8] sm:$0xff]
    %v364 = vld [vmem:[#allocation5 + $0x4e0] sm:$0xff]
    %v365 = vld [vmem:[#allocation5 + $0x4e8] sm:$0xff]
    %v366 = vld [vmem:[#allocation5 + $0x4f0] sm:$0xff]
    %v367 = vld [vmem:[#allocation5 + $0x4f8] sm:$0xff]
    %v368 = vld [vmem:[#allocation5 + $0x500] sm:$0xff]
    %v369 = vld [vmem:[#allocation5 + $0x508] sm:$0xff]
    %v370 = vld [vmem:[#allocation5 + $0x510] sm:$0xff]
    %v371 = vld [vmem:[#allocation5 + $0x518] sm:$0xff]
    %v372 = vld [vmem:[#allocation5 + $0x520] sm:$0xff]
    %v373 = vld [vmem:[#allocation5 + $0x528] sm:$0xff]
    %v374 = vld [vmem:[#allocation5 + $0x530] sm:$0xff]
    %v375 = vld [vmem:[#allocation5 + $0x538] sm:$0xff]
    %v376 = vld [vmem:[#allocation5 + $0x540] sm:$0xff]
    %v377 = vld [vmem:[#allocation5 + $0x548] sm:$0xff]
    %v378 = vld [vmem:[#allocation5 + $0x550] sm:$0xff]
    %v379 = vld [vmem:[#allocation5 + $0x558] sm:$0xff]
    %v380 = vld [vmem:[#allocation5 + $0x560] sm:$0xff]
    %v381 = vld [vmem:[#allocation5 + $0x568] sm:$0xff]
    %v382 = vld [vmem:[#allocation5 + $0x570] sm:$0xff]
    %v383 = vld [vmem:[#allocation5 + $0x578] sm:$0xff]
    %v384 = vld [vmem:[#allocation5 + $0x580] sm:$0xff]
    %v385 = vld [vmem:[#allocation5 + $0x588] sm:$0xff]
    %v386 = vld [vmem:[#allocation5 + $0x590] sm:$0xff]
    %v387 = vld [vmem:[#allocation5 + $0x598] sm:$0xff]
    %v388 = vld [vmem:[#allocation5 + $0x5a0] sm:$0xff]
    %v389 = vld [vmem:[#allocation5 + $0x5a8] sm:$0xff]
    %v390 = vld [vmem:[#allocation5 + $0x5b0] sm:$0xff]
    %v391 = vld [vmem:[#allocation5 + $0x5b8] sm:$0xff]
    %v392 = vld [vmem:[#allocation5 + $0x5c0] sm:$0xff]
    %v393 = vld [vmem:[#allocation5 + $0x5c8] sm:$0xff]
    %v394 = vld [vmem:[#allocation5 + $0x5d0] sm:$0xff]
    %v395 = vld [vmem:[#allocation5 + $0x5d8] sm:$0xff]
    %v396 = vld [vmem:[#allocation5 + $0x5e0] sm:$0xff]
    %v397 = vld [vmem:[#allocation5 + $0x5e8] sm:$0xff]
    %v398 = vld [vmem:[#allocation5 + $0x5f0] sm:$0xff]
    %v399 = vld [vmem:[#allocation5 + $0x5f8] sm:$0xff]
    %v400 = vld [vmem:[#allocation5 + $0x600] sm:$0xff]
    %v401 = vld [vmem:[#allocation5 + $0x608] sm:$0xff]
    %v402 = vld [vmem:[#allocation5 + $0x610] sm:$0xff]
    %v403 = vld [vmem:[#allocation5 + $0x618] sm:$0xff]
    %v404 = vld [vmem:[#allocation5 + $0x620] sm:$0xff]
    %v405 = vld [vmem:[#allocation5 + $0x628] sm:$0xff]
    %v406 = vld [vmem:[#allocation5 + $0x630] sm:$0xff]
    %v407 = vld [vmem:[#allocation5 + $0x638] sm:$0xff]
    %v408 = vld [vmem:[#allocation5 + $0x640] sm:$0xff]
    %v409 = vld [vmem:[#allocation5 + $0x648] sm:$0xff]
    %v410 = vld [vmem:[#allocation5 + $0x650] sm:$0xff]
    %v411 = vld [vmem:[#allocation5 + $0x658] sm:$0xff]
    %v412 = vld [vmem:[#allocation5 + $0x660] sm:$0xff]
    %v413 = vld [vmem:[#allocation5 + $0x668] sm:$0xff]
    %v414 = vld [vmem:[#allocation5 + $0x670] sm:$0xff]
    %v415 = vld [vmem:[#allocation5 + $0x678] sm:$0xff]
    %v416 = vld [vmem:[#allocation5 + $0x680] sm:$0xff]
    %v417 = vld [vmem:[#allocation5 + $0x688] sm:$0xff]
    %v418 = vld [vmem:[#allocation5 + $0x690] sm:$0xff]
    %v419 = vld [vmem:[#allocation5 + $0x698] sm:$0xff]
    %v420 = vld [vmem:[#allocation5 + $0x6a0] sm:$0xff]
    %v421 = vld [vmem:[#allocation5 + $0x6a8] sm:$0xff]
    %v422 = vld [vmem:[#allocation5 + $0x6b0] sm:$0xff]
    %v423 = vld [vmem:[#allocation5 + $0x6b8] sm:$0xff]
    %v424 = vld [vmem:[#allocation5 + $0x6c0] sm:$0xff]
    %v425 = vld [vmem:[#allocation5 + $0x6c8] sm:$0xff]
    %v426 = vld [vmem:[#allocation5 + $0x6d0] sm:$0xff]
    %v427 = vld [vmem:[#allocation5 + $0x6d8] sm:$0xff]
    %v428 = vld [vmem:[#allocation5 + $0x6e0] sm:$0xff]
    %v429 = vld [vmem:[#allocation5 + $0x6e8] sm:$0xff]
    %v430 = vld [vmem:[#allocation5 + $0x6f0] sm:$0xff]
    %v431 = vld [vmem:[#allocation5 + $0x6f8] sm:$0xff]
    %v432 = vld [vmem:[%s10] sm:$0xf]
    %v434 = vlaneseq
    %v435 = vshrl.u32 %v434, 7
    %v436 = vsub.s32 0, %v435
    %v437 = vrot.slane %v432, %v436
    %v438 = vlaneseq
    %v439 = vshrl.u32 %v438, 7
    %v440 = vsub.s32 1, %v439
    %v441 = vrot.slane %v432, %v440
    %v442 = vlaneseq
    %v443 = vshrl.u32 %v442, 7
    %v444 = vsub.s32 2, %v443
    %v445 = vrot.slane %v432, %v444
    %v446 = vlaneseq
    %v447 = vshrl.u32 %v446, 7
    %v448 = vsub.s32 3, %v447
    %v449 = vrot.slane %v432, %v448
    %v462 = vunpack.c.l.b16 %v200
    %v463 = vunpack.c.h.b16 %v200
    %v464 = vunpack.c.l.b16 %v201
    %v465 = vunpack.c.h.b16 %v201
    %v466 = vunpack.c.l.b16 %v202
    %v467 = vunpack.c.h.b16 %v202
    %v468 = vunpack.c.l.b16 %v203
    %v469 = vunpack.c.l.b16 %v204
    %v470 = vunpack.c.h.b16 %v204
    %v471 = vunpack.c.l.b16 %v205
    %v472 = vunpack.c.h.b16 %v205
    %v473 = vunpack.c.l.b16 %v206
    %v474 = vunpack.c.h.b16 %v206
    %v475 = vunpack.c.l.b16 %v207
    %v476 = vpack.c.b16 %v469, %v462
    %v477 = vpack.c.b16 %v470, %v463
    %v478 = vpack.c.b16 %v471, %v464
    %v479 = vpack.c.b16 %v472, %v465
    %v480 = vpack.c.b16 %v473, %v466
    %v481 = vpack.c.b16 %v474, %v467
    %v482 = vpack.c.b16 %v475, %v468
    %v714 = vunpack.c.l.b16 %v208
    %v715 = vunpack.c.h.b16 %v208
    %v716 = vunpack.c.l.b16 %v209
    %v717 = vunpack.c.h.b16 %v209
    %v718 = vunpack.c.l.b16 %v210
    %v719 = vunpack.c.h.b16 %v210
    %v720 = vunpack.c.l.b16 %v211
    %v721 = vunpack.c.h.b16 %v211
    %v722 = vunpack.c.l.b16 %v212
    %v723 = vunpack.c.h.b16 %v212
    %v724 = vunpack.c.l.b16 %v213
    %v725 = vunpack.c.h.b16 %v213
    %v726 = vunpack.c.l.b16 %v214
    %v727 = vunpack.c.h.b16 %v214
    %v728 = vunpack.c.l.b16 %v215
    %v729 = vunpack.c.h.b16 %v215
    %v730 = vunpack.c.l.b16 %v216
    %v731 = vunpack.c.h.b16 %v216
    %v732 = vunpack.c.l.b16 %v217
    %v733 = vunpack.c.h.b16 %v217
    %v734 = vunpack.c.l.b16 %v218
    %v735 = vunpack.c.h.b16 %v218
    %v736 = vunpack.c.l.b16 %v219
    %v737 = vunpack.c.h.b16 %v219
    %v738 = vunpack.c.l.b16 %v220
    %v739 = vunpack.c.h.b16 %v220
    %v740 = vunpack.c.l.b16 %v221
    %v741 = vunpack.c.h.b16 %v221
    %v742 = vunpack.c.l.b16 %v222
    %v743 = vunpack.c.h.b16 %v222
    %v744 = vunpack.c.l.b16 %v223
    %v745 = vunpack.c.h.b16 %v223
    %v746 = vunpack.c.l.b16 %v224
    %v747 = vunpack.c.h.b16 %v224
    %v748 = vunpack.c.l.b16 %v225
    %v749 = vunpack.c.h.b16 %v225
    %v750 = vunpack.c.l.b16 %v226
    %v751 = vunpack.c.h.b16 %v226
    %v752 = vunpack.c.l.b16 %v227
    %v753 = vunpack.c.h.b16 %v227
    %v754 = vunpack.c.l.b16 %v228
    %v755 = vunpack.c.h.b16 %v228
    %v756 = vunpack.c.l.b16 %v229
    %v757 = vunpack.c.h.b16 %v229
    %v758 = vunpack.c.l.b16 %v230
    %v759 = vunpack.c.h.b16 %v230
    %v760 = vunpack.c.l.b16 %v231
    %v761 = vunpack.c.h.b16 %v231
    %v762 = vunpack.c.l.b16 %v232
    %v763 = vunpack.c.h.b16 %v232
    %v764 = vunpack.c.l.b16 %v233
    %v765 = vunpack.c.h.b16 %v233
    %v766 = vunpack.c.l.b16 %v234
    %v767 = vunpack.c.h.b16 %v234
    %v768 = vunpack.c.l.b16 %v235
    %v769 = vunpack.c.h.b16 %v235
    %v770 = vunpack.c.l.b16 %v236
    %v771 = vunpack.c.h.b16 %v236
    %v772 = vunpack.c.l.b16 %v237
    %v773 = vunpack.c.h.b16 %v237
    %v774 = vunpack.c.l.b16 %v238
    %v775 = vunpack.c.h.b16 %v238
    %v776 = vunpack.c.l.b16 %v239
    %v777 = vunpack.c.h.b16 %v239
    %v778 = vunpack.c.l.b16 %v240
    %v779 = vunpack.c.h.b16 %v240
    %v780 = vunpack.c.l.b16 %v241
    %v781 = vunpack.c.h.b16 %v241
    %v782 = vunpack.c.l.b16 %v242
    %v783 = vunpack.c.h.b16 %v242
    %v784 = vunpack.c.l.b16 %v243
    %v785 = vunpack.c.h.b16 %v243
    %v786 = vunpack.c.l.b16 %v244
    %v787 = vunpack.c.h.b16 %v244
    %v788 = vunpack.c.l.b16 %v245
    %v789 = vunpack.c.h.b16 %v245
    %v790 = vunpack.c.l.b16 %v246
    %v791 = vunpack.c.h.b16 %v246
    %v792 = vunpack.c.l.b16 %v247
    %v793 = vunpack.c.h.b16 %v247
    %v794 = vunpack.c.l.b16 %v248
    %v795 = vunpack.c.h.b16 %v248
    %v796 = vunpack.c.l.b16 %v249
    %v797 = vunpack.c.h.b16 %v249
    %v798 = vunpack.c.l.b16 %v250
    %v799 = vunpack.c.h.b16 %v250
    %v800 = vunpack.c.l.b16 %v251
    %v801 = vunpack.c.h.b16 %v251
    %v802 = vunpack.c.l.b16 %v252
    %v803 = vunpack.c.h.b16 %v252
    %v804 = vunpack.c.l.b16 %v253
    %v805 = vunpack.c.h.b16 %v253
    %v806 = vunpack.c.l.b16 %v254
    %v807 = vunpack.c.h.b16 %v254
    %v808 = vunpack.c.l.b16 %v255
    %v809 = vunpack.c.h.b16 %v255
    %v810 = vunpack.c.l.b16 %v256
    %v811 = vunpack.c.h.b16 %v256
    %v812 = vunpack.c.l.b16 %v257
    %v813 = vunpack.c.h.b16 %v257
    %v814 = vunpack.c.l.b16 %v258
    %v815 = vunpack.c.h.b16 %v258
    %v816 = vunpack.c.l.b16 %v259
    %v817 = vunpack.c.h.b16 %v259
    %v818 = vunpack.c.l.b16 %v260
    %v819 = vunpack.c.h.b16 %v260
    %v820 = vunpack.c.l.b16 %v261
    %v821 = vunpack.c.h.b16 %v261
    %v822 = vunpack.c.l.b16 %v262
    %v823 = vunpack.c.h.b16 %v262
    %v824 = vunpack.c.l.b16 %v263
    %v825 = vunpack.c.h.b16 %v263
    %v826 = vunpack.c.l.b16 %v264
    %v827 = vunpack.c.h.b16 %v264
    %v828 = vunpack.c.l.b16 %v265
    %v829 = vunpack.c.h.b16 %v265
    %v830 = vunpack.c.l.b16 %v266
    %v831 = vunpack.c.h.b16 %v266
    %v832 = vunpack.c.l.b16 %v267
    %v833 = vunpack.c.h.b16 %v267
    %v834 = vunpack.c.l.b16 %v268
    %v835 = vunpack.c.h.b16 %v268
    %v836 = vunpack.c.l.b16 %v269
    %v837 = vunpack.c.h.b16 %v269
    %v838 = vunpack.c.l.b16 %v270
    %v839 = vunpack.c.h.b16 %v270
    %v840 = vunpack.c.l.b16 %v271
    %v841 = vunpack.c.h.b16 %v271
    %v842 = vunpack.c.l.b16 %v272
    %v843 = vunpack.c.h.b16 %v272
    %v844 = vunpack.c.l.b16 %v273
    %v845 = vunpack.c.h.b16 %v273
    %v846 = vunpack.c.l.b16 %v274
    %v847 = vunpack.c.h.b16 %v274
    %v848 = vunpack.c.l.b16 %v275
    %v849 = vunpack.c.h.b16 %v275
    %v850 = vunpack.c.l.b16 %v276
    %v851 = vunpack.c.h.b16 %v276
    %v852 = vunpack.c.l.b16 %v277
    %v853 = vunpack.c.h.b16 %v277
    %v854 = vunpack.c.l.b16 %v278
    %v855 = vunpack.c.h.b16 %v278
    %v856 = vunpack.c.l.b16 %v279
    %v857 = vunpack.c.h.b16 %v279
    %v858 = vunpack.c.l.b16 %v280
    %v859 = vunpack.c.h.b16 %v280
    %v860 = vunpack.c.l.b16 %v281
    %v861 = vunpack.c.h.b16 %v281
    %v862 = vunpack.c.l.b16 %v282
    %v863 = vunpack.c.h.b16 %v282
    %v864 = vunpack.c.l.b16 %v283
    %v865 = vunpack.c.h.b16 %v283
    %v866 = vunpack.c.l.b16 %v284
    %v867 = vunpack.c.h.b16 %v284
    %v868 = vunpack.c.l.b16 %v285
    %v869 = vunpack.c.h.b16 %v285
    %v870 = vunpack.c.l.b16 %v286
    %v871 = vunpack.c.h.b16 %v286
    %v872 = vunpack.c.l.b16 %v287
    %v873 = vunpack.c.h.b16 %v287
    %v874 = vunpack.c.l.b16 %v288
    %v875 = vunpack.c.h.b16 %v288
    %v876 = vunpack.c.l.b16 %v289
    %v877 = vunpack.c.h.b16 %v289
    %v878 = vunpack.c.l.b16 %v290
    %v879 = vunpack.c.h.b16 %v290
    %v880 = vunpack.c.l.b16 %v291
    %v881 = vunpack.c.h.b16 %v291
    %v882 = vunpack.c.l.b16 %v292
    %v883 = vunpack.c.h.b16 %v292
    %v884 = vunpack.c.l.b16 %v293
    %v885 = vunpack.c.h.b16 %v293
    %v886 = vunpack.c.l.b16 %v294
    %v887 = vunpack.c.h.b16 %v294
    %v888 = vunpack.c.l.b16 %v295
    %v889 = vunpack.c.h.b16 %v295
    %v890 = vunpack.c.l.b16 %v296
    %v891 = vunpack.c.h.b16 %v296
    %v892 = vunpack.c.l.b16 %v297
    %v893 = vunpack.c.h.b16 %v297
    %v894 = vunpack.c.l.b16 %v298
    %v895 = vunpack.c.h.b16 %v298
    %v896 = vunpack.c.l.b16 %v299
    %v897 = vunpack.c.h.b16 %v299
    %v898 = vunpack.c.l.b16 %v300
    %v899 = vunpack.c.h.b16 %v300
    %v900 = vunpack.c.l.b16 %v301
    %v901 = vunpack.c.h.b16 %v301
    %v902 = vunpack.c.l.b16 %v302
    %v903 = vunpack.c.h.b16 %v302
    %v904 = vunpack.c.l.b16 %v303
    %v905 = vunpack.c.h.b16 %v303
    %v906 = vunpack.c.l.b16 %v304
    %v907 = vunpack.c.h.b16 %v304
    %v908 = vunpack.c.l.b16 %v305
    %v909 = vunpack.c.h.b16 %v305
    %v910 = vunpack.c.l.b16 %v306
    %v911 = vunpack.c.h.b16 %v306
    %v912 = vunpack.c.l.b16 %v307
    %v913 = vunpack.c.h.b16 %v307
    %v914 = vunpack.c.l.b16 %v308
    %v915 = vunpack.c.h.b16 %v308
    %v916 = vunpack.c.l.b16 %v309
    %v917 = vunpack.c.h.b16 %v309
    %v918 = vunpack.c.l.b16 %v310
    %v919 = vunpack.c.h.b16 %v310
    %v920 = vunpack.c.l.b16 %v311
    %v921 = vunpack.c.h.b16 %v311
    %v922 = vunpack.c.l.b16 %v312
    %v923 = vunpack.c.h.b16 %v312
    %v924 = vunpack.c.l.b16 %v313
    %v925 = vunpack.c.h.b16 %v313
    %v926 = vunpack.c.l.b16 %v314
    %v927 = vunpack.c.h.b16 %v314
    %v928 = vunpack.c.l.b16 %v315
    %v929 = vunpack.c.h.b16 %v315
    %v930 = vunpack.c.l.b16 %v316
    %v931 = vunpack.c.h.b16 %v316
    %v932 = vunpack.c.l.b16 %v317
    %v933 = vunpack.c.h.b16 %v317
    %v934 = vunpack.c.l.b16 %v318
    %v935 = vunpack.c.h.b16 %v318
    %v936 = vunpack.c.l.b16 %v319
    %v937 = vunpack.c.h.b16 %v319
    %v938 = vunpack.c.l.b16 %v320
    %v939 = vunpack.c.h.b16 %v320
    %v940 = vunpack.c.l.b16 %v321
    %v941 = vunpack.c.h.b16 %v321
    %v942 = vunpack.c.l.b16 %v322
    %v943 = vunpack.c.h.b16 %v322
    %v944 = vunpack.c.l.b16 %v323
    %v945 = vunpack.c.h.b16 %v323
    %v946 = vunpack.c.l.b16 %v324
    %v947 = vunpack.c.h.b16 %v324
    %v948 = vunpack.c.l.b16 %v325
    %v949 = vunpack.c.h.b16 %v325
    %v950 = vunpack.c.l.b16 %v326
    %v951 = vunpack.c.h.b16 %v326
    %v952 = vunpack.c.l.b16 %v327
    %v953 = vunpack.c.h.b16 %v327
    %v954 = vunpack.c.l.b16 %v328
    %v955 = vunpack.c.h.b16 %v328
    %v956 = vunpack.c.l.b16 %v329
    %v957 = vunpack.c.h.b16 %v329
    %v958 = vunpack.c.l.b16 %v330
    %v959 = vunpack.c.h.b16 %v330
    %v960 = vunpack.c.l.b16 %v331
    %v961 = vunpack.c.h.b16 %v331
    %v962 = vunpack.c.l.b16 %v332
    %v963 = vunpack.c.h.b16 %v332
    %v964 = vunpack.c.l.b16 %v333
    %v965 = vunpack.c.h.b16 %v333
    %v966 = vunpack.c.l.b16 %v334
    %v967 = vunpack.c.h.b16 %v334
    %v968 = vunpack.c.l.b16 %v335
    %v969 = vunpack.c.h.b16 %v335
    %v970 = vunpack.c.l.b16 %v336
    %v971 = vunpack.c.h.b16 %v336
    %v972 = vunpack.c.l.b16 %v337
    %v973 = vunpack.c.h.b16 %v337
    %v974 = vunpack.c.l.b16 %v338
    %v975 = vunpack.c.h.b16 %v338
    %v976 = vunpack.c.l.b16 %v339
    %v977 = vunpack.c.h.b16 %v339
    %v978 = vunpack.c.l.b16 %v340
    %v979 = vunpack.c.h.b16 %v340
    %v980 = vunpack.c.l.b16 %v341
    %v981 = vunpack.c.h.b16 %v341
    %v982 = vunpack.c.l.b16 %v342
    %v983 = vunpack.c.h.b16 %v342
    %v984 = vunpack.c.l.b16 %v343
    %v985 = vunpack.c.h.b16 %v343
    %v986 = vunpack.c.l.b16 %v344
    %v987 = vunpack.c.h.b16 %v344
    %v988 = vunpack.c.l.b16 %v345
    %v989 = vunpack.c.h.b16 %v345
    %v990 = vunpack.c.l.b16 %v346
    %v991 = vunpack.c.h.b16 %v346
    %v992 = vunpack.c.l.b16 %v347
    %v993 = vunpack.c.h.b16 %v347
    %v994 = vunpack.c.l.b16 %v348
    %v995 = vunpack.c.h.b16 %v348
    %v996 = vunpack.c.l.b16 %v349
    %v997 = vunpack.c.h.b16 %v349
    %v998 = vunpack.c.l.b16 %v350
    %v999 = vunpack.c.h.b16 %v350
    %v1000 = vunpack.c.l.b16 %v351
    %v1001 = vunpack.c.h.b16 %v351
    %v1002 = vunpack.c.l.b16 %v352
    %v1003 = vunpack.c.h.b16 %v352
    %v1004 = vunpack.c.l.b16 %v353
    %v1005 = vunpack.c.h.b16 %v353
    %v1006 = vunpack.c.l.b16 %v354
    %v1007 = vunpack.c.h.b16 %v354
    %v1008 = vunpack.c.l.b16 %v355
    %v1009 = vunpack.c.h.b16 %v355
    %v1010 = vunpack.c.l.b16 %v356
    %v1011 = vunpack.c.h.b16 %v356
    %v1012 = vunpack.c.l.b16 %v357
    %v1013 = vunpack.c.h.b16 %v357
    %v1014 = vunpack.c.l.b16 %v358
    %v1015 = vunpack.c.h.b16 %v358
    %v1016 = vunpack.c.l.b16 %v359
    %v1017 = vunpack.c.h.b16 %v359
    %v1018 = vunpack.c.l.b16 %v360
    %v1019 = vunpack.c.h.b16 %v360
    %v1020 = vunpack.c.l.b16 %v361
    %v1021 = vunpack.c.h.b16 %v361
    %v1022 = vunpack.c.l.b16 %v362
    %v1023 = vunpack.c.h.b16 %v362
    %v1024 = vunpack.c.l.b16 %v363
    %v1025 = vunpack.c.h.b16 %v363
    %v1026 = vunpack.c.l.b16 %v364
    %v1027 = vunpack.c.h.b16 %v364
    %v1028 = vunpack.c.l.b16 %v365
    %v1029 = vunpack.c.h.b16 %v365
    %v1030 = vunpack.c.l.b16 %v366
    %v1031 = vunpack.c.h.b16 %v366
    %v1032 = vunpack.c.l.b16 %v367
    %v1033 = vunpack.c.h.b16 %v367
    %v1034 = vunpack.c.l.b16 %v368
    %v1035 = vunpack.c.h.b16 %v368
    %v1036 = vunpack.c.l.b16 %v369
    %v1037 = vunpack.c.h.b16 %v369
    %v1038 = vunpack.c.l.b16 %v370
    %v1039 = vunpack.c.h.b16 %v370
    %v1040 = vunpack.c.l.b16 %v371
    %v1041 = vunpack.c.h.b16 %v371
    %v1042 = vunpack.c.l.b16 %v372
    %v1043 = vunpack.c.h.b16 %v372
    %v1044 = vunpack.c.l.b16 %v373
    %v1045 = vunpack.c.h.b16 %v373
    %v1046 = vunpack.c.l.b16 %v374
    %v1047 = vunpack.c.h.b16 %v374
    %v1048 = vunpack.c.l.b16 %v375
    %v1049 = vunpack.c.h.b16 %v375
    %v1050 = vunpack.c.l.b16 %v376
    %v1051 = vunpack.c.h.b16 %v376
    %v1052 = vunpack.c.l.b16 %v377
    %v1053 = vunpack.c.h.b16 %v377
    %v1054 = vunpack.c.l.b16 %v378
    %v1055 = vunpack.c.h.b16 %v378
    %v1056 = vunpack.c.l.b16 %v379
    %v1057 = vunpack.c.h.b16 %v379
    %v1058 = vunpack.c.l.b16 %v380
    %v1059 = vunpack.c.h.b16 %v380
    %v1060 = vunpack.c.l.b16 %v381
    %v1061 = vunpack.c.h.b16 %v381
    %v1062 = vunpack.c.l.b16 %v382
    %v1063 = vunpack.c.h.b16 %v382
    %v1064 = vunpack.c.l.b16 %v383
    %v1065 = vunpack.c.h.b16 %v383
    %v1066 = vunpack.c.l.b16 %v384
    %v1067 = vunpack.c.h.b16 %v384
    %v1068 = vunpack.c.l.b16 %v385
    %v1069 = vunpack.c.h.b16 %v385
    %v1070 = vunpack.c.l.b16 %v386
    %v1071 = vunpack.c.h.b16 %v386
    %v1072 = vunpack.c.l.b16 %v387
    %v1073 = vunpack.c.h.b16 %v387
    %v1074 = vunpack.c.l.b16 %v388
    %v1075 = vunpack.c.h.b16 %v388
    %v1076 = vunpack.c.l.b16 %v389
    %v1077 = vunpack.c.h.b16 %v389
    %v1078 = vunpack.c.l.b16 %v390
    %v1079 = vunpack.c.h.b16 %v390
    %v1080 = vunpack.c.l.b16 %v391
    %v1081 = vunpack.c.h.b16 %v391
    %v1082 = vunpack.c.l.b16 %v392
    %v1083 = vunpack.c.h.b16 %v392
    %v1084 = vunpack.c.l.b16 %v393
    %v1085 = vunpack.c.h.b16 %v393
    %v1086 = vunpack.c.l.b16 %v394
    %v1087 = vunpack.c.h.b16 %v394
    %v1088 = vunpack.c.l.b16 %v395
    %v1089 = vunpack.c.h.b16 %v395
    %v1090 = vunpack.c.l.b16 %v396
    %v1091 = vunpack.c.h.b16 %v396
    %v1092 = vunpack.c.l.b16 %v397
    %v1093 = vunpack.c.h.b16 %v397
    %v1094 = vunpack.c.l.b16 %v398
    %v1095 = vunpack.c.h.b16 %v398
    %v1096 = vunpack.c.l.b16 %v399
    %v1097 = vunpack.c.h.b16 %v399
    %v1098 = vunpack.c.l.b16 %v400
    %v1099 = vunpack.c.h.b16 %v400
    %v1100 = vunpack.c.l.b16 %v401
    %v1101 = vunpack.c.h.b16 %v401
    %v1102 = vunpack.c.l.b16 %v402
    %v1103 = vunpack.c.h.b16 %v402
    %v1104 = vunpack.c.l.b16 %v403
    %v1105 = vunpack.c.h.b16 %v403
    %v1106 = vunpack.c.l.b16 %v404
    %v1107 = vunpack.c.h.b16 %v404
    %v1108 = vunpack.c.l.b16 %v405
    %v1109 = vunpack.c.h.b16 %v405
    %v1110 = vunpack.c.l.b16 %v406
    %v1111 = vunpack.c.h.b16 %v406
    %v1112 = vunpack.c.l.b16 %v407
    %v1113 = vunpack.c.h.b16 %v407
    %v1114 = vunpack.c.l.b16 %v408
    %v1115 = vunpack.c.h.b16 %v408
    %v1116 = vunpack.c.l.b16 %v409
    %v1117 = vunpack.c.h.b16 %v409
    %v1118 = vunpack.c.l.b16 %v410
    %v1119 = vunpack.c.h.b16 %v410
    %v1120 = vunpack.c.l.b16 %v411
    %v1121 = vunpack.c.h.b16 %v411
    %v1122 = vunpack.c.l.b16 %v412
    %v1123 = vunpack.c.h.b16 %v412
    %v1124 = vunpack.c.l.b16 %v413
    %v1125 = vunpack.c.h.b16 %v413
    %v1126 = vunpack.c.l.b16 %v414
    %v1127 = vunpack.c.h.b16 %v414
    %v1128 = vunpack.c.l.b16 %v415
    %v1129 = vunpack.c.h.b16 %v415
    %v1130 = vunpack.c.l.b16 %v416
    %v1131 = vunpack.c.h.b16 %v416
    %v1132 = vunpack.c.l.b16 %v417
    %v1133 = vunpack.c.h.b16 %v417
    %v1134 = vunpack.c.l.b16 %v418
    %v1135 = vunpack.c.h.b16 %v418
    %v1136 = vunpack.c.l.b16 %v419
    %v1137 = vunpack.c.h.b16 %v419
    %v1138 = vunpack.c.l.b16 %v420
    %v1139 = vunpack.c.h.b16 %v420
    %v1140 = vunpack.c.l.b16 %v421
    %v1141 = vunpack.c.h.b16 %v421
    %v1142 = vunpack.c.l.b16 %v422
    %v1143 = vunpack.c.h.b16 %v422
    %v1144 = vunpack.c.l.b16 %v423
    %v1145 = vunpack.c.h.b16 %v423
    %v1146 = vunpack.c.l.b16 %v424
    %v1147 = vunpack.c.h.b16 %v424
    %v1148 = vunpack.c.l.b16 %v425
    %v1149 = vunpack.c.h.b16 %v425
    %v1150 = vunpack.c.l.b16 %v426
    %v1151 = vunpack.c.h.b16 %v426
    %v1152 = vunpack.c.l.b16 %v427
    %v1153 = vunpack.c.h.b16 %v427
    %v1154 = vunpack.c.l.b16 %v428
    %v1155 = vunpack.c.h.b16 %v428
    %v1156 = vunpack.c.l.b16 %v429
    %v1157 = vunpack.c.h.b16 %v429
    %v1158 = vunpack.c.l.b16 %v430
    %v1159 = vunpack.c.h.b16 %v430
    %v1160 = vunpack.c.l.b16 %v431
    %v1161 = vunpack.c.h.b16 %v431
    %v1162 = vpack.c.b16 %v718, %v714
    %v1163 = vpack.c.b16 %v719, %v715
    %v1164 = vpack.c.b16 %v720, %v716
    %v1165 = vpack.c.b16 %v721, %v717
    %v1166 = vpack.c.b16 %v726, %v722
    %v1167 = vpack.c.b16 %v727, %v723
    %v1168 = vpack.c.b16 %v728, %v724
    %v1169 = vpack.c.b16 %v729, %v725
    %v1170 = vpack.c.b16 %v734, %v730
    %v1171 = vpack.c.b16 %v735, %v731
    %v1172 = vpack.c.b16 %v736, %v732
    %v1173 = vpack.c.b16 %v737, %v733
    %v1174 = vpack.c.b16 %v742, %v738
    %v1175 = vpack.c.b16 %v743, %v739
    %v1176 = vpack.c.b16 %v744, %v740
    %v1177 = vpack.c.b16 %v745, %v741
    %v1178 = vpack.c.b16 %v750, %v746
    %v1179 = vpack.c.b16 %v751, %v747
    %v1180 = vpack.c.b16 %v752, %v748
    %v1181 = vpack.c.b16 %v753, %v749
    %v1182 = vpack.c.b16 %v758, %v754
    %v1183 = vpack.c.b16 %v759, %v755
    %v1184 = vpack.c.b16 %v760, %v756
    %v1185 = vpack.c.b16 %v761, %v757
    %v1186 = vpack.c.b16 %v766, %v762
    %v1187 = vpack.c.b16 %v767, %v763
    %v1188 = vpack.c.b16 %v768, %v764
    %v1189 = vpack.c.b16 %v769, %v765
    %v1190 = vpack.c.b16 %v774, %v770
    %v1191 = vpack.c.b16 %v775, %v771
    %v1192 = vpack.c.b16 %v776, %v772
    %v1193 = vpack.c.b16 %v777, %v773
    %v1194 = vpack.c.b16 %v782, %v778
    %v1195 = vpack.c.b16 %v783, %v779
    %v1196 = vpack.c.b16 %v784, %v780
    %v1197 = vpack.c.b16 %v785, %v781
    %v1198 = vpack.c.b16 %v790, %v786
    %v1199 = vpack.c.b16 %v791, %v787
    %v1200 = vpack.c.b16 %v792, %v788
    %v1201 = vpack.c.b16 %v793, %v789
    %v1202 = vpack.c.b16 %v798, %v794
    %v1203 = vpack.c.b16 %v799, %v795
    %v1204 = vpack.c.b16 %v800, %v796
    %v1205 = vpack.c.b16 %v801, %v797
    %v1206 = vpack.c.b16 %v806, %v802
    %v1207 = vpack.c.b16 %v807, %v803
    %v1208 = vpack.c.b16 %v808, %v804
    %v1209 = vpack.c.b16 %v809, %v805
    %v1210 = vpack.c.b16 %v814, %v810
    %v1211 = vpack.c.b16 %v815, %v811
    %v1212 = vpack.c.b16 %v816, %v812
    %v1213 = vpack.c.b16 %v817, %v813
    %v1214 = vpack.c.b16 %v822, %v818
    %v1215 = vpack.c.b16 %v823, %v819
    %v1216 = vpack.c.b16 %v824, %v820
    %v1217 = vpack.c.b16 %v825, %v821
    %v1218 = vpack.c.b16 %v830, %v826
    %v1219 = vpack.c.b16 %v831, %v827
    %v1220 = vpack.c.b16 %v832, %v828
    %v1221 = vpack.c.b16 %v833, %v829
    %v1222 = vpack.c.b16 %v838, %v834
    %v1223 = vpack.c.b16 %v839, %v835
    %v1224 = vpack.c.b16 %v840, %v836
    %v1225 = vpack.c.b16 %v841, %v837
    %v1226 = vpack.c.b16 %v846, %v842
    %v1227 = vpack.c.b16 %v847, %v843
    %v1228 = vpack.c.b16 %v848, %v844
    %v1229 = vpack.c.b16 %v849, %v845
    %v1230 = vpack.c.b16 %v854, %v850
    %v1231 = vpack.c.b16 %v855, %v851
    %v1232 = vpack.c.b16 %v856, %v852
    %v1233 = vpack.c.b16 %v857, %v853
    %v1234 = vpack.c.b16 %v862, %v858
    %v1235 = vpack.c.b16 %v863, %v859
    %v1236 = vpack.c.b16 %v864, %v860
    %v1237 = vpack.c.b16 %v865, %v861
    %v1238 = vpack.c.b16 %v870, %v866
    %v1239 = vpack.c.b16 %v871, %v867
    %v1240 = vpack.c.b16 %v872, %v868
    %v1241 = vpack.c.b16 %v873, %v869
    %v1242 = vpack.c.b16 %v878, %v874
    %v1243 = vpack.c.b16 %v879, %v875
    %v1244 = vpack.c.b16 %v880, %v876
    %v1245 = vpack.c.b16 %v881, %v877
    %v1246 = vpack.c.b16 %v886, %v882
    %v1247 = vpack.c.b16 %v887, %v883
    %v1248 = vpack.c.b16 %v888, %v884
    %v1249 = vpack.c.b16 %v889, %v885
    %v1250 = vpack.c.b16 %v894, %v890
    %v1251 = vpack.c.b16 %v895, %v891
    %v1252 = vpack.c.b16 %v896, %v892
    %v1253 = vpack.c.b16 %v897, %v893
    %v1254 = vpack.c.b16 %v902, %v898
    %v1255 = vpack.c.b16 %v903, %v899
    %v1256 = vpack.c.b16 %v904, %v900
    %v1257 = vpack.c.b16 %v905, %v901
    %v1258 = vpack.c.b16 %v910, %v906
    %v1259 = vpack.c.b16 %v911, %v907
    %v1260 = vpack.c.b16 %v912, %v908
    %v1261 = vpack.c.b16 %v913, %v909
    %v1262 = vpack.c.b16 %v918, %v914
    %v1263 = vpack.c.b16 %v919, %v915
    %v1264 = vpack.c.b16 %v920, %v916
    %v1265 = vpack.c.b16 %v921, %v917
    %v1266 = vpack.c.b16 %v926, %v922
    %v1267 = vpack.c.b16 %v927, %v923
    %v1268 = vpack.c.b16 %v928, %v924
    %v1269 = vpack.c.b16 %v929, %v925
    %v1270 = vpack.c.b16 %v934, %v930
    %v1271 = vpack.c.b16 %v935, %v931
    %v1272 = vpack.c.b16 %v936, %v932
    %v1273 = vpack.c.b16 %v937, %v933
    %v1274 = vpack.c.b16 %v942, %v938
    %v1275 = vpack.c.b16 %v943, %v939
    %v1276 = vpack.c.b16 %v944, %v940
    %v1277 = vpack.c.b16 %v945, %v941
    %v1278 = vpack.c.b16 %v950, %v946
    %v1279 = vpack.c.b16 %v951, %v947
    %v1280 = vpack.c.b16 %v952, %v948
    %v1281 = vpack.c.b16 %v953, %v949
    %v1282 = vpack.c.b16 %v958, %v954
    %v1283 = vpack.c.b16 %v959, %v955
    %v1284 = vpack.c.b16 %v960, %v956
    %v1285 = vpack.c.b16 %v961, %v957
    %v1286 = vpack.c.b16 %v966, %v962
    %v1287 = vpack.c.b16 %v967, %v963
    %v1288 = vpack.c.b16 %v968, %v964
    %v1289 = vpack.c.b16 %v969, %v965
    %v1290 = vpack.c.b16 %v974, %v970
    %v1291 = vpack.c.b16 %v975, %v971
    %v1292 = vpack.c.b16 %v976, %v972
    %v1293 = vpack.c.b16 %v977, %v973
    %v1294 = vpack.c.b16 %v982, %v978
    %v1295 = vpack.c.b16 %v983, %v979
    %v1296 = vpack.c.b16 %v984, %v980
    %v1297 = vpack.c.b16 %v985, %v981
    %v1298 = vpack.c.b16 %v990, %v986
    %v1299 = vpack.c.b16 %v991, %v987
    %v1300 = vpack.c.b16 %v992, %v988
    %v1301 = vpack.c.b16 %v993, %v989
    %v1302 = vpack.c.b16 %v998, %v994
    %v1303 = vpack.c.b16 %v999, %v995
    %v1304 = vpack.c.b16 %v1000, %v996
    %v1305 = vpack.c.b16 %v1001, %v997
    %v1306 = vpack.c.b16 %v1006, %v1002
    %v1307 = vpack.c.b16 %v1007, %v1003
    %v1308 = vpack.c.b16 %v1008, %v1004
    %v1309 = vpack.c.b16 %v1009, %v1005
    %v1310 = vpack.c.b16 %v1014, %v1010
    %v1311 = vpack.c.b16 %v1015, %v1011
    %v1312 = vpack.c.b16 %v1016, %v1012
    %v1313 = vpack.c.b16 %v1017, %v1013
    %v1314 = vpack.c.b16 %v1022, %v1018
    %v1315 = vpack.c.b16 %v1023, %v1019
    %v1316 = vpack.c.b16 %v1024, %v1020
    %v1317 = vpack.c.b16 %v1025, %v1021
    %v1318 = vpack.c.b16 %v1030, %v1026
    %v1319 = vpack.c.b16 %v1031, %v1027
    %v1320 = vpack.c.b16 %v1032, %v1028
    %v1321 = vpack.c.b16 %v1033, %v1029
    %v1322 = vpack.c.b16 %v1038, %v1034
    %v1323 = vpack.c.b16 %v1039, %v1035
    %v1324 = vpack.c.b16 %v1040, %v1036
    %v1325 = vpack.c.b16 %v1041, %v1037
    %v1326 = vpack.c.b16 %v1046, %v1042
    %v1327 = vpack.c.b16 %v1047, %v1043
    %v1328 = vpack.c.b16 %v1048, %v1044
    %v1329 = vpack.c.b16 %v1049, %v1045
    %v1330 = vpack.c.b16 %v1054, %v1050
    %v1331 = vpack.c.b16 %v1055, %v1051
    %v1332 = vpack.c.b16 %v1056, %v1052
    %v1333 = vpack.c.b16 %v1057, %v1053
    %v1334 = vpack.c.b16 %v1062, %v1058
    %v1335 = vpack.c.b16 %v1063, %v1059
    %v1336 = vpack.c.b16 %v1064, %v1060
    %v1337 = vpack.c.b16 %v1065, %v1061
    %v1338 = vpack.c.b16 %v1070, %v1066
    %v1339 = vpack.c.b16 %v1071, %v1067
    %v1340 = vpack.c.b16 %v1072, %v1068
    %v1341 = vpack.c.b16 %v1073, %v1069
    %v1342 = vpack.c.b16 %v1078, %v1074
    %v1343 = vpack.c.b16 %v1079, %v1075
    %v1344 = vpack.c.b16 %v1080, %v1076
    %v1345 = vpack.c.b16 %v1081, %v1077
    %v1346 = vpack.c.b16 %v1086, %v1082
    %v1347 = vpack.c.b16 %v1087, %v1083
    %v1348 = vpack.c.b16 %v1088, %v1084
    %v1349 = vpack.c.b16 %v1089, %v1085
    %v1350 = vpack.c.b16 %v1094, %v1090
    %v1351 = vpack.c.b16 %v1095, %v1091
    %v1352 = vpack.c.b16 %v1096, %v1092
    %v1353 = vpack.c.b16 %v1097, %v1093
    %v1354 = vpack.c.b16 %v1102, %v1098
    %v1355 = vpack.c.b16 %v1103, %v1099
    %v1356 = vpack.c.b16 %v1104, %v1100
    %v1357 = vpack.c.b16 %v1105, %v1101
    %v1358 = vpack.c.b16 %v1110, %v1106
    %v1359 = vpack.c.b16 %v1111, %v1107
    %v1360 = vpack.c.b16 %v1112, %v1108
    %v1361 = vpack.c.b16 %v1113, %v1109
    %v1362 = vpack.c.b16 %v1118, %v1114
    %v1363 = vpack.c.b16 %v1119, %v1115
    %v1364 = vpack.c.b16 %v1120, %v1116
    %v1365 = vpack.c.b16 %v1121, %v1117
    %v1366 = vpack.c.b16 %v1126, %v1122
    %v1367 = vpack.c.b16 %v1127, %v1123
    %v1368 = vpack.c.b16 %v1128, %v1124
    %v1369 = vpack.c.b16 %v1129, %v1125
    %v1370 = vpack.c.b16 %v1134, %v1130
    %v1371 = vpack.c.b16 %v1135, %v1131
    %v1372 = vpack.c.b16 %v1136, %v1132
    %v1373 = vpack.c.b16 %v1137, %v1133
    %v1374 = vpack.c.b16 %v1142, %v1138
    %v1375 = vpack.c.b16 %v1143, %v1139
    %v1376 = vpack.c.b16 %v1144, %v1140
    %v1377 = vpack.c.b16 %v1145, %v1141
    %v1378 = vpack.c.b16 %v1150, %v1146
    %v1379 = vpack.c.b16 %v1151, %v1147
    %v1380 = vpack.c.b16 %v1152, %v1148
    %v1381 = vpack.c.b16 %v1153, %v1149
    %v1382 = vpack.c.b16 %v1158, %v1154
    %v1383 = vpack.c.b16 %v1159, %v1155
    %v1384 = vpack.c.b16 %v1160, %v1156
    %v1385 = vpack.c.b16 %v1161, %v1157
    %1610 = vmatprep.subr.bf16.mxu0 %v1163
    %1611 = vmatpush1.bf16.msra.mxu0 %v1162
    %1612 = vmatprep.subr.bf16.mxu0 %v1167
    %1613 = vmatpush1.bf16.msra.mxu0 %v1166
    %1614 = vmatprep.subr.bf16.mxu0 %v1171
    %1615 = vmatpush1.bf16.msra.mxu0 %v1170
    %1616 = vmatprep.subr.bf16.mxu0 %v1175
    %1617 = vmatpush1.bf16.msra.mxu0 %v1174
    %1618 = vmatprep.subr.bf16.mxu0 %v1179
    %1619 = vmatpush1.bf16.msra.mxu0 %v1178
    %1620 = vmatprep.subr.bf16.mxu0 %v1183
    %1621 = vmatpush1.bf16.msra.mxu0 %v1182
    %1622 = vmatprep.subr.bf16.mxu0 %v1187
    %1623 = vmatpush1.bf16.msra.mxu0 %v1186
    %1624 = vmatprep.subr.bf16.mxu0 %v1191
    %1625 = vmatpush1.bf16.msra.mxu0 %v1190
    %1626 = vmatprep.subr.bf16.mxu0 %v1195
    %1627 = vmatpush1.bf16.msra.mxu0 %v1194
    %1628 = vmatprep.subr.bf16.mxu0 %v1199
    %1629 = vmatpush1.bf16.msra.mxu0 %v1198
    %1630 = vmatprep.subr.bf16.mxu0 %v1203
    %1631 = vmatpush1.bf16.msra.mxu0 %v1202
    %1632 = vmatprep.subr.bf16.mxu0 %v1207
    %1633 = vmatpush1.bf16.msra.mxu0 %v1206
    %1634 = vmatprep.subr.bf16.mxu0 %v1211
    %1635 = vmatpush1.bf16.msra.mxu0 %v1210
    %1636 = vmatprep.subr.bf16.mxu0 %v1215
    %1637 = vmatpush1.bf16.msra.mxu0 %v1214
    %1638 = vmatprep.subr.bf16.mxu0 %v1219
    %1639 = vmatpush1.bf16.msra.mxu0 %v1218
    %1640 = vmatprep.subr.bf16.mxu0 %v1223
    %1641 = vmatpush1.bf16.msra.mxu0 %v1222
    %1642 = vmatprep.mubr.bf16.mxu0 %v477
    %1643 = vmatmul.mubr.bf16.gmra.mrb[0].mxu0 %v476
    %v1644 = vpop.f32.mrb[0].mxu0
    %v1645 = vadd.f32 %v437, %v1644
    %v1646 = vpop.f32.mrb[0].mxu0
    %v1647 = vadd.f32 %v441, %v1646
    %v1648 = vpop.f32.mrb[0].mxu0
    %v1649 = vadd.f32 %v437, %v1648
    %v1650 = vpop.f32.mrb[0].mxu0
    %v1651 = vadd.f32 %v441, %v1650
    %1652 = vdwg.mxu0
    %1653 = vmatprep.subr.bf16.mxu0 %v1227
    %1654 = vmatpush1.bf16.msra.mxu0 %v1226
    %1655 = vmatprep.subr.bf16.mxu0 %v1231
    %1656 = vmatpush1.bf16.msra.mxu0 %v1230
    %1657 = vmatprep.subr.bf16.mxu0 %v1235
    %1658 = vmatpush1.bf16.msra.mxu0 %v1234
    %1659 = vmatprep.subr.bf16.mxu0 %v1239
    %1660 = vmatpush1.bf16.msra.mxu0 %v1238
    %1661 = vmatprep.subr.bf16.mxu0 %v1243
    %1662 = vmatpush1.bf16.msra.mxu0 %v1242
    %1663 = vmatprep.subr.bf16.mxu0 %v1247
    %1664 = vmatpush1.bf16.msra.mxu0 %v1246
    %1665 = vmatprep.subr.bf16.mxu0 %v1251
    %1666 = vmatpush1.bf16.msra.mxu0 %v1250
    %1667 = vmatprep.subr.bf16.mxu0 %v1255
    %1668 = vmatpush1.bf16.msra.mxu0 %v1254
    %1669 = vmatprep.subr.bf16.mxu0 %v1259
    %1670 = vmatpush1.bf16.msra.mxu0 %v1258
    %1671 = vmatprep.subr.bf16.mxu0 %v1263
    %1672 = vmatpush1.bf16.msra.mxu0 %v1262
    %1673 = vmatprep.subr.bf16.mxu0 %v1267
    %1674 = vmatpush1.bf16.msra.mxu0 %v1266
    %1675 = vmatprep.subr.bf16.mxu0 %v1271
    %1676 = vmatpush1.bf16.msra.mxu0 %v1270
    %1677 = vmatprep.subr.bf16.mxu0 %v1275
    %1678 = vmatpush1.bf16.msra.mxu0 %v1274
    %1679 = vmatprep.subr.bf16.mxu0 %v1279
    %1680 = vmatpush1.bf16.msra.mxu0 %v1278
    %1681 = vmatprep.subr.bf16.mxu0 %v1283
    %1682 = vmatpush1.bf16.msra.mxu0 %v1282
    %1683 = vmatprep.subr.bf16.mxu0 %v1287
    %1684 = vmatpush1.bf16.msra.mxu0 %v1286
    %1685 = vmatprep.mubr.bf16.mxu0 %v479
    %1686 = vmatmul.mubr.bf16.gmra.mrb[0].mxu0 %v478
    %v1687 = vpop.f32.mrb[0].mxu0
    %v1688 = vadd.f32 %v1645, %v1687
    %v1689 = vpop.f32.mrb[0].mxu0
    %v1690 = vadd.f32 %v1647, %v1689
    %v1691 = vpop.f32.mrb[0].mxu0
    %v1692 = vadd.f32 %v1649, %v1691
    %v1693 = vpop.f32.mrb[0].mxu0
    %v1694 = vadd.f32 %v1651, %v1693
    %1695 = vdwg.mxu0
    %1696 = vmatprep.subr.bf16.mxu0 %v1291
    %1697 = vmatpush1.bf16.msra.mxu0 %v1290
    %1698 = vmatprep.subr.bf16.mxu0 %v1295
    %1699 = vmatpush1.bf16.msra.mxu0 %v1294
    %1700 = vmatprep.subr.bf16.mxu0 %v1299
    %1701 = vmatpush1.bf16.msra.mxu0 %v1298
    %1702 = vmatprep.subr.bf16.mxu0 %v1303
    %1703 = vmatpush1.bf16.msra.mxu0 %v1302
    %1704 = vmatprep.subr.bf16.mxu0 %v1307
    %1705 = vmatpush1.bf16.msra.mxu0 %v1306
    %1706 = vmatprep.subr.bf16.mxu0 %v1311
    %1707 = vmatpush1.bf16.msra.mxu0 %v1310
    %1708 = vmatprep.subr.bf16.mxu0 %v1315
    %1709 = vmatpush1.bf16.msra.mxu0 %v1314
    %1710 = vmatprep.subr.bf16.mxu0 %v1319
    %1711 = vmatpush1.bf16.msra.mxu0 %v1318
    %1712 = vmatprep.subr.bf16.mxu0 %v1323
    %1713 = vmatpush1.bf16.msra.mxu0 %v1322
    %1714 = vmatprep.subr.bf16.mxu0 %v1327
    %1715 = vmatpush1.bf16.msra.mxu0 %v1326
    %1716 = vmatprep.subr.bf16.mxu0 %v1331
    %1717 = vmatpush1.bf16.msra.mxu0 %v1330
    %1718 = vmatprep.subr.bf16.mxu0 %v1335
    %1719 = vmatpush1.bf16.msra.mxu0 %v1334
    %1720 = vmatprep.subr.bf16.mxu0 %v1339
    %1721 = vmatpush1.bf16.msra.mxu0 %v1338
    %1722 = vmatprep.subr.bf16.mxu0 %v1343
    %1723 = vmatpush1.bf16.msra.mxu0 %v1342
    %1724 = vmatprep.subr.bf16.mxu0 %v1347
    %1725 = vmatpush1.bf16.msra.mxu0 %v1346
    %1726 = vmatprep.subr.bf16.mxu0 %v1351
    %1727 = vmatpush1.bf16.msra.mxu0 %v1350
    %1728 = vmatprep.mubr.bf16.mxu0 %v481
    %1729 = vmatmul.mubr.bf16.gmra.mrb[0].mxu0 %v480
    %v1730 = vpop.f32.mrb[0].mxu0
    %v1731 = vadd.f32 %v1688, %v1730
    %v1732 = vpop.f32.mrb[0].mxu0
    %v1733 = vadd.f32 %v1690, %v1732
    %v1734 = vpop.f32.mrb[0].mxu0
    %v1735 = vadd.f32 %v1692, %v1734
    %v1736 = vpop.f32.mrb[0].mxu0
    %v1737 = vadd.f32 %v1694, %v1736
    %1738 = vdwg.mxu0
    %1739 = vmatprep.subr.bf16.mxu0 %v1355
    %1740 = vmatpush1.bf16.msra.mxu0 %v1354
    %1741 = vmatprep.subr.bf16.mxu0 %v1359
    %1742 = vmatpush1.bf16.msra.mxu0 %v1358
    %1743 = vmatprep.subr.bf16.mxu0 %v1363
    %1744 = vmatpush1.bf16.msra.mxu0 %v1362
    %1745 = vmatprep.subr.bf16.mxu0 %v1367
    %1746 = vmatpush1.bf16.msra.mxu0 %v1366
    %1747 = vmatprep.subr.bf16.mxu0 %v1371
    %1748 = vmatpush1.bf16.msra.mxu0 %v1370
    %1749 = vmatprep.subr.bf16.mxu0 %v1375
    %1750 = vmatpush1.bf16.msra.mxu0 %v1374
    %1751 = vmatprep.subr.bf16.mxu0 %v1379
    %1752 = vmatpush1.bf16.msra.mxu0 %v1378
    %1753 = vmatprep.subr.bf16.mxu0 %v1383
    %1754 = vmatpush1.bf16.msra.mxu0 %v1382
    %1755 = vmatprep.subr.bf16.mxu0 0
    %1756 = vmatpush1.bf16.msra.mxu0 0
    %1757 = vmatprep.subr.bf16.mxu0 0
    %1758 = vmatpush1.bf16.msra.mxu0 0
    %1759 = vmatprep.subr.bf16.mxu0 0
    %1760 = vmatpush1.bf16.msra.mxu0 0
    %1761 = vmatprep.subr.bf16.mxu0 0
    %1762 = vmatpush1.bf16.msra.mxu0 0
    %1763 = vmatprep.subr.bf16.mxu0 0
    %1764 = vmatpush1.bf16.msra.mxu0 0
    %1765 = vmatprep.subr.bf16.mxu0 0
    %1766 = vmatpush1.bf16.msra.mxu0 0
    %1767 = vmatprep.subr.bf16.mxu0 0
    %1768 = vmatpush1.bf16.msra.mxu0 0
    %1769 = vmatprep.subr.bf16.mxu0 0
    %1770 = vmatpush1.bf16.msra.mxu0 0
    %1771 = vmatprep.mubr.bf16.mxu0 0
    %1772 = vmatmul.mubr.bf16.gmra.mrb[0].mxu0 %v482
    %v1773 = vpop.f32.mrb[0].mxu0
    %v1774 = vadd.f32 %v1731, %v1773
    %v1775 = vpop.f32.mrb[0].mxu0
    %v1776 = vadd.f32 %v1733, %v1775
    %v1777 = vpop.f32.mrb[0].mxu0
    %v1778 = vadd.f32 %v1735, %v1777
    %v1779 = vpop.f32.mrb[0].mxu0
    %v1780 = vadd.f32 %v1737, %v1779
    %1781 = vdwg.mxu0
    %1782 = vmatprep.subr.bf16.mxu0 %v1165
    %1783 = vmatpush1.bf16.msra.mxu0 %v1164
    %1784 = vmatprep.subr.bf16.mxu0 %v1169
    %1785 = vmatpush1.bf16.msra.mxu0 %v1168
    %1786 = vmatprep.subr.bf16.mxu0 %v1173
    %1787 = vmatpush1.bf16.msra.mxu0 %v1172
    %1788 = vmatprep.subr.bf16.mxu0 %v1177
    %1789 = vmatpush1.bf16.msra.mxu0 %v1176
    %1790 = vmatprep.subr.bf16.mxu0 %v1181
    %1791 = vmatpush1.bf16.msra.mxu0 %v1180
    %1792 = vmatprep.subr.bf16.mxu0 %v1185
    %1793 = vmatpush1.bf16.msra.mxu0 %v1184
    %1794 = vmatprep.subr.bf16.mxu0 %v1189
    %1795 = vmatpush1.bf16.msra.mxu0 %v1188
    %1796 = vmatprep.subr.bf16.mxu0 %v1193
    %1797 = vmatpush1.bf16.msra.mxu0 %v1192
    %1798 = vmatprep.subr.bf16.mxu0 %v1197
    %1799 = vmatpush1.bf16.msra.mxu0 %v1196
    %1800 = vmatprep.subr.bf16.mxu0 %v1201
    %1801 = vmatpush1.bf16.msra.mxu0 %v1200
    %1802 = vmatprep.subr.bf16.mxu0 %v1205
    %1803 = vmatpush1.bf16.msra.mxu0 %v1204
    %1804 = vmatprep.subr.bf16.mxu0 %v1209
    %1805 = vmatpush1.bf16.msra.mxu0 %v1208
    %1806 = vmatprep.subr.bf16.mxu0 %v1213
    %1807 = vmatpush1.bf16.msra.mxu0 %v1212
    %1808 = vmatprep.subr.bf16.mxu0 %v1217
    %1809 = vmatpush1.bf16.msra.mxu0 %v1216
    %1810 = vmatprep.subr.bf16.mxu0 %v1221
    %1811 = vmatpush1.bf16.msra.mxu0 %v1220
    %1812 = vmatprep.subr.bf16.mxu0 %v1225
    %1813 = vmatpush1.bf16.msra.mxu0 %v1224
    %1814 = vmatprep.mubr.bf16.mxu0 %v477
    %1815 = vmatmul.mubr.bf16.gmra.mrb[0].mxu0 %v476
    %v1816 = vpop.f32.mrb[0].mxu0
    %v1817 = vadd.f32 %v445, %v1816
    %v1818 = vpop.f32.mrb[0].mxu0
    %v1819 = vadd.f32 %v449, %v1818
    %v1820 = vpop.f32.mrb[0].mxu0
    %v1821 = vadd.f32 %v445, %v1820
    %v1822 = vpop.f32.mrb[0].mxu0
    %v1823 = vadd.f32 %v449, %v1822
    %1824 = vdwg.mxu0
    %1825 = vmatprep.subr.bf16.mxu0 %v1229
    %1826 = vmatpush1.bf16.msra.mxu0 %v1228
    %1827 = vmatprep.subr.bf16.mxu0 %v1233
    %1828 = vmatpush1.bf16.msra.mxu0 %v1232
    %1829 = vmatprep.subr.bf16.mxu0 %v1237
    %1830 = vmatpush1.bf16.msra.mxu0 %v1236
    %1831 = vmatprep.subr.bf16.mxu0 %v1241
    %1832 = vmatpush1.bf16.msra.mxu0 %v1240
    %1833 = vmatprep.subr.bf16.mxu0 %v1245
    %1834 = vmatpush1.bf16.msra.mxu0 %v1244
    %1835 = vmatprep.subr.bf16.mxu0 %v1249
    %1836 = vmatpush1.bf16.msra.mxu0 %v1248
    %1837 = vmatprep.subr.bf16.mxu0 %v1253
    %1838 = vmatpush1.bf16.msra.mxu0 %v1252
    %1839 = vmatprep.subr.bf16.mxu0 %v1257
    %1840 = vmatpush1.bf16.msra.mxu0 %v1256
    %1841 = vmatprep.subr.bf16.mxu0 %v1261
    %1842 = vmatpush1.bf16.msra.mxu0 %v1260
    %1843 = vmatprep.subr.bf16.mxu0 %v1265
    %1844 = vmatpush1.bf16.msra.mxu0 %v1264
    %1845 = vmatprep.subr.bf16.mxu0 %v1269
    %1846 = vmatpush1.bf16.msra.mxu0 %v1268
    %1847 = vmatprep.subr.bf16.mxu0 %v1273
    %1848 = vmatpush1.bf16.msra.mxu0 %v1272
    %1849 = vmatprep.subr.bf16.mxu0 %v1277
    %1850 = vmatpush1.bf16.msra.mxu0 %v1276
    %1851 = vmatprep.subr.bf16.mxu0 %v1281
    %1852 = vmatpush1.bf16.msra.mxu0 %v1280
    %1853 = vmatprep.subr.bf16.mxu0 %v1285
    %1854 = vmatpush1.bf16.msra.mxu0 %v1284
    %1855 = vmatprep.subr.bf16.mxu0 %v1289
    %1856 = vmatpush1.bf16.msra.mxu0 %v1288
    %1857 = vmatprep.mubr.bf16.mxu0 %v479
    %1858 = vmatmul.mubr.bf16.gmra.mrb[0].mxu0 %v478
    %v1859 = vpop.f32.mrb[0].mxu0
    %v1860 = vadd.f32 %v1817, %v1859
    %v1861 = vpop.f32.mrb[0].mxu0
    %v1862 = vadd.f32 %v1819, %v1861
    %v1863 = vpop.f32.mrb[0].mxu0
    %v1864 = vadd.f32 %v1821, %v1863
    %v1865 = vpop.f32.mrb[0].mxu0
    %v1866 = vadd.f32 %v1823, %v1865
    %1867 = vdwg.mxu0
    %1868 = vmatprep.subr.bf16.mxu0 %v1293
    %1869 = vmatpush1.bf16.msra.mxu0 %v1292
    %1870 = vmatprep.subr.bf16.mxu0 %v1297
    %1871 = vmatpush1.bf16.msra.mxu0 %v1296
    %1872 = vmatprep.subr.bf16.mxu0 %v1301
    %1873 = vmatpush1.bf16.msra.mxu0 %v1300
    %1874 = vmatprep.subr.bf16.mxu0 %v1305
    %1875 = vmatpush1.bf16.msra.mxu0 %v1304
    %1876 = vmatprep.subr.bf16.mxu0 %v1309
    %1877 = vmatpush1.bf16.msra.mxu0 %v1308
    %1878 = vmatprep.subr.bf16.mxu0 %v1313
    %1879 = vmatpush1.bf16.msra.mxu0 %v1312
    %1880 = vmatprep.subr.bf16.mxu0 %v1317
    %1881 = vmatpush1.bf16.msra.mxu0 %v1316
    %1882 = vmatprep.subr.bf16.mxu0 %v1321
    %1883 = vmatpush1.bf16.msra.mxu0 %v1320
    %1884 = vmatprep.subr.bf16.mxu0 %v1325
    %1885 = vmatpush1.bf16.msra.mxu0 %v1324
    %1886 = vmatprep.subr.bf16.mxu0 %v1329
    %1887 = vmatpush1.bf16.msra.mxu0 %v1328
    %1888 = vmatprep.subr.bf16.mxu0 %v1333
    %1889 = vmatpush1.bf16.msra.mxu0 %v1332
    %1890 = vmatprep.subr.bf16.mxu0 %v1337
    %1891 = vmatpush1.bf16.msra.mxu0 %v1336
    %1892 = vmatprep.subr.bf16.mxu0 %v1341
    %1893 = vmatpush1.bf16.msra.mxu0 %v1340
    %1894 = vmatprep.subr.bf16.mxu0 %v1345
    %1895 = vmatpush1.bf16.msra.mxu0 %v1344
    %1896 = vmatprep.subr.bf16.mxu0 %v1349
    %1897 = vmatpush1.bf16.msra.mxu0 %v1348
    %1898 = vmatprep.subr.bf16.mxu0 %v1353
    %1899 = vmatpush1.bf16.msra.mxu0 %v1352
    %1900 = vmatprep.mubr.bf16.mxu0 %v481
    %1901 = vmatmul.mubr.bf16.gmra.mrb[0].mxu0 %v480
    %v1902 = vpop.f32.mrb[0].mxu0
    %v1903 = vadd.f32 %v1860, %v1902
    %v1904 = vpop.f32.mrb[0].mxu0
    %v1905 = vadd.f32 %v1862, %v1904
    %v1906 = vpop.f32.mrb[0].mxu0
    %v1907 = vadd.f32 %v1864, %v1906
    %v1908 = vpop.f32.mrb[0].mxu0
    %v1909 = vadd.f32 %v1866, %v1908
    %1910 = vdwg.mxu0
    %1911 = vmatprep.subr.bf16.mxu0 %v1357
    %1912 = vmatpush1.bf16.msra.mxu0 %v1356
    %1913 = vmatprep.subr.bf16.mxu0 %v1361
    %1914 = vmatpush1.bf16.msra.mxu0 %v1360
    %1915 = vmatprep.subr.bf16.mxu0 %v1365
    %1916 = vmatpush1.bf16.msra.mxu0 %v1364
    %1917 = vmatprep.subr.bf16.mxu0 %v1369
    %1918 = vmatpush1.bf16.msra.mxu0 %v1368
    %1919 = vmatprep.subr.bf16.mxu0 %v1373
    %1920 = vmatpush1.bf16.msra.mxu0 %v1372
    %1921 = vmatprep.subr.bf16.mxu0 %v1377
    %1922 = vmatpush1.bf16.msra.mxu0 %v1376
    %1923 = vmatprep.subr.bf16.mxu0 %v1381
    %1924 = vmatpush1.bf16.msra.mxu0 %v1380
    %1925 = vmatprep.subr.bf16.mxu0 %v1385
    %1926 = vmatpush1.bf16.msra.mxu0 %v1384
    %1927 = vmatprep.subr.bf16.mxu0 0
    %1928 = vmatpush1.bf16.msra.mxu0 0
    %1929 = vmatprep.subr.bf16.mxu0 0
    %1930 = vmatpush1.bf16.msra.mxu0 0
    %1931 = vmatprep.subr.bf16.mxu0 0
    %1932 = vmatpush1.bf16.msra.mxu0 0
    %1933 = vmatprep.subr.bf16.mxu0 0
    %1934 = vmatpush1.bf16.msra.mxu0 0
    %1935 = vmatprep.subr.bf16.mxu0 0
    %1936 = vmatpush1.bf16.msra.mxu0 0
    %1937 = vmatprep.subr.bf16.mxu0 0
    %1938 = vmatpush1.bf16.msra.mxu0 0
    %1939 = vmatprep.subr.bf16.mxu0 0
    %1940 = vmatpush1.bf16.msra.mxu0 0
    %1941 = vmatprep.subr.bf16.mxu0 0
    %1942 = vmatpush1.bf16.msra.mxu0 0
    %1943 = vmatprep.mubr.bf16.mxu0 0
    %1944 = vmatmul.mubr.bf16.gmra.mrb[0].mxu0 %v482
    %v1945 = vpop.f32.mrb[0].mxu0
    %v1946 = vadd.f32 %v1903, %v1945
    %v1947 = vpop.f32.mrb[0].mxu0
    %v1948 = vadd.f32 %v1905, %v1947
    %v1949 = vpop.f32.mrb[0].mxu0
    %v1950 = vadd.f32 %v1907, %v1949
    %v1951 = vpop.f32.mrb[0].mxu0
    %v1952 = vadd.f32 %v1909, %v1951
    %1953 = vdwg.mxu0
    %v1954 = vmax.f32 %v1774, 0.0
    %v1955 = vmax.f32 %v1776, 0.0
    %v1956 = vmax.f32 %v1946, 0.0
    %v1957 = vmax.f32 %v1948, 0.0
    %v1958 = vmax.f32 %v1778, 0.0
    %v1959 = vmax.f32 %v1780, 0.0
    %v1960 = vmax.f32 %v1950, 0.0
    %v1961 = vmax.f32 %v1952, 0.0
    %v1962 = vpack.c.bf16 %v1958, %v1954
    %v1963 = vpack.c.bf16 %v1959, %v1955
    %v1964 = vpack.c.bf16 %v1960, %v1956
    %v1965 = vpack.c.bf16 %v1961, %v1957
    %v1966 = vld [vmem:[#allocation7] sm:$0xff]
    %v1967 = vld [vmem:[#allocation7 + $0x8] sm:$0xff]
    %v1968 = vld [vmem:[#allocation7 + $0x10] sm:$0xff]
    %v1969 = vld [vmem:[#allocation7 + $0x18] sm:$0xff]
    %v1970 = vld [vmem:[#allocation7 + $0x20] sm:$0xff]
    %v1971 = vld [vmem:[#allocation7 + $0x28] sm:$0xff]
    %v1972 = vld [vmem:[#allocation7 + $0x30] sm:$0xff]
    %v1973 = vld [vmem:[#allocation7 + $0x38] sm:$0xff]
    %v1974 = vld [vmem:[#allocation7 + $0x40] sm:$0xff]
    %v1975 = vld [vmem:[#allocation7 + $0x48] sm:$0xff]
    %v1976 = vld [vmem:[#allocation7 + $0x50] sm:$0xff]
    %v1977 = vld [vmem:[#allocation7 + $0x58] sm:$0xff]
    %v1978 = vld [vmem:[#allocation7 + $0x60] sm:$0xff]
    %v1979 = vld [vmem:[#allocation7 + $0x68] sm:$0xff]
    %v1980 = vld [vmem:[#allocation7 + $0x70] sm:$0xff]
    %v1981 = vld [vmem:[#allocation7 + $0x78] sm:$0xff]
    %v1982 = vld [vmem:[#allocation7 + $0x80] sm:$0xff]
    %v1983 = vld [vmem:[#allocation7 + $0x88] sm:$0xff]
    %v1984 = vld [vmem:[#allocation7 + $0x90] sm:$0xff]
    %v1985 = vld [vmem:[#allocation7 + $0x98] sm:$0xff]
    %v1986 = vld [vmem:[#allocation7 + $0xa0] sm:$0xff]
    %v1987 = vld [vmem:[#allocation7 + $0xa8] sm:$0xff]
    %v1988 = vld [vmem:[#allocation7 + $0xb0] sm:$0xff]
    %v1989 = vld [vmem:[#allocation7 + $0xb8] sm:$0xff]
    %v1990 = vld [vmem:[#allocation7 + $0xc0] sm:$0xff]
    %v1991 = vld [vmem:[#allocation7 + $0xc8] sm:$0xff]
    %v1992 = vld [vmem:[#allocation7 + $0xd0] sm:$0xff]
    %v1993 = vld [vmem:[#allocation7 + $0xd8] sm:$0xff]
    %v1994 = vld [vmem:[#allocation7 + $0xe0] sm:$0xff]
    %v1995 = vld [vmem:[#allocation7 + $0xe8] sm:$0xff]
    %v1996 = vld [vmem:[#allocation7 + $0xf0] sm:$0xff]
    %v1997 = vld [vmem:[#allocation7 + $0xf8] sm:$0xff]
    %v1998 = vld [vmem:[#allocation7 + $0x100] sm:$0xff]
    %v1999 = vld [vmem:[#allocation7 + $0x108] sm:$0xff]
    %v2000 = vld [vmem:[#allocation7 + $0x110] sm:$0xff]
    %v2001 = vld [vmem:[#allocation7 + $0x118] sm:$0xff]
    %v2002 = vld [vmem:[#allocation7 + $0x120] sm:$0xff]
    %v2003 = vld [vmem:[#allocation7 + $0x128] sm:$0xff]
    %v2004 = vld [vmem:[#allocation7 + $0x130] sm:$0xff]
    %v2005 = vld [vmem:[#allocation7 + $0x138] sm:$0xff]
    %v2006 = vld [vmem:[#allocation7 + $0x140] sm:$0xff]
    %v2007 = vld [vmem:[#allocation7 + $0x148] sm:$0xff]
    %v2008 = vld [vmem:[#allocation7 + $0x150] sm:$0xff]
    %v2009 = vld [vmem:[#allocation7 + $0x158] sm:$0xff]
    %v2010 = vld [vmem:[#allocation7 + $0x160] sm:$0xff]
    %v2011 = vld [vmem:[#allocation7 + $0x168] sm:$0xff]
    %v2012 = vld [vmem:[#allocation7 + $0x170] sm:$0xff]
    %v2013 = vld [vmem:[#allocation7 + $0x178] sm:$0xff]
    %v2014 = vld [vmem:[#allocation7 + $0x180] sm:$0xff]
    %v2015 = vld [vmem:[#allocation7 + $0x188] sm:$0xff]
    %v2016 = vld [vmem:[#allocation7 + $0x190] sm:$0xff]
    %v2017 = vld [vmem:[#allocation7 + $0x198] sm:$0xff]
    %v2018 = vld [vmem:[#allocation7 + $0x1a0] sm:$0xff]
    %v2019 = vld [vmem:[#allocation7 + $0x1a8] sm:$0xff]
    %v2020 = vld [vmem:[#allocation7 + $0x1b0] sm:$0xff]
    %v2021 = vld [vmem:[#allocation7 + $0x1b8] sm:$0xff]
    %v2022 = vld [vmem:[#allocation7 + $0x1c0] sm:$0xff]
    %v2023 = vld [vmem:[#allocation7 + $0x1c8] sm:$0xff]
    %v2024 = vld [vmem:[#allocation7 + $0x1d0] sm:$0xff]
    %v2025 = vld [vmem:[#allocation7 + $0x1d8] sm:$0xff]
    %v2026 = vld [vmem:[#allocation7 + $0x1e0] sm:$0xff]
    %v2027 = vld [vmem:[#allocation7 + $0x1e8] sm:$0xff]
    %v2028 = vld [vmem:[#allocation7 + $0x1f0] sm:$0xff]
    %v2029 = vld [vmem:[#allocation7 + $0x1f8] sm:$0xff]
    %v2030 = vld [vmem:[%s11] sm:$0x3]
    %v2032 = vlaneseq
    %v2033 = vshrl.u32 %v2032, 7
    %v2034 = vsub.s32 0, %v2033
    %v2035 = vrot.slane %v2030, %v2034
    %v2036 = vlaneseq
    %v2037 = vshrl.u32 %v2036, 7
    %v2038 = vsub.s32 1, %v2037
    %v2039 = vrot.slane %v2030, %v2038
    %v2106 = vunpack.c.l.b16 %v1966
    %v2107 = vunpack.c.h.b16 %v1966
    %v2108 = vunpack.c.l.b16 %v1967
    %v2109 = vunpack.c.h.b16 %v1967
    %v2110 = vunpack.c.l.b16 %v1968
    %v2111 = vunpack.c.h.b16 %v1968
    %v2112 = vunpack.c.l.b16 %v1969
    %v2113 = vunpack.c.h.b16 %v1969
    %v2114 = vunpack.c.l.b16 %v1970
    %v2115 = vunpack.c.h.b16 %v1970
    %v2116 = vunpack.c.l.b16 %v1971
    %v2117 = vunpack.c.h.b16 %v1971
    %v2118 = vunpack.c.l.b16 %v1972
    %v2119 = vunpack.c.h.b16 %v1972
    %v2120 = vunpack.c.l.b16 %v1973
    %v2121 = vunpack.c.h.b16 %v1973
    %v2122 = vunpack.c.l.b16 %v1974
    %v2123 = vunpack.c.h.b16 %v1974
    %v2124 = vunpack.c.l.b16 %v1975
    %v2125 = vunpack.c.h.b16 %v1975
    %v2126 = vunpack.c.l.b16 %v1976
    %v2127 = vunpack.c.h.b16 %v1976
    %v2128 = vunpack.c.l.b16 %v1977
    %v2129 = vunpack.c.h.b16 %v1977
    %v2130 = vunpack.c.l.b16 %v1978
    %v2131 = vunpack.c.h.b16 %v1978
    %v2132 = vunpack.c.l.b16 %v1979
    %v2133 = vunpack.c.h.b16 %v1979
    %v2134 = vunpack.c.l.b16 %v1980
    %v2135 = vunpack.c.h.b16 %v1980
    %v2136 = vunpack.c.l.b16 %v1981
    %v2137 = vunpack.c.h.b16 %v1981
    %v2138 = vunpack.c.l.b16 %v1982
    %v2139 = vunpack.c.h.b16 %v1982
    %v2140 = vunpack.c.l.b16 %v1983
    %v2141 = vunpack.c.h.b16 %v1983
    %v2142 = vunpack.c.l.b16 %v1984
    %v2143 = vunpack.c.h.b16 %v1984
    %v2144 = vunpack.c.l.b16 %v1985
    %v2145 = vunpack.c.h.b16 %v1985
    %v2146 = vunpack.c.l.b16 %v1986
    %v2147 = vunpack.c.h.b16 %v1986
    %v2148 = vunpack.c.l.b16 %v1987
    %v2149 = vunpack.c.h.b16 %v1987
    %v2150 = vunpack.c.l.b16 %v1988
    %v2151 = vunpack.c.h.b16 %v1988
    %v2152 = vunpack.c.l.b16 %v1989
    %v2153 = vunpack.c.h.b16 %v1989
    %v2154 = vunpack.c.l.b16 %v1990
    %v2155 = vunpack.c.h.b16 %v1990
    %v2156 = vunpack.c.l.b16 %v1991
    %v2157 = vunpack.c.h.b16 %v1991
    %v2158 = vunpack.c.l.b16 %v1992
    %v2159 = vunpack.c.h.b16 %v1992
    %v2160 = vunpack.c.l.b16 %v1993
    %v2161 = vunpack.c.h.b16 %v1993
    %v2162 = vunpack.c.l.b16 %v1994
    %v2163 = vunpack.c.h.b16 %v1994
    %v2164 = vunpack.c.l.b16 %v1995
    %v2165 = vunpack.c.h.b16 %v1995
    %v2166 = vunpack.c.l.b16 %v1996
    %v2167 = vunpack.c.h.b16 %v1996
    %v2168 = vunpack.c.l.b16 %v1997
    %v2169 = vunpack.c.h.b16 %v1997
    %v2170 = vunpack.c.l.b16 %v1998
    %v2171 = vunpack.c.h.b16 %v1998
    %v2172 = vunpack.c.l.b16 %v1999
    %v2173 = vunpack.c.h.b16 %v1999
    %v2174 = vunpack.c.l.b16 %v2000
    %v2175 = vunpack.c.h.b16 %v2000
    %v2176 = vunpack.c.l.b16 %v2001
    %v2177 = vunpack.c.h.b16 %v2001
    %v2178 = vunpack.c.l.b16 %v2002
    %v2179 = vunpack.c.h.b16 %v2002
    %v2180 = vunpack.c.l.b16 %v2003
    %v2181 = vunpack.c.h.b16 %v2003
    %v2182 = vunpack.c.l.b16 %v2004
    %v2183 = vunpack.c.h.b16 %v2004
    %v2184 = vunpack.c.l.b16 %v2005
    %v2185 = vunpack.c.h.b16 %v2005
    %v2186 = vunpack.c.l.b16 %v2006
    %v2187 = vunpack.c.h.b16 %v2006
    %v2188 = vunpack.c.l.b16 %v2007
    %v2189 = vunpack.c.h.b16 %v2007
    %v2190 = vunpack.c.l.b16 %v2008
    %v2191 = vunpack.c.h.b16 %v2008
    %v2192 = vunpack.c.l.b16 %v2009
    %v2193 = vunpack.c.h.b16 %v2009
    %v2194 = vunpack.c.l.b16 %v2010
    %v2195 = vunpack.c.h.b16 %v2010
    %v2196 = vunpack.c.l.b16 %v2011
    %v2197 = vunpack.c.h.b16 %v2011
    %v2198 = vunpack.c.l.b16 %v2012
    %v2199 = vunpack.c.h.b16 %v2012
    %v2200 = vunpack.c.l.b16 %v2013
    %v2201 = vunpack.c.h.b16 %v2013
    %v2202 = vunpack.c.l.b16 %v2014
    %v2203 = vunpack.c.h.b16 %v2014
    %v2204 = vunpack.c.l.b16 %v2015
    %v2205 = vunpack.c.h.b16 %v2015
    %v2206 = vunpack.c.l.b16 %v2016
    %v2207 = vunpack.c.h.b16 %v2016
    %v2208 = vunpack.c.l.b16 %v2017
    %v2209 = vunpack.c.h.b16 %v2017
    %v2210 = vunpack.c.l.b16 %v2018
    %v2211 = vunpack.c.h.b16 %v2018
    %v2212 = vunpack.c.l.b16 %v2019
    %v2213 = vunpack.c.h.b16 %v2019
    %v2214 = vunpack.c.l.b16 %v2020
    %v2215 = vunpack.c.h.b16 %v2020
    %v2216 = vunpack.c.l.b16 %v2021
    %v2217 = vunpack.c.h.b16 %v2021
    %v2218 = vunpack.c.l.b16 %v2022
    %v2219 = vunpack.c.h.b16 %v2022
    %v2220 = vunpack.c.l.b16 %v2023
    %v2221 = vunpack.c.h.b16 %v2023
    %v2222 = vunpack.c.l.b16 %v2024
    %v2223 = vunpack.c.h.b16 %v2024
    %v2224 = vunpack.c.l.b16 %v2025
    %v2225 = vunpack.c.h.b16 %v2025
    %v2226 = vunpack.c.l.b16 %v2026
    %v2227 = vunpack.c.h.b16 %v2026
    %v2228 = vunpack.c.l.b16 %v2027
    %v2229 = vunpack.c.h.b16 %v2027
    %v2230 = vunpack.c.l.b16 %v2028
    %v2231 = vunpack.c.h.b16 %v2028
    %v2232 = vunpack.c.l.b16 %v2029
    %v2233 = vunpack.c.h.b16 %v2029
    %v2234 = vpack.c.b16 %v2108, %v2106
    %v2235 = vpack.c.b16 %v2109, %v2107
    %v2236 = vpack.c.b16 %v2112, %v2110
    %v2237 = vpack.c.b16 %v2113, %v2111
    %v2238 = vpack.c.b16 %v2116, %v2114
    %v2239 = vpack.c.b16 %v2117, %v2115
    %v2240 = vpack.c.b16 %v2120, %v2118
    %v2241 = vpack.c.b16 %v2121, %v2119
    %v2242 = vpack.c.b16 %v2124, %v2122
    %v2243 = vpack.c.b16 %v2125, %v2123
    %v2244 = vpack.c.b16 %v2128, %v2126
    %v2245 = vpack.c.b16 %v2129, %v2127
    %v2246 = vpack.c.b16 %v2132, %v2130
    %v2247 = vpack.c.b16 %v2133, %v2131
    %v2248 = vpack.c.b16 %v2136, %v2134
    %v2249 = vpack.c.b16 %v2137, %v2135
    %v2250 = vpack.c.b16 %v2140, %v2138
    %v2251 = vpack.c.b16 %v2141, %v2139
    %v2252 = vpack.c.b16 %v2144, %v2142
    %v2253 = vpack.c.b16 %v2145, %v2143
    %v2254 = vpack.c.b16 %v2148, %v2146
    %v2255 = vpack.c.b16 %v2149, %v2147
    %v2256 = vpack.c.b16 %v2152, %v2150
    %v2257 = vpack.c.b16 %v2153, %v2151
    %v2258 = vpack.c.b16 %v2156, %v2154
    %v2259 = vpack.c.b16 %v2157, %v2155
    %v2260 = vpack.c.b16 %v2160, %v2158
    %v2261 = vpack.c.b16 %v2161, %v2159
    %v2262 = vpack.c.b16 %v2164, %v2162
    %v2263 = vpack.c.b16 %v2165, %v2163
    %v2264 = vpack.c.b16 %v2168, %v2166
    %v2265 = vpack.c.b16 %v2169, %v2167
    %v2266 = vpack.c.b16 %v2172, %v2170
    %v2267 = vpack.c.b16 %v2173, %v2171
    %v2268 = vpack.c.b16 %v2176, %v2174
    %v2269 = vpack.c.b16 %v2177, %v2175
    %v2270 = vpack.c.b16 %v2180, %v2178
    %v2271 = vpack.c.b16 %v2181, %v2179
    %v2272 = vpack.c.b16 %v2184, %v2182
    %v2273 = vpack.c.b16 %v2185, %v2183
    %v2274 = vpack.c.b16 %v2188, %v2186
    %v2275 = vpack.c.b16 %v2189, %v2187
    %v2276 = vpack.c.b16 %v2192, %v2190
    %v2277 = vpack.c.b16 %v2193, %v2191
    %v2278 = vpack.c.b16 %v2196, %v2194
    %v2279 = vpack.c.b16 %v2197, %v2195
    %v2280 = vpack.c.b16 %v2200, %v2198
    %v2281 = vpack.c.b16 %v2201, %v2199
    %v2282 = vpack.c.b16 %v2204, %v2202
    %v2283 = vpack.c.b16 %v2205, %v2203
    %v2284 = vpack.c.b16 %v2208, %v2206
    %v2285 = vpack.c.b16 %v2209, %v2207
    %v2286 = vpack.c.b16 %v2212, %v2210
    %v2287 = vpack.c.b16 %v2213, %v2211
    %v2288 = vpack.c.b16 %v2216, %v2214
    %v2289 = vpack.c.b16 %v2217, %v2215
    %v2290 = vpack.c.b16 %v2220, %v2218
    %v2291 = vpack.c.b16 %v2221, %v2219
    %v2292 = vpack.c.b16 %v2224, %v2222
    %v2293 = vpack.c.b16 %v2225, %v2223
    %v2294 = vpack.c.b16 %v2228, %v2226
    %v2295 = vpack.c.b16 %v2229, %v2227
    %v2296 = vpack.c.b16 %v2232, %v2230
    %v2297 = vpack.c.b16 %v2233, %v2231
    %2362 = vmatprep.subr.bf16.mxu0 %v2235
    %2363 = vmatpush1.bf16.msra.mxu0 %v2234
    %2364 = vmatprep.subr.bf16.mxu0 %v2237
    %2365 = vmatpush1.bf16.msra.mxu0 %v2236
    %2366 = vmatprep.subr.bf16.mxu0 %v2239
    %2367 = vmatpush1.bf16.msra.mxu0 %v2238
    %2368 = vmatprep.subr.bf16.mxu0 %v2241
    %2369 = vmatpush1.bf16.msra.mxu0 %v2240
    %2370 = vmatprep.subr.bf16.mxu0 %v2243
    %2371 = vmatpush1.bf16.msra.mxu0 %v2242
    %2372 = vmatprep.subr.bf16.mxu0 %v2245
    %2373 = vmatpush1.bf16.msra.mxu0 %v2244
    %2374 = vmatprep.subr.bf16.mxu0 %v2247
    %2375 = vmatpush1.bf16.msra.mxu0 %v2246
    %2376 = vmatprep.subr.bf16.mxu0 %v2249
    %2377 = vmatpush1.bf16.msra.mxu0 %v2248
    %2378 = vmatprep.subr.bf16.mxu0 %v2251
    %2379 = vmatpush1.bf16.msra.mxu0 %v2250
    %2380 = vmatprep.subr.bf16.mxu0 %v2253
    %2381 = vmatpush1.bf16.msra.mxu0 %v2252
    %2382 = vmatprep.subr.bf16.mxu0 %v2255
    %2383 = vmatpush1.bf16.msra.mxu0 %v2254
    %2384 = vmatprep.subr.bf16.mxu0 %v2257
    %2385 = vmatpush1.bf16.msra.mxu0 %v2256
    %2386 = vmatprep.subr.bf16.mxu0 %v2259
    %2387 = vmatpush1.bf16.msra.mxu0 %v2258
    %2388 = vmatprep.subr.bf16.mxu0 %v2261
    %2389 = vmatpush1.bf16.msra.mxu0 %v2260
    %2390 = vmatprep.subr.bf16.mxu0 %v2263
    %2391 = vmatpush1.bf16.msra.mxu0 %v2262
    %2392 = vmatprep.subr.bf16.mxu0 %v2265
    %2393 = vmatpush1.bf16.msra.mxu0 %v2264
    %2394 = vmatprep.mubr.bf16.mxu0 %v1963
    %2395 = vmatmul.mubr.bf16.gmra.mrb[0].mxu0 %v1962
    %v2396 = vpop.f32.mrb[0].mxu0
    %v2397 = vadd.f32 %v2035, %v2396
    %v2398 = vpop.f32.mrb[0].mxu0
    %v2399 = vadd.f32 %v2039, %v2398
    %v2400 = vpop.f32.mrb[0].mxu0
    %v2401 = vadd.f32 %v2035, %v2400
    %v2402 = vpop.f32.mrb[0].mxu0
    %v2403 = vadd.f32 %v2039, %v2402
    %2404 = vdwg.mxu0
    %2405 = vmatprep.subr.bf16.mxu0 %v2267
    %2406 = vmatpush1.bf16.msra.mxu0 %v2266
    %2407 = vmatprep.subr.bf16.mxu0 %v2269
    %2408 = vmatpush1.bf16.msra.mxu0 %v2268
    %2409 = vmatprep.subr.bf16.mxu0 %v2271
    %2410 = vmatpush1.bf16.msra.mxu0 %v2270
    %2411 = vmatprep.subr.bf16.mxu0 %v2273
    %2412 = vmatpush1.bf16.msra.mxu0 %v2272
    %2413 = vmatprep.subr.bf16.mxu0 %v2275
    %2414 = vmatpush1.bf16.msra.mxu0 %v2274
    %2415 = vmatprep.subr.bf16.mxu0 %v2277
    %2416 = vmatpush1.bf16.msra.mxu0 %v2276
    %2417 = vmatprep.subr.bf16.mxu0 %v2279
    %2418 = vmatpush1.bf16.msra.mxu0 %v2278
    %2419 = vmatprep.subr.bf16.mxu0 %v2281
    %2420 = vmatpush1.bf16.msra.mxu0 %v2280
    %2421 = vmatprep.subr.bf16.mxu0 %v2283
    %2422 = vmatpush1.bf16.msra.mxu0 %v2282
    %2423 = vmatprep.subr.bf16.mxu0 %v2285
    %2424 = vmatpush1.bf16.msra.mxu0 %v2284
    %2425 = vmatprep.subr.bf16.mxu0 %v2287
    %2426 = vmatpush1.bf16.msra.mxu0 %v2286
    %2427 = vmatprep.subr.bf16.mxu0 %v2289
    %2428 = vmatpush1.bf16.msra.mxu0 %v2288
    %2429 = vmatprep.subr.bf16.mxu0 %v2291
    %2430 = vmatpush1.bf16.msra.mxu0 %v2290
    %2431 = vmatprep.subr.bf16.mxu0 %v2293
    %2432 = vmatpush1.bf16.msra.mxu0 %v2292
    %2433 = vmatprep.subr.bf16.mxu0 %v2295
    %2434 = vmatpush1.bf16.msra.mxu0 %v2294
    %2435 = vmatprep.subr.bf16.mxu0 %v2297
    %2436 = vmatpush1.bf16.msra.mxu0 %v2296
    %2437 = vmatprep.mubr.bf16.mxu0 %v1965
    %2438 = vmatmul.mubr.bf16.gmra.mrb[0].mxu0 %v1964
    %v2439 = vpop.f32.mrb[0].mxu0
    %v2440 = vadd.f32 %v2397, %v2439
    %v2441 = vpop.f32.mrb[0].mxu0
    %v2442 = vadd.f32 %v2399, %v2441
    %v2443 = vpop.f32.mrb[0].mxu0
    %v2444 = vadd.f32 %v2401, %v2443
    %v2445 = vpop.f32.mrb[0].mxu0
    %v2446 = vadd.f32 %v2403, %v2445
    %2447 = vdwg.mxu0
    %v2448 = vmax.f32 %v2440, 0.0
    %v2449 = vmax.f32 %v2442, 0.0
    %v2450 = vmax.f32 %v2444, 0.0
    %v2451 = vmax.f32 %v2446, 0.0
    %v2452 = vpack.c.bf16 %v2450, %v2448
    %v2453 = vpack.c.bf16 %v2451, %v2449
    %v2454 = vld [vmem:[#allocation8] sm:$0xf]
    %v2455 = vld [vmem:[#allocation8 + $0x4] sm:$0xf]
    %v2456 = vld [vmem:[#allocation8 + $0x8] sm:$0xf]
    %v2457 = vld [vmem:[#allocation8 + $0xc] sm:$0xf]
    %v2458 = vld [vmem:[#allocation8 + $0x10] sm:$0xf]
    %v2459 = vld [vmem:[#allocation8 + $0x14] sm:$0xf]
    %v2460 = vld [vmem:[#allocation8 + $0x18] sm:$0xf]
    %v2461 = vld [vmem:[#allocation8 + $0x1c] sm:$0xf]
    %v2462 = vld [vmem:[#allocation8 + $0x20] sm:$0xf]
    %v2463 = vld [vmem:[#allocation8 + $0x24] sm:$0xf]
    %v2464 = vld [vmem:[#allocation8 + $0x28] sm:$0xf]
    %v2465 = vld [vmem:[#allocation8 + $0x2c] sm:$0xf]
    %v2466 = vld [vmem:[#allocation8 + $0x30] sm:$0xf]
    %v2467 = vld [vmem:[#allocation8 + $0x34] sm:$0xf]
    %v2468 = vld [vmem:[#allocation8 + $0x38] sm:$0xf]
    %v2469 = vld [vmem:[#allocation8 + $0x3c] sm:$0xf]
    %v2470 = vld [vmem:[#allocation8 + $0x40] sm:$0xf]
    %v2471 = vld [vmem:[#allocation8 + $0x44] sm:$0xf]
    %v2472 = vld [vmem:[#allocation8 + $0x48] sm:$0xf]
    %v2473 = vld [vmem:[#allocation8 + $0x4c] sm:$0xf]
    %v2474 = vld [vmem:[#allocation8 + $0x50] sm:$0xf]
    %v2475 = vld [vmem:[#allocation8 + $0x54] sm:$0xf]
    %v2476 = vld [vmem:[#allocation8 + $0x58] sm:$0xf]
    %v2477 = vld [vmem:[#allocation8 + $0x5c] sm:$0xf]
    %v2478 = vld [vmem:[#allocation8 + $0x60] sm:$0xf]
    %v2479 = vld [vmem:[#allocation8 + $0x64] sm:$0xf]
    %v2480 = vld [vmem:[#allocation8 + $0x68] sm:$0xf]
    %v2481 = vld [vmem:[#allocation8 + $0x6c] sm:$0xf]
    %v2482 = vld [vmem:[#allocation8 + $0x70] sm:$0xf]
    %v2483 = vld [vmem:[#allocation8 + $0x74] sm:$0xf]
    %v2484 = vld [vmem:[#allocation8 + $0x78] sm:$0xf]
    %v2485 = vld [vmem:[#allocation8 + $0x7c] sm:$0xf]
    %v2486 = vld [vmem:[%s12] sm:$0x1]
    %v2488 = vlaneseq
    %v2489 = vshrl.u32 %v2488, 7
    %v2490 = vsub.s32 0, %v2489
    %v2491 = vrot.slane %v2486, %v2490
    %v2525 = vunpack.c.l.b16 %v2454
    %v2526 = vunpack.c.l.b16 %v2455
    %v2527 = vunpack.c.l.b16 %v2456
    %v2528 = vunpack.c.l.b16 %v2457
    %v2529 = vunpack.c.l.b16 %v2458
    %v2530 = vunpack.c.l.b16 %v2459
    %v2531 = vunpack.c.l.b16 %v2460
    %v2532 = vunpack.c.l.b16 %v2461
    %v2533 = vunpack.c.l.b16 %v2462
    %v2534 = vunpack.c.l.b16 %v2463
    %v2535 = vunpack.c.l.b16 %v2464
    %v2536 = vunpack.c.l.b16 %v2465
    %v2537 = vunpack.c.l.b16 %v2466
    %v2538 = vunpack.c.l.b16 %v2467
    %v2539 = vunpack.c.l.b16 %v2468
    %v2540 = vunpack.c.l.b16 %v2469
    %v2541 = vunpack.c.l.b16 %v2470
    %v2542 = vunpack.c.l.b16 %v2471
    %v2543 = vunpack.c.l.b16 %v2472
    %v2544 = vunpack.c.l.b16 %v2473
    %v2545 = vunpack.c.l.b16 %v2474
    %v2546 = vunpack.c.l.b16 %v2475
    %v2547 = vunpack.c.l.b16 %v2476
    %v2548 = vunpack.c.l.b16 %v2477
    %v2549 = vunpack.c.l.b16 %v2478
    %v2550 = vunpack.c.l.b16 %v2479
    %v2551 = vunpack.c.l.b16 %v2480
    %v2552 = vunpack.c.l.b16 %v2481
    %v2553 = vunpack.c.l.b16 %v2482
    %v2554 = vunpack.c.l.b16 %v2483
    %v2555 = vunpack.c.l.b16 %v2484
    %v2556 = vunpack.c.l.b16 %v2485
    %v2557 = vpack.c.b16 %v2526, %v2525
    %v2558 = vpack.c.b16 %v2528, %v2527
    %v2559 = vpack.c.b16 %v2530, %v2529
    %v2560 = vpack.c.b16 %v2532, %v2531
    %v2561 = vpack.c.b16 %v2534, %v2533
    %v2562 = vpack.c.b16 %v2536, %v2535
    %v2563 = vpack.c.b16 %v2538, %v2537
    %v2564 = vpack.c.b16 %v2540, %v2539
    %v2565 = vpack.c.b16 %v2542, %v2541
    %v2566 = vpack.c.b16 %v2544, %v2543
    %v2567 = vpack.c.b16 %v2546, %v2545
    %v2568 = vpack.c.b16 %v2548, %v2547
    %v2569 = vpack.c.b16 %v2550, %v2549
    %v2570 = vpack.c.b16 %v2552, %v2551
    %v2571 = vpack.c.b16 %v2554, %v2553
    %v2572 = vpack.c.b16 %v2556, %v2555
    %2589 = vmatprep.subr.bf16.mxu0 0
    %2590 = vmatpush1.bf16.msra.mxu0 %v2557
    %2591 = vmatprep.subr.bf16.mxu0 0
    %2592 = vmatpush1.bf16.msra.mxu0 %v2558
    %2593 = vmatprep.subr.bf16.mxu0 0
    %2594 = vmatpush1.bf16.msra.mxu0 %v2559
    %2595 = vmatprep.subr.bf16.mxu0 0
    %2596 = vmatpush1.bf16.msra.mxu0 %v2560
    %2597 = vmatprep.subr.bf16.mxu0 0
    %2598 = vmatpush1.bf16.msra.mxu0 %v2561
    %2599 = vmatprep.subr.bf16.mxu0 0
    %2600 = vmatpush1.bf16.msra.mxu0 %v2562
    %2601 = vmatprep.subr.bf16.mxu0 0
    %2602 = vmatpush1.bf16.msra.mxu0 %v2563
    %2603 = vmatprep.subr.bf16.mxu0 0
    %2604 = vmatpush1.bf16.msra.mxu0 %v2564
    %2605 = vmatprep.subr.bf16.mxu0 0
    %2606 = vmatpush1.bf16.msra.mxu0 %v2565
    %2607 = vmatprep.subr.bf16.mxu0 0
    %2608 = vmatpush1.bf16.msra.mxu0 %v2566
    %2609 = vmatprep.subr.bf16.mxu0 0
    %2610 = vmatpush1.bf16.msra.mxu0 %v2567
    %2611 = vmatprep.subr.bf16.mxu0 0
    %2612 = vmatpush1.bf16.msra.mxu0 %v2568
    %2613 = vmatprep.subr.bf16.mxu0 0
    %2614 = vmatpush1.bf16.msra.mxu0 %v2569
    %2615 = vmatprep.subr.bf16.mxu0 0
    %2616 = vmatpush1.bf16.msra.mxu0 %v2570
    %2617 = vmatprep.subr.bf16.mxu0 0
    %2618 = vmatpush1.bf16.msra.mxu0 %v2571
    %2619 = vmatprep.subr.bf16.mxu0 0
    %2620 = vmatpush1.bf16.msra.mxu0 %v2572
    %2621 = vmatprep.mubr.bf16.mxu0 %v2453
    %2622 = vmatmul.mubr.bf16.gmra.mrb[0].mxu0 %v2452
    %v2623 = vpop.f32.mrb[0].mxu0
    %v2624 = vadd.f32 %v2491, %v2623
    %v2625 = vpop.f32.mrb[0].mxu0
    %v2626 = vpop.f32.mrb[0].mxu0
    %v2627 = vadd.f32 %v2491, %v2626
    %v2628 = vpop.f32.mrb[0].mxu0
    %2629 = vdwg.mxu0
    %v2630 = vmax.f32 %v2624, 0.0
    %v2631 = vmax.f32 %v2627, 0.0
    %v2632 = vpack.c.bf16 %v2631, %v2630
    %v2633 = vld [vmem:[#allocation10] sm:$0xf]
    %v2634 = vld [vmem:[#allocation10 + $0x4] sm:$0xf]
    %v2635 = vld [vmem:[#allocation10 + $0x8] sm:$0xf]
    %v2636 = vld [vmem:[#allocation10 + $0xc] sm:$0xf]
    %v2637 = vld [vmem:[#allocation10 + $0x10] sm:$0xf]
    %v2638 = vld [vmem:[#allocation10 + $0x14] sm:$0xf]
    %v2639 = vld [vmem:[#allocation10 + $0x18] sm:$0xf]
    %v2640 = vld [vmem:[#allocation10 + $0x1c] sm:$0xf]
    %v2641 = vld [vmem:[#allocation10 + $0x20] sm:$0xf]
    %v2642 = vld [vmem:[#allocation10 + $0x24] sm:$0xf]
    %v2643 = vld [vmem:[#allocation10 + $0x28] sm:$0xf]
    %v2644 = vld [vmem:[#allocation10 + $0x2c] sm:$0xf]
    %v2645 = vld [vmem:[#allocation10 + $0x30] sm:$0xf]
    %v2646 = vld [vmem:[#allocation10 + $0x34] sm:$0xf]
    %v2647 = vld [vmem:[#allocation10 + $0x38] sm:$0xf]
    %v2648 = vld [vmem:[#allocation10 + $0x3c] sm:$0xf]
    %v2649 = vld [vmem:[%s13] sm:$0x1]
    %v2651 = vlaneseq
    %v2652 = vshrl.u32 %v2651, 7
    %v2653 = vsub.s32 0, %v2652
    %v2654 = vrot.slane %v2649, %v2653
    %v2672 = vunpack.c.l.b16 %v2633
    %v2673 = vunpack.c.l.b16 %v2634
    %v2674 = vunpack.c.l.b16 %v2635
    %v2675 = vunpack.c.l.b16 %v2636
    %v2676 = vunpack.c.l.b16 %v2637
    %v2677 = vunpack.c.l.b16 %v2638
    %v2678 = vunpack.c.l.b16 %v2639
    %v2679 = vunpack.c.l.b16 %v2640
    %v2680 = vunpack.c.l.b16 %v2641
    %v2681 = vunpack.c.l.b16 %v2642
    %v2682 = vunpack.c.l.b16 %v2643
    %v2683 = vunpack.c.l.b16 %v2644
    %v2684 = vunpack.c.l.b16 %v2645
    %v2685 = vunpack.c.l.b16 %v2646
    %v2686 = vunpack.c.l.b16 %v2647
    %v2687 = vunpack.c.l.b16 %v2648
    %v2688 = vpack.c.b16 %v2673, %v2672
    %v2689 = vpack.c.b16 %v2675, %v2674
    %v2690 = vpack.c.b16 %v2677, %v2676
    %v2691 = vpack.c.b16 %v2679, %v2678
    %v2692 = vpack.c.b16 %v2681, %v2680
    %v2693 = vpack.c.b16 %v2683, %v2682
    %v2694 = vpack.c.b16 %v2685, %v2684
    %v2695 = vpack.c.b16 %v2687, %v2686
    %2704 = vmatprep.subr.bf16.mxu0 0
    %2705 = vmatpush1.bf16.msra.mxu0 %v2688
    %2706 = vmatprep.subr.bf16.mxu0 0
    %2707 = vmatpush1.bf16.msra.mxu0 %v2689
    %2708 = vmatprep.subr.bf16.mxu0 0
    %2709 = vmatpush1.bf16.msra.mxu0 %v2690
    %2710 = vmatprep.subr.bf16.mxu0 0
    %2711 = vmatpush1.bf16.msra.mxu0 %v2691
    %2712 = vmatprep.subr.bf16.mxu0 0
    %2713 = vmatpush1.bf16.msra.mxu0 %v2692
    %2714 = vmatprep.subr.bf16.mxu0 0
    %2715 = vmatpush1.bf16.msra.mxu0 %v2693
    %2716 = vmatprep.subr.bf16.mxu0 0
    %2717 = vmatpush1.bf16.msra.mxu0 %v2694
    %2718 = vmatprep.subr.bf16.mxu0 0
    %2719 = vmatpush1.bf16.msra.mxu0 %v2695
    %2720 = vmatprep.subr.bf16.mxu0 0
    %2721 = vmatpush1.bf16.msra.mxu0 0
    %2722 = vmatprep.subr.bf16.mxu0 0
    %2723 = vmatpush1.bf16.msra.mxu0 0
    %2724 = vmatprep.subr.bf16.mxu0 0
    %2725 = vmatpush1.bf16.msra.mxu0 0
    %2726 = vmatprep.subr.bf16.mxu0 0
    %2727 = vmatpush1.bf16.msra.mxu0 0
    %2728 = vmatprep.subr.bf16.mxu0 0
    %2729 = vmatpush1.bf16.msra.mxu0 0
    %2730 = vmatprep.subr.bf16.mxu0 0
    %2731 = vmatpush1.bf16.msra.mxu0 0
    %2732 = vmatprep.subr.bf16.mxu0 0
    %2733 = vmatpush1.bf16.msra.mxu0 0
    %2734 = vmatprep.subr.bf16.mxu0 0
    %2735 = vmatpush1.bf16.msra.mxu0 0
    %2736 = vmatprep.mubr.bf16.mxu0 0
    %2737 = vmatmul.mubr.bf16.gmra.mrb[0].mxu0 %v2632
    %v2738 = vpop.f32.mrb[0].mxu0
    %v2739 = vadd.f32 %v2654, %v2738
    %v2740 = vpop.f32.mrb[0].mxu0
    %v2741 = vpop.f32.mrb[0].mxu0
    %v2742 = vadd.f32 %v2654, %v2741
    %v2743 = vpop.f32.mrb[0].mxu0
    %2744 = vdwg.mxu0
    %v2745 = vmax.f32 %v2739, 0.0
    %v2746 = vmax.f32 %v2742, 0.0
    %v2747 = vpack.c.bf16 %v2746, %v2745
    %v2748 = vld [vmem:[#allocation11] sm:$0xf]
    %v2749 = vld [vmem:[#allocation11 + $0x4] sm:$0xf]
    %v2750 = vld [vmem:[#allocation11 + $0x8] sm:$0xf]
    %v2751 = vld [vmem:[#allocation11 + $0xc] sm:$0xf]
    %v2752 = vld [vmem:[#allocation11 + $0x10] sm:$0xf]
    %v2753 = vld [vmem:[#allocation11 + $0x14] sm:$0xf]
    %v2754 = vld [vmem:[#allocation11 + $0x18] sm:$0xf]
    %v2755 = vld [vmem:[#allocation11 + $0x1c] sm:$0xf]
    %v2756 = vld [vmem:[#allocation11 + $0x20] sm:$0xf]
    %v2757 = vld [vmem:[#allocation11 + $0x24] sm:$0xf]
    %v2758 = vld [vmem:[#allocation11 + $0x28] sm:$0xf]
    %v2759 = vld [vmem:[#allocation11 + $0x2c] sm:$0xf]
    %v2760 = vld [vmem:[#allocation11 + $0x30] sm:$0xf]
    %v2761 = vld [vmem:[#allocation11 + $0x34] sm:$0xf]
    %v2762 = vld [vmem:[#allocation11 + $0x38] sm:$0xf]
    %v2763 = vld [vmem:[#allocation11 + $0x3c] sm:$0xf]
    %v2764 = vld [vmem:[%s14] sm:$0x1]
    %v2766 = vlaneseq
    %v2767 = vshrl.u32 %v2766, 7
    %v2768 = vsub.s32 0, %v2767
    %v2769 = vrot.slane %v2764, %v2768
    %v2787 = vunpack.c.l.b16 %v2748
    %v2788 = vunpack.c.l.b16 %v2749
    %v2789 = vunpack.c.l.b16 %v2750
    %v2790 = vunpack.c.l.b16 %v2751
    %v2791 = vunpack.c.l.b16 %v2752
    %v2792 = vunpack.c.l.b16 %v2753
    %v2793 = vunpack.c.l.b16 %v2754
    %v2794 = vunpack.c.l.b16 %v2755
    %v2795 = vunpack.c.l.b16 %v2756
    %v2796 = vunpack.c.l.b16 %v2757
    %v2797 = vunpack.c.l.b16 %v2758
    %v2798 = vunpack.c.l.b16 %v2759
    %v2799 = vunpack.c.l.b16 %v2760
    %v2800 = vunpack.c.l.b16 %v2761
    %v2801 = vunpack.c.l.b16 %v2762
    %v2802 = vunpack.c.l.b16 %v2763
    %v2803 = vpack.c.b16 %v2788, %v2787
    %v2804 = vpack.c.b16 %v2790, %v2789
    %v2805 = vpack.c.b16 %v2792, %v2791
    %v2806 = vpack.c.b16 %v2794, %v2793
    %v2807 = vpack.c.b16 %v2796, %v2795
    %v2808 = vpack.c.b16 %v2798, %v2797
    %v2809 = vpack.c.b16 %v2800, %v2799
    %v2810 = vpack.c.b16 %v2802, %v2801
    %2819 = vmatprep.subr.bf16.mxu0 0
    %2820 = vmatpush1.bf16.msra.mxu0 %v2803
    %2821 = vmatprep.subr.bf16.mxu0 0
    %2822 = vmatpush1.bf16.msra.mxu0 %v2804
    %2823 = vmatprep.subr.bf16.mxu0 0
    %2824 = vmatpush1.bf16.msra.mxu0 %v2805
    %2825 = vmatprep.subr.bf16.mxu0 0
    %2826 = vmatpush1.bf16.msra.mxu0 %v2806
    %2827 = vmatprep.subr.bf16.mxu0 0
    %2828 = vmatpush1.bf16.msra.mxu0 %v2807
    %2829 = vmatprep.subr.bf16.mxu0 0
    %2830 = vmatpush1.bf16.msra.mxu0 %v2808
    %2831 = vmatprep.subr.bf16.mxu0 0
    %2832 = vmatpush1.bf16.msra.mxu0 %v2809
    %2833 = vmatprep.subr.bf16.mxu0 0
    %2834 = vmatpush1.bf16.msra.mxu0 %v2810
    %2835 = vmatprep.subr.bf16.mxu0 0
    %2836 = vmatpush1.bf16.msra.mxu0 0
    %2837 = vmatprep.subr.bf16.mxu0 0
    %2838 = vmatpush1.bf16.msra.mxu0 0
    %2839 = vmatprep.subr.bf16.mxu0 0
    %2840 = vmatpush1.bf16.msra.mxu0 0
    %2841 = vmatprep.subr.bf16.mxu0 0
    %2842 = vmatpush1.bf16.msra.mxu0 0
    %2843 = vmatprep.subr.bf16.mxu0 0
    %2844 = vmatpush1.bf16.msra.mxu0 0
    %2845 = vmatprep.subr.bf16.mxu0 0
    %2846 = vmatpush1.bf16.msra.mxu0 0
    %2847 = vmatprep.subr.bf16.mxu0 0
    %2848 = vmatpush1.bf16.msra.mxu0 0
    %2849 = vmatprep.subr.bf16.mxu0 0
    %2850 = vmatpush1.bf16.msra.mxu0 0
    %2851 = vmatprep.mubr.bf16.mxu0 0
    %2852 = vmatmul.mubr.bf16.gmra.mrb[0].mxu0 %v2747
    %v2853 = vpop.f32.mrb[0].mxu0
    %v2854 = vadd.f32 %v2769, %v2853
    %v2855 = vpop.f32.mrb[0].mxu0
    %v2856 = vpop.f32.mrb[0].mxu0
    %v2857 = vadd.f32 %v2769, %v2856
    %v2858 = vpop.f32.mrb[0].mxu0
    %2859 = vdwg.mxu0
    %v2860 = vmax.f32 %v2854, 0.0
    %v2861 = vmax.f32 %v2857, 0.0
    %v2862 = vpack.c.bf16 %v2861, %v2860
    %v2863 = vld [vmem:[#allocation13] sm:$0xf]
    %v2864 = vld [vmem:[#allocation13 + $0x4] sm:$0xf]
    %v2865 = vld [vmem:[#allocation13 + $0x8] sm:$0xf]
    %v2866 = vld [vmem:[#allocation13 + $0xc] sm:$0xf]
    %v2867 = vld [vmem:[#allocation13 + $0x10] sm:$0xf]
    %v2868 = vld [vmem:[#allocation13 + $0x14] sm:$0xf]
    %v2869 = vld [vmem:[#allocation13 + $0x18] sm:$0xf]
    %v2870 = vld [vmem:[#allocation13 + $0x1c] sm:$0xf]
    %v2871 = vld [vmem:[#allocation13 + $0x20] sm:$0xf]
    %v2872 = vld [vmem:[#allocation13 + $0x24] sm:$0xf]
    %v2873 = vld [vmem:[#allocation13 + $0x28] sm:$0xf]
    %v2874 = vld [vmem:[#allocation13 + $0x2c] sm:$0xf]
    %v2875 = vld [vmem:[#allocation13 + $0x30] sm:$0xf]
    %v2876 = vld [vmem:[#allocation13 + $0x34] sm:$0xf]
    %v2877 = vld [vmem:[#allocation13 + $0x38] sm:$0xf]
    %v2878 = vld [vmem:[#allocation13 + $0x3c] sm:$0xf]
    %v2879 = vld [vmem:[%s15] sm:$0x1]
    %v2881 = vlaneseq
    %v2882 = vshrl.u32 %v2881, 7
    %v2883 = vsub.s32 0, %v2882
    %v2884 = vrot.slane %v2879, %v2883
    %v2902 = vunpack.c.l.b16 %v2863
    %v2903 = vunpack.c.l.b16 %v2864
    %v2904 = vunpack.c.l.b16 %v2865
    %v2905 = vunpack.c.l.b16 %v2866
    %v2906 = vunpack.c.l.b16 %v2867
    %v2907 = vunpack.c.l.b16 %v2868
    %v2908 = vunpack.c.l.b16 %v2869
    %v2909 = vunpack.c.l.b16 %v2870
    %v2910 = vunpack.c.l.b16 %v2871
    %v2911 = vunpack.c.l.b16 %v2872
    %v2912 = vunpack.c.l.b16 %v2873
    %v2913 = vunpack.c.l.b16 %v2874
    %v2914 = vunpack.c.l.b16 %v2875
    %v2915 = vunpack.c.l.b16 %v2876
    %v2916 = vunpack.c.l.b16 %v2877
    %v2917 = vunpack.c.l.b16 %v2878
    %v2918 = vpack.c.b16 %v2903, %v2902
    %v2919 = vpack.c.b16 %v2905, %v2904
    %v2920 = vpack.c.b16 %v2907, %v2906
    %v2921 = vpack.c.b16 %v2909, %v2908
    %v2922 = vpack.c.b16 %v2911, %v2910
    %v2923 = vpack.c.b16 %v2913, %v2912
    %v2924 = vpack.c.b16 %v2915, %v2914
    %v2925 = vpack.c.b16 %v2917, %v2916
    %2934 = vmatprep.subr.bf16.mxu0 0
    %2935 = vmatpush1.bf16.msra.mxu0 %v2918
    %2936 = vmatprep.subr.bf16.mxu0 0
    %2937 = vmatpush1.bf16.msra.mxu0 %v2919
    %2938 = vmatprep.subr.bf16.mxu0 0
    %2939 = vmatpush1.bf16.msra.mxu0 %v2920
    %2940 = vmatprep.subr.bf16.mxu0 0
    %2941 = vmatpush1.bf16.msra.mxu0 %v2921
    %2942 = vmatprep.subr.bf16.mxu0 0
    %2943 = vmatpush1.bf16.msra.mxu0 %v2922
    %2944 = vmatprep.subr.bf16.mxu0 0
    %2945 = vmatpush1.bf16.msra.mxu0 %v2923
    %2946 = vmatprep.subr.bf16.mxu0 0
    %2947 = vmatpush1.bf16.msra.mxu0 %v2924
    %2948 = vmatprep.subr.bf16.mxu0 0
    %2949 = vmatpush1.bf16.msra.mxu0 %v2925
    %2950 = vmatprep.subr.bf16.mxu0 0
    %2951 = vmatpush1.bf16.msra.mxu0 0
    %2952 = vmatprep.subr.bf16.mxu0 0
    %2953 = vmatpush1.bf16.msra.mxu0 0
    %2954 = vmatprep.subr.bf16.mxu0 0
    %2955 = vmatpush1.bf16.msra.mxu0 0
    %2956 = vmatprep.subr.bf16.mxu0 0
    %2957 = vmatpush1.bf16.msra.mxu0 0
    %2958 = vmatprep.subr.bf16.mxu0 0
    %2959 = vmatpush1.bf16.msra.mxu0 0
    %2960 = vmatprep.subr.bf16.mxu0 0
    %2961 = vmatpush1.bf16.msra.mxu0 0
    %2962 = vmatprep.subr.bf16.mxu0 0
    %2963 = vmatpush1.bf16.msra.mxu0 0
    %2964 = vmatprep.subr.bf16.mxu0 0
    %2965 = vmatpush1.bf16.msra.mxu0 0
    %2966 = vmatprep.mubr.bf16.mxu0 0
    %2967 = vmatmul.mubr.bf16.gmra.mrb[0].mxu0 %v2862
    %v2968 = vpop.f32.mrb[0].mxu0
    %v2969 = vadd.f32 %v2884, %v2968
    %v2970 = vpop.f32.mrb[0].mxu0
    %v2971 = vpop.f32.mrb[0].mxu0
    %v2972 = vadd.f32 %v2884, %v2971
    %v2973 = vpop.f32.mrb[0].mxu0
    %2974 = vdwg.mxu0
    %v2975 = vmax.f32 %v2969, 0.0
    %v2976 = vmax.f32 %v2972, 0.0
    %v2977 = vpack.c.bf16 %v2976, %v2975
    %v2978 = vld [vmem:[#allocation14] sm:$0xff]
    %v2979 = vld [vmem:[#allocation14 + $0x8] sm:$0xff]
    %v2980 = vld [vmem:[#allocation14 + $0x10] sm:$0xff]
    %v2981 = vld [vmem:[#allocation14 + $0x18] sm:$0xff]
    %v2982 = vld [vmem:[#allocation14 + $0x20] sm:$0xff]
    %v2983 = vld [vmem:[#allocation14 + $0x28] sm:$0xff]
    %v2984 = vld [vmem:[#allocation14 + $0x30] sm:$0xff]
    %v2985 = vld [vmem:[#allocation14 + $0x38] sm:$0xff]
    %v2986 = vld [vmem:[#allocation14 + $0x40] sm:$0xff]
    %v2987 = vld [vmem:[#allocation14 + $0x48] sm:$0xff]
    %v2988 = vld [vmem:[#allocation14 + $0x50] sm:$0xff]
    %v2989 = vld [vmem:[#allocation14 + $0x58] sm:$0xff]
    %v2990 = vld [vmem:[#allocation14 + $0x60] sm:$0xff]
    %v2991 = vld [vmem:[#allocation14 + $0x68] sm:$0xff]
    %v2992 = vld [vmem:[#allocation14 + $0x70] sm:$0xff]
    %v2993 = vld [vmem:[#allocation14 + $0x78] sm:$0xff]
    %v2994 = vld [vmem:[%s16] sm:$0x3]
    %v2996 = vlaneseq
    %v2997 = vshrl.u32 %v2996, 7
    %v2998 = vsub.s32 0, %v2997
    %v2999 = vrot.slane %v2994, %v2998
    %v3000 = vlaneseq
    %v3001 = vshrl.u32 %v3000, 7
    %v3002 = vsub.s32 1, %v3001
    %v3003 = vrot.slane %v2994, %v3002
    %v3022 = vunpack.c.l.b16 %v2978
    %v3023 = vunpack.c.h.b16 %v2978
    %v3024 = vunpack.c.l.b16 %v2979
    %v3025 = vunpack.c.h.b16 %v2979
    %v3026 = vunpack.c.l.b16 %v2980
    %v3027 = vunpack.c.h.b16 %v2980
    %v3028 = vunpack.c.l.b16 %v2981
    %v3029 = vunpack.c.h.b16 %v2981
    %v3030 = vunpack.c.l.b16 %v2982
    %v3031 = vunpack.c.h.b16 %v2982
    %v3032 = vunpack.c.l.b16 %v2983
    %v3033 = vunpack.c.h.b16 %v2983
    %v3034 = vunpack.c.l.b16 %v2984
    %v3035 = vunpack.c.h.b16 %v2984
    %v3036 = vunpack.c.l.b16 %v2985
    %v3037 = vunpack.c.h.b16 %v2985
    %v3038 = vunpack.c.l.b16 %v2986
    %v3039 = vunpack.c.h.b16 %v2986
    %v3040 = vunpack.c.l.b16 %v2987
    %v3041 = vunpack.c.h.b16 %v2987
    %v3042 = vunpack.c.l.b16 %v2988
    %v3043 = vunpack.c.h.b16 %v2988
    %v3044 = vunpack.c.l.b16 %v2989
    %v3045 = vunpack.c.h.b16 %v2989
    %v3046 = vunpack.c.l.b16 %v2990
    %v3047 = vunpack.c.h.b16 %v2990
    %v3048 = vunpack.c.l.b16 %v2991
    %v3049 = vunpack.c.h.b16 %v2991
    %v3050 = vunpack.c.l.b16 %v2992
    %v3051 = vunpack.c.h.b16 %v2992
    %v3052 = vunpack.c.l.b16 %v2993
    %v3053 = vunpack.c.h.b16 %v2993
    %v3054 = vpack.c.b16 %v3024, %v3022
    %v3055 = vpack.c.b16 %v3025, %v3023
    %v3056 = vpack.c.b16 %v3028, %v3026
    %v3057 = vpack.c.b16 %v3029, %v3027
    %v3058 = vpack.c.b16 %v3032, %v3030
    %v3059 = vpack.c.b16 %v3033, %v3031
    %v3060 = vpack.c.b16 %v3036, %v3034
    %v3061 = vpack.c.b16 %v3037, %v3035
    %v3062 = vpack.c.b16 %v3040, %v3038
    %v3063 = vpack.c.b16 %v3041, %v3039
    %v3064 = vpack.c.b16 %v3044, %v3042
    %v3065 = vpack.c.b16 %v3045, %v3043
    %v3066 = vpack.c.b16 %v3048, %v3046
    %v3067 = vpack.c.b16 %v3049, %v3047
    %v3068 = vpack.c.b16 %v3052, %v3050
    %v3069 = vpack.c.b16 %v3053, %v3051
    %3086 = vmatprep.subr.bf16.mxu0 %v3055
    %3087 = vmatpush1.bf16.msra.mxu0 %v3054
    %3088 = vmatprep.subr.bf16.mxu0 %v3057
    %3089 = vmatpush1.bf16.msra.mxu0 %v3056
    %3090 = vmatprep.subr.bf16.mxu0 %v3059
    %3091 = vmatpush1.bf16.msra.mxu0 %v3058
    %3092 = vmatprep.subr.bf16.mxu0 %v3061
    %3093 = vmatpush1.bf16.msra.mxu0 %v3060
    %3094 = vmatprep.subr.bf16.mxu0 %v3063
    %3095 = vmatpush1.bf16.msra.mxu0 %v3062
    %3096 = vmatprep.subr.bf16.mxu0 %v3065
    %3097 = vmatpush1.bf16.msra.mxu0 %v3064
    %3098 = vmatprep.subr.bf16.mxu0 %v3067
    %3099 = vmatpush1.bf16.msra.mxu0 %v3066
    %3100 = vmatprep.subr.bf16.mxu0 %v3069
    %3101 = vmatpush1.bf16.msra.mxu0 %v3068
    %3102 = vmatprep.subr.bf16.mxu0 0
    %3103 = vmatpush1.bf16.msra.mxu0 0
    %3104 = vmatprep.subr.bf16.mxu0 0
    %3105 = vmatpush1.bf16.msra.mxu0 0
    %3106 = vmatprep.subr.bf16.mxu0 0
    %3107 = vmatpush1.bf16.msra.mxu0 0
    %3108 = vmatprep.subr.bf16.mxu0 0
    %3109 = vmatpush1.bf16.msra.mxu0 0
    %3110 = vmatprep.subr.bf16.mxu0 0
    %3111 = vmatpush1.bf16.msra.mxu0 0
    %3112 = vmatprep.subr.bf16.mxu0 0
    %3113 = vmatpush1.bf16.msra.mxu0 0
    %3114 = vmatprep.subr.bf16.mxu0 0
    %3115 = vmatpush1.bf16.msra.mxu0 0
    %3116 = vmatprep.subr.bf16.mxu0 0
    %3117 = vmatpush1.bf16.msra.mxu0 0
    %3118 = vmatprep.mubr.bf16.mxu0 0
    %3119 = vmatmul.mubr.bf16.gmra.mrb[0].mxu0 %v2977
    %v3120 = vpop.f32.mrb[0].mxu0
    %v3121 = vadd.f32 %v2999, %v3120
    %v3122 = vpop.f32.mrb[0].mxu0
    %v3123 = vadd.f32 %v3003, %v3122
    %v3124 = vpop.f32.mrb[0].mxu0
    %v3125 = vadd.f32 %v2999, %v3124
    %v3126 = vpop.f32.mrb[0].mxu0
    %v3127 = vadd.f32 %v3003, %v3126
    %3128 = vdwg.mxu0
    %v3129 = vmax.f32 %v3121, 0.0
    %v3130 = vmax.f32 %v3123, 0.0
    %v3131 = vmax.f32 %v3125, 0.0
    %v3132 = vmax.f32 %v3127, 0.0
    %v3133 = vpack.c.bf16 %v3131, %v3129
    %v3134 = vpack.c.bf16 %v3132, %v3130
    %v3135 = vld [vmem:[#allocation16] sm:$0xff]
    %v3136 = vld [vmem:[#allocation16 + $0x8] sm:$0xff]
    %v3137 = vld [vmem:[#allocation16 + $0x10] sm:$0xff]
    %v3138 = vld [vmem:[#allocation16 + $0x18] sm:$0xff]
    %v3139 = vld [vmem:[#allocation16 + $0x20] sm:$0xff]
    %v3140 = vld [vmem:[#allocation16 + $0x28] sm:$0xff]
    %v3141 = vld [vmem:[#allocation16 + $0x30] sm:$0xff]
    %v3142 = vld [vmem:[#allocation16 + $0x38] sm:$0xff]
    %v3143 = vld [vmem:[#allocation16 + $0x40] sm:$0xff]
    %v3144 = vld [vmem:[#allocation16 + $0x48] sm:$0xff]
    %v3145 = vld [vmem:[#allocation16 + $0x50] sm:$0xff]
    %v3146 = vld [vmem:[#allocation16 + $0x58] sm:$0xff]
    %v3147 = vld [vmem:[#allocation16 + $0x60] sm:$0xff]
    %v3148 = vld [vmem:[#allocation16 + $0x68] sm:$0xff]
    %v3149 = vld [vmem:[#allocation16 + $0x70] sm:$0xff]
    %v3150 = vld [vmem:[#allocation16 + $0x78] sm:$0xff]
    %v3151 = vld [vmem:[#allocation16 + $0x80] sm:$0xff]
    %v3152 = vld [vmem:[#allocation16 + $0x88] sm:$0xff]
    %v3153 = vld [vmem:[#allocation16 + $0x90] sm:$0xff]
    %v3154 = vld [vmem:[#allocation16 + $0x98] sm:$0xff]
    %v3155 = vld [vmem:[#allocation16 + $0xa0] sm:$0xff]
    %v3156 = vld [vmem:[#allocation16 + $0xa8] sm:$0xff]
    %v3157 = vld [vmem:[#allocation16 + $0xb0] sm:$0xff]
    %v3158 = vld [vmem:[#allocation16 + $0xb8] sm:$0xff]
    %v3159 = vld [vmem:[#allocation16 + $0xc0] sm:$0xff]
    %v3160 = vld [vmem:[#allocation16 + $0xc8] sm:$0xff]
    %v3161 = vld [vmem:[#allocation16 + $0xd0] sm:$0xff]
    %v3162 = vld [vmem:[#allocation16 + $0xd8] sm:$0xff]
    %v3163 = vld [vmem:[#allocation16 + $0xe0] sm:$0xff]
    %v3164 = vld [vmem:[#allocation16 + $0xe8] sm:$0xff]
    %v3165 = vld [vmem:[#allocation16 + $0xf0] sm:$0xff]
    %v3166 = vld [vmem:[#allocation16 + $0xf8] sm:$0xff]
    %v3167 = vld [vmem:[#allocation16 + $0x100] sm:$0xff]
    %v3168 = vld [vmem:[#allocation16 + $0x108] sm:$0xff]
    %v3169 = vld [vmem:[#allocation16 + $0x110] sm:$0xff]
    %v3170 = vld [vmem:[#allocation16 + $0x118] sm:$0xff]
    %v3171 = vld [vmem:[#allocation16 + $0x120] sm:$0xff]
    %v3172 = vld [vmem:[#allocation16 + $0x128] sm:$0xff]
    %v3173 = vld [vmem:[#allocation16 + $0x130] sm:$0xff]
    %v3174 = vld [vmem:[#allocation16 + $0x138] sm:$0xff]
    %v3175 = vld [vmem:[#allocation16 + $0x140] sm:$0xff]
    %v3176 = vld [vmem:[#allocation16 + $0x148] sm:$0xff]
    %v3177 = vld [vmem:[#allocation16 + $0x150] sm:$0xff]
    %v3178 = vld [vmem:[#allocation16 + $0x158] sm:$0xff]
    %v3179 = vld [vmem:[#allocation16 + $0x160] sm:$0xff]
    %v3180 = vld [vmem:[#allocation16 + $0x168] sm:$0xff]
    %v3181 = vld [vmem:[#allocation16 + $0x170] sm:$0xff]
    %v3182 = vld [vmem:[#allocation16 + $0x178] sm:$0xff]
    %v3183 = vld [vmem:[#allocation16 + $0x180] sm:$0xff]
    %v3184 = vld [vmem:[#allocation16 + $0x188] sm:$0xff]
    %v3185 = vld [vmem:[#allocation16 + $0x190] sm:$0xff]
    %v3186 = vld [vmem:[#allocation16 + $0x198] sm:$0xff]
    %v3187 = vld [vmem:[#allocation16 + $0x1a0] sm:$0xff]
    %v3188 = vld [vmem:[#allocation16 + $0x1a8] sm:$0xff]
    %v3189 = vld [vmem:[#allocation16 + $0x1b0] sm:$0xff]
    %v3190 = vld [vmem:[#allocation16 + $0x1b8] sm:$0xff]
    %v3191 = vld [vmem:[#allocation16 + $0x1c0] sm:$0xff]
    %v3192 = vld [vmem:[#allocation16 + $0x1c8] sm:$0xff]
    %v3193 = vld [vmem:[#allocation16 + $0x1d0] sm:$0xff]
    %v3194 = vld [vmem:[#allocation16 + $0x1d8] sm:$0xff]
    %v3195 = vld [vmem:[#allocation16 + $0x1e0] sm:$0xff]
    %v3196 = vld [vmem:[#allocation16 + $0x1e8] sm:$0xff]
    %v3197 = vld [vmem:[#allocation16 + $0x1f0] sm:$0xff]
    %v3198 = vld [vmem:[#allocation16 + $0x1f8] sm:$0xff]
    %v3199 = vld [vmem:[%s17] sm:$0xf]
    %v3201 = vlaneseq
    %v3202 = vshrl.u32 %v3201, 7
    %v3203 = vsub.s32 0, %v3202
    %v3204 = vrot.slane %v3199, %v3203
    %v3205 = vlaneseq
    %v3206 = vshrl.u32 %v3205, 7
    %v3207 = vsub.s32 1, %v3206
    %v3208 = vrot.slane %v3199, %v3207
    %v3209 = vlaneseq
    %v3210 = vshrl.u32 %v3209, 7
    %v3211 = vsub.s32 2, %v3210
    %v3212 = vrot.slane %v3199, %v3211
    %v3213 = vlaneseq
    %v3214 = vshrl.u32 %v3213, 7
    %v3215 = vsub.s32 3, %v3214
    %v3216 = vrot.slane %v3199, %v3215
    %v3285 = vunpack.c.l.b16 %v3135
    %v3286 = vunpack.c.h.b16 %v3135
    %v3287 = vunpack.c.l.b16 %v3136
    %v3288 = vunpack.c.h.b16 %v3136
    %v3289 = vunpack.c.l.b16 %v3137
    %v3290 = vunpack.c.h.b16 %v3137
    %v3291 = vunpack.c.l.b16 %v3138
    %v3292 = vunpack.c.h.b16 %v3138
    %v3293 = vunpack.c.l.b16 %v3139
    %v3294 = vunpack.c.h.b16 %v3139
    %v3295 = vunpack.c.l.b16 %v3140
    %v3296 = vunpack.c.h.b16 %v3140
    %v3297 = vunpack.c.l.b16 %v3141
    %v3298 = vunpack.c.h.b16 %v3141
    %v3299 = vunpack.c.l.b16 %v3142
    %v3300 = vunpack.c.h.b16 %v3142
    %v3301 = vunpack.c.l.b16 %v3143
    %v3302 = vunpack.c.h.b16 %v3143
    %v3303 = vunpack.c.l.b16 %v3144
    %v3304 = vunpack.c.h.b16 %v3144
    %v3305 = vunpack.c.l.b16 %v3145
    %v3306 = vunpack.c.h.b16 %v3145
    %v3307 = vunpack.c.l.b16 %v3146
    %v3308 = vunpack.c.h.b16 %v3146
    %v3309 = vunpack.c.l.b16 %v3147
    %v3310 = vunpack.c.h.b16 %v3147
    %v3311 = vunpack.c.l.b16 %v3148
    %v3312 = vunpack.c.h.b16 %v3148
    %v3313 = vunpack.c.l.b16 %v3149
    %v3314 = vunpack.c.h.b16 %v3149
    %v3315 = vunpack.c.l.b16 %v3150
    %v3316 = vunpack.c.h.b16 %v3150
    %v3317 = vunpack.c.l.b16 %v3151
    %v3318 = vunpack.c.h.b16 %v3151
    %v3319 = vunpack.c.l.b16 %v3152
    %v3320 = vunpack.c.h.b16 %v3152
    %v3321 = vunpack.c.l.b16 %v3153
    %v3322 = vunpack.c.h.b16 %v3153
    %v3323 = vunpack.c.l.b16 %v3154
    %v3324 = vunpack.c.h.b16 %v3154
    %v3325 = vunpack.c.l.b16 %v3155
    %v3326 = vunpack.c.h.b16 %v3155
    %v3327 = vunpack.c.l.b16 %v3156
    %v3328 = vunpack.c.h.b16 %v3156
    %v3329 = vunpack.c.l.b16 %v3157
    %v3330 = vunpack.c.h.b16 %v3157
    %v3331 = vunpack.c.l.b16 %v3158
    %v3332 = vunpack.c.h.b16 %v3158
    %v3333 = vunpack.c.l.b16 %v3159
    %v3334 = vunpack.c.h.b16 %v3159
    %v3335 = vunpack.c.l.b16 %v3160
    %v3336 = vunpack.c.h.b16 %v3160
    %v3337 = vunpack.c.l.b16 %v3161
    %v3338 = vunpack.c.h.b16 %v3161
    %v3339 = vunpack.c.l.b16 %v3162
    %v3340 = vunpack.c.h.b16 %v3162
    %v3341 = vunpack.c.l.b16 %v3163
    %v3342 = vunpack.c.h.b16 %v3163
    %v3343 = vunpack.c.l.b16 %v3164
    %v3344 = vunpack.c.h.b16 %v3164
    %v3345 = vunpack.c.l.b16 %v3165
    %v3346 = vunpack.c.h.b16 %v3165
    %v3347 = vunpack.c.l.b16 %v3166
    %v3348 = vunpack.c.h.b16 %v3166
    %v3349 = vunpack.c.l.b16 %v3167
    %v3350 = vunpack.c.h.b16 %v3167
    %v3351 = vunpack.c.l.b16 %v3168
    %v3352 = vunpack.c.h.b16 %v3168
    %v3353 = vunpack.c.l.b16 %v3169
    %v3354 = vunpack.c.h.b16 %v3169
    %v3355 = vunpack.c.l.b16 %v3170
    %v3356 = vunpack.c.h.b16 %v3170
    %v3357 = vunpack.c.l.b16 %v3171
    %v3358 = vunpack.c.h.b16 %v3171
    %v3359 = vunpack.c.l.b16 %v3172
    %v3360 = vunpack.c.h.b16 %v3172
    %v3361 = vunpack.c.l.b16 %v3173
    %v3362 = vunpack.c.h.b16 %v3173
    %v3363 = vunpack.c.l.b16 %v3174
    %v3364 = vunpack.c.h.b16 %v3174
    %v3365 = vunpack.c.l.b16 %v3175
    %v3366 = vunpack.c.h.b16 %v3175
    %v3367 = vunpack.c.l.b16 %v3176
    %v3368 = vunpack.c.h.b16 %v3176
    %v3369 = vunpack.c.l.b16 %v3177
    %v3370 = vunpack.c.h.b16 %v3177
    %v3371 = vunpack.c.l.b16 %v3178
    %v3372 = vunpack.c.h.b16 %v3178
    %v3373 = vunpack.c.l.b16 %v3179
    %v3374 = vunpack.c.h.b16 %v3179
    %v3375 = vunpack.c.l.b16 %v3180
    %v3376 = vunpack.c.h.b16 %v3180
    %v3377 = vunpack.c.l.b16 %v3181
    %v3378 = vunpack.c.h.b16 %v3181
    %v3379 = vunpack.c.l.b16 %v3182
    %v3380 = vunpack.c.h.b16 %v3182
    %v3381 = vunpack.c.l.b16 %v3183
    %v3382 = vunpack.c.h.b16 %v3183
    %v3383 = vunpack.c.l.b16 %v3184
    %v3384 = vunpack.c.h.b16 %v3184
    %v3385 = vunpack.c.l.b16 %v3185
    %v3386 = vunpack.c.h.b16 %v3185
    %v3387 = vunpack.c.l.b16 %v3186
    %v3388 = vunpack.c.h.b16 %v3186
    %v3389 = vunpack.c.l.b16 %v3187
    %v3390 = vunpack.c.h.b16 %v3187
    %v3391 = vunpack.c.l.b16 %v3188
    %v3392 = vunpack.c.h.b16 %v3188
    %v3393 = vunpack.c.l.b16 %v3189
    %v3394 = vunpack.c.h.b16 %v3189
    %v3395 = vunpack.c.l.b16 %v3190
    %v3396 = vunpack.c.h.b16 %v3190
    %v3397 = vunpack.c.l.b16 %v3191
    %v3398 = vunpack.c.h.b16 %v3191
    %v3399 = vunpack.c.l.b16 %v3192
    %v3400 = vunpack.c.h.b16 %v3192
    %v3401 = vunpack.c.l.b16 %v3193
    %v3402 = vunpack.c.h.b16 %v3193
    %v3403 = vunpack.c.l.b16 %v3194
    %v3404 = vunpack.c.h.b16 %v3194
    %v3405 = vunpack.c.l.b16 %v3195
    %v3406 = vunpack.c.h.b16 %v3195
    %v3407 = vunpack.c.l.b16 %v3196
    %v3408 = vunpack.c.h.b16 %v3196
    %v3409 = vunpack.c.l.b16 %v3197
    %v3410 = vunpack.c.h.b16 %v3197
    %v3411 = vunpack.c.l.b16 %v3198
    %v3412 = vunpack.c.h.b16 %v3198
    %v3413 = vpack.c.b16 %v3289, %v3285
    %v3414 = vpack.c.b16 %v3290, %v3286
    %v3415 = vpack.c.b16 %v3291, %v3287
    %v3416 = vpack.c.b16 %v3292, %v3288
    %v3417 = vpack.c.b16 %v3297, %v3293
    %v3418 = vpack.c.b16 %v3298, %v3294
    %v3419 = vpack.c.b16 %v3299, %v3295
    %v3420 = vpack.c.b16 %v3300, %v3296
    %v3421 = vpack.c.b16 %v3305, %v3301
    %v3422 = vpack.c.b16 %v3306, %v3302
    %v3423 = vpack.c.b16 %v3307, %v3303
    %v3424 = vpack.c.b16 %v3308, %v3304
    %v3425 = vpack.c.b16 %v3313, %v3309
    %v3426 = vpack.c.b16 %v3314, %v3310
    %v3427 = vpack.c.b16 %v3315, %v3311
    %v3428 = vpack.c.b16 %v3316, %v3312
    %v3429 = vpack.c.b16 %v3321, %v3317
    %v3430 = vpack.c.b16 %v3322, %v3318
    %v3431 = vpack.c.b16 %v3323, %v3319
    %v3432 = vpack.c.b16 %v3324, %v3320
    %v3433 = vpack.c.b16 %v3329, %v3325
    %v3434 = vpack.c.b16 %v3330, %v3326
    %v3435 = vpack.c.b16 %v3331, %v3327
    %v3436 = vpack.c.b16 %v3332, %v3328
    %v3437 = vpack.c.b16 %v3337, %v3333
    %v3438 = vpack.c.b16 %v3338, %v3334
    %v3439 = vpack.c.b16 %v3339, %v3335
    %v3440 = vpack.c.b16 %v3340, %v3336
    %v3441 = vpack.c.b16 %v3345, %v3341
    %v3442 = vpack.c.b16 %v3346, %v3342
    %v3443 = vpack.c.b16 %v3347, %v3343
    %v3444 = vpack.c.b16 %v3348, %v3344
    %v3445 = vpack.c.b16 %v3353, %v3349
    %v3446 = vpack.c.b16 %v3354, %v3350
    %v3447 = vpack.c.b16 %v3355, %v3351
    %v3448 = vpack.c.b16 %v3356, %v3352
    %v3449 = vpack.c.b16 %v3361, %v3357
    %v3450 = vpack.c.b16 %v3362, %v3358
    %v3451 = vpack.c.b16 %v3363, %v3359
    %v3452 = vpack.c.b16 %v3364, %v3360
    %v3453 = vpack.c.b16 %v3369, %v3365
    %v3454 = vpack.c.b16 %v3370, %v3366
    %v3455 = vpack.c.b16 %v3371, %v3367
    %v3456 = vpack.c.b16 %v3372, %v3368
    %v3457 = vpack.c.b16 %v3377, %v3373
    %v3458 = vpack.c.b16 %v3378, %v3374
    %v3459 = vpack.c.b16 %v3379, %v3375
    %v3460 = vpack.c.b16 %v3380, %v3376
    %v3461 = vpack.c.b16 %v3385, %v3381
    %v3462 = vpack.c.b16 %v3386, %v3382
    %v3463 = vpack.c.b16 %v3387, %v3383
    %v3464 = vpack.c.b16 %v3388, %v3384
    %v3465 = vpack.c.b16 %v3393, %v3389
    %v3466 = vpack.c.b16 %v3394, %v3390
    %v3467 = vpack.c.b16 %v3395, %v3391
    %v3468 = vpack.c.b16 %v3396, %v3392
    %v3469 = vpack.c.b16 %v3401, %v3397
    %v3470 = vpack.c.b16 %v3402, %v3398
    %v3471 = vpack.c.b16 %v3403, %v3399
    %v3472 = vpack.c.b16 %v3404, %v3400
    %v3473 = vpack.c.b16 %v3409, %v3405
    %v3474 = vpack.c.b16 %v3410, %v3406
    %v3475 = vpack.c.b16 %v3411, %v3407
    %v3476 = vpack.c.b16 %v3412, %v3408
    %3541 = vmatprep.subr.bf16.mxu0 %v3414
    %3542 = vmatpush1.bf16.msra.mxu0 %v3413
    %3543 = vmatprep.subr.bf16.mxu0 %v3418
    %3544 = vmatpush1.bf16.msra.mxu0 %v3417
    %3545 = vmatprep.subr.bf16.mxu0 %v3422
    %3546 = vmatpush1.bf16.msra.mxu0 %v3421
    %3547 = vmatprep.subr.bf16.mxu0 %v3426
    %3548 = vmatpush1.bf16.msra.mxu0 %v3425
    %3549 = vmatprep.subr.bf16.mxu0 %v3430
    %3550 = vmatpush1.bf16.msra.mxu0 %v3429
    %3551 = vmatprep.subr.bf16.mxu0 %v3434
    %3552 = vmatpush1.bf16.msra.mxu0 %v3433
    %3553 = vmatprep.subr.bf16.mxu0 %v3438
    %3554 = vmatpush1.bf16.msra.mxu0 %v3437
    %3555 = vmatprep.subr.bf16.mxu0 %v3442
    %3556 = vmatpush1.bf16.msra.mxu0 %v3441
    %3557 = vmatprep.subr.bf16.mxu0 %v3446
    %3558 = vmatpush1.bf16.msra.mxu0 %v3445
    %3559 = vmatprep.subr.bf16.mxu0 %v3450
    %3560 = vmatpush1.bf16.msra.mxu0 %v3449
    %3561 = vmatprep.subr.bf16.mxu0 %v3454
    %3562 = vmatpush1.bf16.msra.mxu0 %v3453
    %3563 = vmatprep.subr.bf16.mxu0 %v3458
    %3564 = vmatpush1.bf16.msra.mxu0 %v3457
    %3565 = vmatprep.subr.bf16.mxu0 %v3462
    %3566 = vmatpush1.bf16.msra.mxu0 %v3461
    %3567 = vmatprep.subr.bf16.mxu0 %v3466
    %3568 = vmatpush1.bf16.msra.mxu0 %v3465
    %3569 = vmatprep.subr.bf16.mxu0 %v3470
    %3570 = vmatpush1.bf16.msra.mxu0 %v3469
    %3571 = vmatprep.subr.bf16.mxu0 %v3474
    %3572 = vmatpush1.bf16.msra.mxu0 %v3473
    %3573 = vmatprep.mubr.bf16.mxu0 %v3134
    %3574 = vmatmul.mubr.bf16.gmra.mrb[0].mxu0 %v3133
    %v3575 = vpop.f32.mrb[0].mxu0
    %v3576 = vadd.f32 %v3204, %v3575
    %v3577 = vpop.f32.mrb[0].mxu0
    %v3578 = vadd.f32 %v3208, %v3577
    %v3579 = vpop.f32.mrb[0].mxu0
    %v3580 = vadd.f32 %v3204, %v3579
    %v3581 = vpop.f32.mrb[0].mxu0
    %v3582 = vadd.f32 %v3208, %v3581
    %3583 = vdwg.mxu0
    %3584 = vmatprep.subr.bf16.mxu0 %v3416
    %3585 = vmatpush1.bf16.msra.mxu0 %v3415
    %3586 = vmatprep.subr.bf16.mxu0 %v3420
    %3587 = vmatpush1.bf16.msra.mxu0 %v3419
    %3588 = vmatprep.subr.bf16.mxu0 %v3424
    %3589 = vmatpush1.bf16.msra.mxu0 %v3423
    %3590 = vmatprep.subr.bf16.mxu0 %v3428
    %3591 = vmatpush1.bf16.msra.mxu0 %v3427
    %3592 = vmatprep.subr.bf16.mxu0 %v3432
    %3593 = vmatpush1.bf16.msra.mxu0 %v3431
    %3594 = vmatprep.subr.bf16.mxu0 %v3436
    %3595 = vmatpush1.bf16.msra.mxu0 %v3435
    %3596 = vmatprep.subr.bf16.mxu0 %v3440
    %3597 = vmatpush1.bf16.msra.mxu0 %v3439
    %3598 = vmatprep.subr.bf16.mxu0 %v3444
    %3599 = vmatpush1.bf16.msra.mxu0 %v3443
    %3600 = vmatprep.subr.bf16.mxu0 %v3448
    %3601 = vmatpush1.bf16.msra.mxu0 %v3447
    %3602 = vmatprep.subr.bf16.mxu0 %v3452
    %3603 = vmatpush1.bf16.msra.mxu0 %v3451
    %3604 = vmatprep.subr.bf16.mxu0 %v3456
    %3605 = vmatpush1.bf16.msra.mxu0 %v3455
    %3606 = vmatprep.subr.bf16.mxu0 %v3460
    %3607 = vmatpush1.bf16.msra.mxu0 %v3459
    %3608 = vmatprep.subr.bf16.mxu0 %v3464
    %3609 = vmatpush1.bf16.msra.mxu0 %v3463
    %3610 = vmatprep.subr.bf16.mxu0 %v3468
    %3611 = vmatpush1.bf16.msra.mxu0 %v3467
    %3612 = vmatprep.subr.bf16.mxu0 %v3472
    %3613 = vmatpush1.bf16.msra.mxu0 %v3471
    %3614 = vmatprep.subr.bf16.mxu0 %v3476
    %3615 = vmatpush1.bf16.msra.mxu0 %v3475
    %3616 = vmatprep.mubr.bf16.mxu0 %v3134
    %3617 = vmatmul.mubr.bf16.gmra.mrb[0].mxu0 %v3133
    %v3618 = vpop.f32.mrb[0].mxu0
    %v3619 = vadd.f32 %v3212, %v3618
    %v3620 = vpop.f32.mrb[0].mxu0
    %v3621 = vadd.f32 %v3216, %v3620
    %v3622 = vpop.f32.mrb[0].mxu0
    %v3623 = vadd.f32 %v3212, %v3622
    %v3624 = vpop.f32.mrb[0].mxu0
    %v3625 = vadd.f32 %v3216, %v3624
    %3626 = vdwg.mxu0
    %v3627 = vmax.f32 %v3576, 0.0
    %v3628 = vmax.f32 %v3578, 0.0
    %v3629 = vmax.f32 %v3619, 0.0
    %v3630 = vmax.f32 %v3621, 0.0
    %v3631 = vmax.f32 %v3580, 0.0
    %v3632 = vmax.f32 %v3582, 0.0
    %v3633 = vmax.f32 %v3623, 0.0
    %v3634 = vmax.f32 %v3625, 0.0
    %v3635 = vpack.c.bf16 %v3631, %v3627
    %v3636 = vpack.c.bf16 %v3632, %v3628
    %v3637 = vpack.c.bf16 %v3633, %v3629
    %v3638 = vpack.c.bf16 %v3634, %v3630
    %v3639 = vld [vmem:[#allocation17] sm:$0xff]
    %v3640 = vld [vmem:[#allocation17 + $0x8] sm:$0xff]
    %v3641 = vld [vmem:[#allocation17 + $0x10] sm:$0xff]
    %v3642 = vld [vmem:[#allocation17 + $0x18] sm:$0xf]
    %v3643 = vld [vmem:[#allocation17 + $0x1c] sm:$0xff]
    %v3644 = vld [vmem:[#allocation17 + $0x24] sm:$0xff]
    %v3645 = vld [vmem:[#allocation17 + $0x2c] sm:$0xff]
    %v3646 = vld [vmem:[#allocation17 + $0x34] sm:$0xf]
    %v3647 = vld [vmem:[#allocation17 + $0x38] sm:$0xff]
    %v3648 = vld [vmem:[#allocation17 + $0x40] sm:$0xff]
    %v3649 = vld [vmem:[#allocation17 + $0x48] sm:$0xff]
    %v3650 = vld [vmem:[#allocation17 + $0x50] sm:$0xf]
    %v3651 = vld [vmem:[#allocation17 + $0x54] sm:$0xff]
    %v3652 = vld [vmem:[#allocation17 + $0x5c] sm:$0xff]
    %v3653 = vld [vmem:[#allocation17 + $0x64] sm:$0xff]
    %v3654 = vld [vmem:[#allocation17 + $0x6c] sm:$0xf]
    %v3655 = vld [vmem:[#allocation17 + $0x70] sm:$0xff]
    %v3656 = vld [vmem:[#allocation17 + $0x78] sm:$0xff]
    %v3657 = vld [vmem:[#allocation17 + $0x80] sm:$0xff]
    %v3658 = vld [vmem:[#allocation17 + $0x88] sm:$0xf]
    %v3659 = vld [vmem:[#allocation17 + $0x8c] sm:$0xff]
    %v3660 = vld [vmem:[#allocation17 + $0x94] sm:$0xff]
    %v3661 = vld [vmem:[#allocation17 + $0x9c] sm:$0xff]
    %v3662 = vld [vmem:[#allocation17 + $0xa4] sm:$0xf]
    %v3663 = vld [vmem:[#allocation17 + $0xa8] sm:$0xff]
    %v3664 = vld [vmem:[#allocation17 + $0xb0] sm:$0xff]
    %v3665 = vld [vmem:[#allocation17 + $0xb8] sm:$0xff]
    %v3666 = vld [vmem:[#allocation17 + $0xc0] sm:$0xf]
    %v3667 = vld [vmem:[#allocation17 + $0xc4] sm:$0xff]
    %v3668 = vld [vmem:[#allocation17 + $0xcc] sm:$0xff]
    %v3669 = vld [vmem:[#allocation17 + $0xd4] sm:$0xff]
    %v3670 = vld [vmem:[#allocation17 + $0xdc] sm:$0xf]
    %v3671 = vld [vmem:[#allocation17 + $0xe0] sm:$0xff]
    %v3672 = vld [vmem:[#allocation17 + $0xe8] sm:$0xff]
    %v3673 = vld [vmem:[#allocation17 + $0xf0] sm:$0xff]
    %v3674 = vld [vmem:[#allocation17 + $0xf8] sm:$0xf]
    %v3675 = vld [vmem:[#allocation17 + $0xfc] sm:$0xff]
    %v3676 = vld [vmem:[#allocation17 + $0x104] sm:$0xff]
    %v3677 = vld [vmem:[#allocation17 + $0x10c] sm:$0xff]
    %v3678 = vld [vmem:[#allocation17 + $0x114] sm:$0xf]
    %v3679 = vld [vmem:[#allocation17 + $0x118] sm:$0xff]
    %v3680 = vld [vmem:[#allocation17 + $0x120] sm:$0xff]
    %v3681 = vld [vmem:[#allocation17 + $0x128] sm:$0xff]
    %v3682 = vld [vmem:[#allocation17 + $0x130] sm:$0xf]
    %v3683 = vld [vmem:[#allocation17 + $0x134] sm:$0xff]
    %v3684 = vld [vmem:[#allocation17 + $0x13c] sm:$0xff]
    %v3685 = vld [vmem:[#allocation17 + $0x144] sm:$0xff]
    %v3686 = vld [vmem:[#allocation17 + $0x14c] sm:$0xf]
    %v3687 = vld [vmem:[#allocation17 + $0x150] sm:$0xff]
    %v3688 = vld [vmem:[#allocation17 + $0x158] sm:$0xff]
    %v3689 = vld [vmem:[#allocation17 + $0x160] sm:$0xff]
    %v3690 = vld [vmem:[#allocation17 + $0x168] sm:$0xf]
    %v3691 = vld [vmem:[#allocation17 + $0x16c] sm:$0xff]
    %v3692 = vld [vmem:[#allocation17 + $0x174] sm:$0xff]
    %v3693 = vld [vmem:[#allocation17 + $0x17c] sm:$0xff]
    %v3694 = vld [vmem:[#allocation17 + $0x184] sm:$0xf]
    %v3695 = vld [vmem:[#allocation17 + $0x188] sm:$0xff]
    %v3696 = vld [vmem:[#allocation17 + $0x190] sm:$0xff]
    %v3697 = vld [vmem:[#allocation17 + $0x198] sm:$0xff]
    %v3698 = vld [vmem:[#allocation17 + $0x1a0] sm:$0xf]
    %v3699 = vld [vmem:[#allocation17 + $0x1a4] sm:$0xff]
    %v3700 = vld [vmem:[#allocation17 + $0x1ac] sm:$0xff]
    %v3701 = vld [vmem:[#allocation17 + $0x1b4] sm:$0xff]
    %v3702 = vld [vmem:[#allocation17 + $0x1bc] sm:$0xf]
    %v3703 = vld [vmem:[#allocation17 + $0x1c0] sm:$0xff]
    %v3704 = vld [vmem:[#allocation17 + $0x1c8] sm:$0xff]
    %v3705 = vld [vmem:[#allocation17 + $0x1d0] sm:$0xff]
    %v3706 = vld [vmem:[#allocation17 + $0x1d8] sm:$0xf]
    %v3707 = vld [vmem:[#allocation17 + $0x1dc] sm:$0xff]
    %v3708 = vld [vmem:[#allocation17 + $0x1e4] sm:$0xff]
    %v3709 = vld [vmem:[#allocation17 + $0x1ec] sm:$0xff]
    %v3710 = vld [vmem:[#allocation17 + $0x1f4] sm:$0xf]
    %v3711 = vld [vmem:[#allocation17 + $0x1f8] sm:$0xff]
    %v3712 = vld [vmem:[#allocation17 + $0x200] sm:$0xff]
    %v3713 = vld [vmem:[#allocation17 + $0x208] sm:$0xff]
    %v3714 = vld [vmem:[#allocation17 + $0x210] sm:$0xf]
    %v3715 = vld [vmem:[#allocation17 + $0x214] sm:$0xff]
    %v3716 = vld [vmem:[#allocation17 + $0x21c] sm:$0xff]
    %v3717 = vld [vmem:[#allocation17 + $0x224] sm:$0xff]
    %v3718 = vld [vmem:[#allocation17 + $0x22c] sm:$0xf]
    %v3719 = vld [vmem:[#allocation17 + $0x230] sm:$0xff]
    %v3720 = vld [vmem:[#allocation17 + $0x238] sm:$0xff]
    %v3721 = vld [vmem:[#allocation17 + $0x240] sm:$0xff]
    %v3722 = vld [vmem:[#allocation17 + $0x248] sm:$0xf]
    %v3723 = vld [vmem:[#allocation17 + $0x24c] sm:$0xff]
    %v3724 = vld [vmem:[#allocation17 + $0x254] sm:$0xff]
    %v3725 = vld [vmem:[#allocation17 + $0x25c] sm:$0xff]
    %v3726 = vld [vmem:[#allocation17 + $0x264] sm:$0xf]
    %v3727 = vld [vmem:[#allocation17 + $0x268] sm:$0xff]
    %v3728 = vld [vmem:[#allocation17 + $0x270] sm:$0xff]
    %v3729 = vld [vmem:[#allocation17 + $0x278] sm:$0xff]
    %v3730 = vld [vmem:[#allocation17 + $0x280] sm:$0xf]
    %v3731 = vld [vmem:[#allocation17 + $0x284] sm:$0xff]
    %v3732 = vld [vmem:[#allocation17 + $0x28c] sm:$0xff]
    %v3733 = vld [vmem:[#allocation17 + $0x294] sm:$0xff]
    %v3734 = vld [vmem:[#allocation17 + $0x29c] sm:$0xf]
    %v3735 = vld [vmem:[#allocation17 + $0x2a0] sm:$0xff]
    %v3736 = vld [vmem:[#allocation17 + $0x2a8] sm:$0xff]
    %v3737 = vld [vmem:[#allocation17 + $0x2b0] sm:$0xff]
    %v3738 = vld [vmem:[#allocation17 + $0x2b8] sm:$0xf]
    %v3739 = vld [vmem:[#allocation17 + $0x2bc] sm:$0xff]
    %v3740 = vld [vmem:[#allocation17 + $0x2c4] sm:$0xff]
    %v3741 = vld [vmem:[#allocation17 + $0x2cc] sm:$0xff]
    %v3742 = vld [vmem:[#allocation17 + $0x2d4] sm:$0xf]
    %v3743 = vld [vmem:[#allocation17 + $0x2d8] sm:$0xff]
    %v3744 = vld [vmem:[#allocation17 + $0x2e0] sm:$0xff]
    %v3745 = vld [vmem:[#allocation17 + $0x2e8] sm:$0xff]
    %v3746 = vld [vmem:[#allocation17 + $0x2f0] sm:$0xf]
    %v3747 = vld [vmem:[#allocation17 + $0x2f4] sm:$0xff]
    %v3748 = vld [vmem:[#allocation17 + $0x2fc] sm:$0xff]
    %v3749 = vld [vmem:[#allocation17 + $0x304] sm:$0xff]
    %v3750 = vld [vmem:[#allocation17 + $0x30c] sm:$0xf]
    %v3751 = vld [vmem:[#allocation17 + $0x310] sm:$0xff]
    %v3752 = vld [vmem:[#allocation17 + $0x318] sm:$0xff]
    %v3753 = vld [vmem:[#allocation17 + $0x320] sm:$0xff]
    %v3754 = vld [vmem:[#allocation17 + $0x328] sm:$0xf]
    %v3755 = vld [vmem:[#allocation17 + $0x32c] sm:$0xff]
    %v3756 = vld [vmem:[#allocation17 + $0x334] sm:$0xff]
    %v3757 = vld [vmem:[#allocation17 + $0x33c] sm:$0xff]
    %v3758 = vld [vmem:[#allocation17 + $0x344] sm:$0xf]
    %v3759 = vld [vmem:[#allocation17 + $0x348] sm:$0xff]
    %v3760 = vld [vmem:[#allocation17 + $0x350] sm:$0xff]
    %v3761 = vld [vmem:[#allocation17 + $0x358] sm:$0xff]
    %v3762 = vld [vmem:[#allocation17 + $0x360] sm:$0xf]
    %v3763 = vld [vmem:[#allocation17 + $0x364] sm:$0xff]
    %v3764 = vld [vmem:[#allocation17 + $0x36c] sm:$0xff]
    %v3765 = vld [vmem:[#allocation17 + $0x374] sm:$0xff]
    %v3766 = vld [vmem:[#allocation17 + $0x37c] sm:$0xf]
    %v3767 = vld [vmem:[#allocation17 + $0x380] sm:$0xff]
    %v3768 = vld [vmem:[#allocation17 + $0x388] sm:$0xff]
    %v3769 = vld [vmem:[#allocation17 + $0x390] sm:$0xff]
    %v3770 = vld [vmem:[#allocation17 + $0x398] sm:$0xf]
    %v3771 = vld [vmem:[#allocation17 + $0x39c] sm:$0xff]
    %v3772 = vld [vmem:[#allocation17 + $0x3a4] sm:$0xff]
    %v3773 = vld [vmem:[#allocation17 + $0x3ac] sm:$0xff]
    %v3774 = vld [vmem:[#allocation17 + $0x3b4] sm:$0xf]
    %v3775 = vld [vmem:[#allocation17 + $0x3b8] sm:$0xff]
    %v3776 = vld [vmem:[#allocation17 + $0x3c0] sm:$0xff]
    %v3777 = vld [vmem:[#allocation17 + $0x3c8] sm:$0xff]
    %v3778 = vld [vmem:[#allocation17 + $0x3d0] sm:$0xf]
    %v3779 = vld [vmem:[#allocation17 + $0x3d4] sm:$0xff]
    %v3780 = vld [vmem:[#allocation17 + $0x3dc] sm:$0xff]
    %v3781 = vld [vmem:[#allocation17 + $0x3e4] sm:$0xff]
    %v3782 = vld [vmem:[#allocation17 + $0x3ec] sm:$0xf]
    %v3783 = vld [vmem:[#allocation17 + $0x3f0] sm:$0xff]
    %v3784 = vld [vmem:[#allocation17 + $0x3f8] sm:$0xff]
    %v3785 = vld [vmem:[#allocation17 + $0x400] sm:$0xff]
    %v3786 = vld [vmem:[#allocation17 + $0x408] sm:$0xf]
    %v3787 = vld [vmem:[#allocation17 + $0x40c] sm:$0xff]
    %v3788 = vld [vmem:[#allocation17 + $0x414] sm:$0xff]
    %v3789 = vld [vmem:[#allocation17 + $0x41c] sm:$0xff]
    %v3790 = vld [vmem:[#allocation17 + $0x424] sm:$0xf]
    %v3791 = vld [vmem:[#allocation17 + $0x428] sm:$0xff]
    %v3792 = vld [vmem:[#allocation17 + $0x430] sm:$0xff]
    %v3793 = vld [vmem:[#allocation17 + $0x438] sm:$0xff]
    %v3794 = vld [vmem:[#allocation17 + $0x440] sm:$0xf]
    %v3795 = vld [vmem:[#allocation17 + $0x444] sm:$0xff]
    %v3796 = vld [vmem:[#allocation17 + $0x44c] sm:$0xff]
    %v3797 = vld [vmem:[#allocation17 + $0x454] sm:$0xff]
    %v3798 = vld [vmem:[#allocation17 + $0x45c] sm:$0xf]
    %v3799 = vld [vmem:[#allocation17 + $0x460] sm:$0xff]
    %v3800 = vld [vmem:[#allocation17 + $0x468] sm:$0xff]
    %v3801 = vld [vmem:[#allocation17 + $0x470] sm:$0xff]
    %v3802 = vld [vmem:[#allocation17 + $0x478] sm:$0xf]
    %v3803 = vld [vmem:[#allocation17 + $0x47c] sm:$0xff]
    %v3804 = vld [vmem:[#allocation17 + $0x484] sm:$0xff]
    %v3805 = vld [vmem:[#allocation17 + $0x48c] sm:$0xff]
    %v3806 = vld [vmem:[#allocation17 + $0x494] sm:$0xf]
    %v3807 = vld [vmem:[#allocation17 + $0x498] sm:$0xff]
    %v3808 = vld [vmem:[#allocation17 + $0x4a0] sm:$0xff]
    %v3809 = vld [vmem:[#allocation17 + $0x4a8] sm:$0xff]
    %v3810 = vld [vmem:[#allocation17 + $0x4b0] sm:$0xf]
    %v3811 = vld [vmem:[#allocation17 + $0x4b4] sm:$0xff]
    %v3812 = vld [vmem:[#allocation17 + $0x4bc] sm:$0xff]
    %v3813 = vld [vmem:[#allocation17 + $0x4c4] sm:$0xff]
    %v3814 = vld [vmem:[#allocation17 + $0x4cc] sm:$0xf]
    %v3815 = vld [vmem:[#allocation17 + $0x4d0] sm:$0xff]
    %v3816 = vld [vmem:[#allocation17 + $0x4d8] sm:$0xff]
    %v3817 = vld [vmem:[#allocation17 + $0x4e0] sm:$0xff]
    %v3818 = vld [vmem:[#allocation17 + $0x4e8] sm:$0xf]
    %v3819 = vld [vmem:[#allocation17 + $0x4ec] sm:$0xff]
    %v3820 = vld [vmem:[#allocation17 + $0x4f4] sm:$0xff]
    %v3821 = vld [vmem:[#allocation17 + $0x4fc] sm:$0xff]
    %v3822 = vld [vmem:[#allocation17 + $0x504] sm:$0xf]
    %v3823 = vld [vmem:[#allocation17 + $0x508] sm:$0xff]
    %v3824 = vld [vmem:[#allocation17 + $0x510] sm:$0xff]
    %v3825 = vld [vmem:[#allocation17 + $0x518] sm:$0xff]
    %v3826 = vld [vmem:[#allocation17 + $0x520] sm:$0xf]
    %v3827 = vld [vmem:[#allocation17 + $0x524] sm:$0xff]
    %v3828 = vld [vmem:[#allocation17 + $0x52c] sm:$0xff]
    %v3829 = vld [vmem:[#allocation17 + $0x534] sm:$0xff]
    %v3830 = vld [vmem:[#allocation17 + $0x53c] sm:$0xf]
    %v3831 = vld [vmem:[#allocation17 + $0x540] sm:$0xff]
    %v3832 = vld [vmem:[#allocation17 + $0x548] sm:$0xff]
    %v3833 = vld [vmem:[#allocation17 + $0x550] sm:$0xff]
    %v3834 = vld [vmem:[#allocation17 + $0x558] sm:$0xf]
    %v3835 = vld [vmem:[#allocation17 + $0x55c] sm:$0xff]
    %v3836 = vld [vmem:[#allocation17 + $0x564] sm:$0xff]
    %v3837 = vld [vmem:[#allocation17 + $0x56c] sm:$0xff]
    %v3838 = vld [vmem:[#allocation17 + $0x574] sm:$0xf]
    %v3839 = vld [vmem:[#allocation17 + $0x578] sm:$0xff]
    %v3840 = vld [vmem:[#allocation17 + $0x580] sm:$0xff]
    %v3841 = vld [vmem:[#allocation17 + $0x588] sm:$0xff]
    %v3842 = vld [vmem:[#allocation17 + $0x590] sm:$0xf]
    %v3843 = vld [vmem:[#allocation17 + $0x594] sm:$0xff]
    %v3844 = vld [vmem:[#allocation17 + $0x59c] sm:$0xff]
    %v3845 = vld [vmem:[#allocation17 + $0x5a4] sm:$0xff]
    %v3846 = vld [vmem:[#allocation17 + $0x5ac] sm:$0xf]
    %v3847 = vld [vmem:[#allocation17 + $0x5b0] sm:$0xff]
    %v3848 = vld [vmem:[#allocation17 + $0x5b8] sm:$0xff]
    %v3849 = vld [vmem:[#allocation17 + $0x5c0] sm:$0xff]
    %v3850 = vld [vmem:[#allocation17 + $0x5c8] sm:$0xf]
    %v3851 = vld [vmem:[#allocation17 + $0x5cc] sm:$0xff]
    %v3852 = vld [vmem:[#allocation17 + $0x5d4] sm:$0xff]
    %v3853 = vld [vmem:[#allocation17 + $0x5dc] sm:$0xff]
    %v3854 = vld [vmem:[#allocation17 + $0x5e4] sm:$0xf]
    %v3855 = vld [vmem:[#allocation17 + $0x5e8] sm:$0xff]
    %v3856 = vld [vmem:[#allocation17 + $0x5f0] sm:$0xff]
    %v3857 = vld [vmem:[#allocation17 + $0x5f8] sm:$0xff]
    %v3858 = vld [vmem:[#allocation17 + $0x600] sm:$0xf]
    %v3859 = vld [vmem:[#allocation17 + $0x604] sm:$0xff]
    %v3860 = vld [vmem:[#allocation17 + $0x60c] sm:$0xff]
    %v3861 = vld [vmem:[#allocation17 + $0x614] sm:$0xff]
    %v3862 = vld [vmem:[#allocation17 + $0x61c] sm:$0xf]
    %v3863 = vld [vmem:[#allocation17 + $0x620] sm:$0xff]
    %v3864 = vld [vmem:[#allocation17 + $0x628] sm:$0xff]
    %v3865 = vld [vmem:[#allocation17 + $0x630] sm:$0xff]
    %v3866 = vld [vmem:[#allocation17 + $0x638] sm:$0xf]
    %v3867 = vld [vmem:[#allocation17 + $0x63c] sm:$0xff]
    %v3868 = vld [vmem:[#allocation17 + $0x644] sm:$0xff]
    %v3869 = vld [vmem:[#allocation17 + $0x64c] sm:$0xff]
    %v3870 = vld [vmem:[#allocation17 + $0x654] sm:$0xf]
    %v3871 = vld [vmem:[#allocation17 + $0x658] sm:$0xff]
    %v3872 = vld [vmem:[#allocation17 + $0x660] sm:$0xff]
    %v3873 = vld [vmem:[#allocation17 + $0x668] sm:$0xff]
    %v3874 = vld [vmem:[#allocation17 + $0x670] sm:$0xf]
    %v3875 = vld [vmem:[#allocation17 + $0x674] sm:$0xff]
    %v3876 = vld [vmem:[#allocation17 + $0x67c] sm:$0xff]
    %v3877 = vld [vmem:[#allocation17 + $0x684] sm:$0xff]
    %v3878 = vld [vmem:[#allocation17 + $0x68c] sm:$0xf]
    %v3879 = vld [vmem:[#allocation17 + $0x690] sm:$0xff]
    %v3880 = vld [vmem:[#allocation17 + $0x698] sm:$0xff]
    %v3881 = vld [vmem:[#allocation17 + $0x6a0] sm:$0xff]
    %v3882 = vld [vmem:[#allocation17 + $0x6a8] sm:$0xf]
    %v3883 = vld [vmem:[#allocation17 + $0x6ac] sm:$0xff]
    %v3884 = vld [vmem:[#allocation17 + $0x6b4] sm:$0xff]
    %v3885 = vld [vmem:[#allocation17 + $0x6bc] sm:$0xff]
    %v3886 = vld [vmem:[#allocation17 + $0x6c4] sm:$0xf]
    %v3887 = vld [vmem:[#allocation17 + $0x6c8] sm:$0xff]
    %v3888 = vld [vmem:[#allocation17 + $0x6d0] sm:$0xff]
    %v3889 = vld [vmem:[#allocation17 + $0x6d8] sm:$0xff]
    %v3890 = vld [vmem:[#allocation17 + $0x6e0] sm:$0xf]
    %v3891 = vld [vmem:[#allocation17 + $0x6e4] sm:$0xff]
    %v3892 = vld [vmem:[#allocation17 + $0x6ec] sm:$0xff]
    %v3893 = vld [vmem:[#allocation17 + $0x6f4] sm:$0xff]
    %v3894 = vld [vmem:[#allocation17 + $0x6fc] sm:$0xf]
    %v3895 = vld [vmem:[%s18] sm:$0xff]
    %v3897 = vlaneseq
    %v3898 = vshrl.u32 %v3897, 7
    %v3899 = vsub.s32 0, %v3898
    %v3900 = vrot.slane %v3895, %v3899
    %v3901 = vlaneseq
    %v3902 = vshrl.u32 %v3901, 7
    %v3903 = vsub.s32 1, %v3902
    %v3904 = vrot.slane %v3895, %v3903
    %v3905 = vlaneseq
    %v3906 = vshrl.u32 %v3905, 7
    %v3907 = vsub.s32 2, %v3906
    %v3908 = vrot.slane %v3895, %v3907
    %v3909 = vlaneseq
    %v3910 = vshrl.u32 %v3909, 7
    %v3911 = vsub.s32 3, %v3910
    %v3912 = vrot.slane %v3895, %v3911
    %v3913 = vlaneseq
    %v3914 = vshrl.u32 %v3913, 7
    %v3915 = vsub.s32 4, %v3914
    %v3916 = vrot.slane %v3895, %v3915
    %v3917 = vlaneseq
    %v3918 = vshrl.u32 %v3917, 7
    %v3919 = vsub.s32 5, %v3918
    %v3920 = vrot.slane %v3895, %v3919
    %v3921 = vlaneseq
    %v3922 = vshrl.u32 %v3921, 7
    %v3923 = vsub.s32 6, %v3922
    %v3924 = vrot.slane %v3895, %v3923
    %v4188 = vunpack.c.l.b16 %v3639
    %v4189 = vunpack.c.h.b16 %v3639
    %v4190 = vunpack.c.l.b16 %v3640
    %v4191 = vunpack.c.h.b16 %v3640
    %v4192 = vunpack.c.l.b16 %v3641
    %v4193 = vunpack.c.h.b16 %v3641
    %v4194 = vunpack.c.l.b16 %v3642
    %v4195 = vunpack.c.l.b16 %v3643
    %v4196 = vunpack.c.h.b16 %v3643
    %v4197 = vunpack.c.l.b16 %v3644
    %v4198 = vunpack.c.h.b16 %v3644
    %v4199 = vunpack.c.l.b16 %v3645
    %v4200 = vunpack.c.h.b16 %v3645
    %v4201 = vunpack.c.l.b16 %v3646
    %v4202 = vunpack.c.l.b16 %v3647
    %v4203 = vunpack.c.h.b16 %v3647
    %v4204 = vunpack.c.l.b16 %v3648
    %v4205 = vunpack.c.h.b16 %v3648
    %v4206 = vunpack.c.l.b16 %v3649
    %v4207 = vunpack.c.h.b16 %v3649
    %v4208 = vunpack.c.l.b16 %v3650
    %v4209 = vunpack.c.l.b16 %v3651
    %v4210 = vunpack.c.h.b16 %v3651
    %v4211 = vunpack.c.l.b16 %v3652
    %v4212 = vunpack.c.h.b16 %v3652
    %v4213 = vunpack.c.l.b16 %v3653
    %v4214 = vunpack.c.h.b16 %v3653
    %v4215 = vunpack.c.l.b16 %v3654
    %v4216 = vunpack.c.l.b16 %v3655
    %v4217 = vunpack.c.h.b16 %v3655
    %v4218 = vunpack.c.l.b16 %v3656
    %v4219 = vunpack.c.h.b16 %v3656
    %v4220 = vunpack.c.l.b16 %v3657
    %v4221 = vunpack.c.h.b16 %v3657
    %v4222 = vunpack.c.l.b16 %v3658
    %v4223 = vunpack.c.l.b16 %v3659
    %v4224 = vunpack.c.h.b16 %v3659
    %v4225 = vunpack.c.l.b16 %v3660
    %v4226 = vunpack.c.h.b16 %v3660
    %v4227 = vunpack.c.l.b16 %v3661
    %v4228 = vunpack.c.h.b16 %v3661
    %v4229 = vunpack.c.l.b16 %v3662
    %v4230 = vunpack.c.l.b16 %v3663
    %v4231 = vunpack.c.h.b16 %v3663
    %v4232 = vunpack.c.l.b16 %v3664
    %v4233 = vunpack.c.h.b16 %v3664
    %v4234 = vunpack.c.l.b16 %v3665
    %v4235 = vunpack.c.h.b16 %v3665
    %v4236 = vunpack.c.l.b16 %v3666
    %v4237 = vunpack.c.l.b16 %v3667
    %v4238 = vunpack.c.h.b16 %v3667
    %v4239 = vunpack.c.l.b16 %v3668
    %v4240 = vunpack.c.h.b16 %v3668
    %v4241 = vunpack.c.l.b16 %v3669
    %v4242 = vunpack.c.h.b16 %v3669
    %v4243 = vunpack.c.l.b16 %v3670
    %v4244 = vunpack.c.l.b16 %v3671
    %v4245 = vunpack.c.h.b16 %v3671
    %v4246 = vunpack.c.l.b16 %v3672
    %v4247 = vunpack.c.h.b16 %v3672
    %v4248 = vunpack.c.l.b16 %v3673
    %v4249 = vunpack.c.h.b16 %v3673
    %v4250 = vunpack.c.l.b16 %v3674
    %v4251 = vunpack.c.l.b16 %v3675
    %v4252 = vunpack.c.h.b16 %v3675
    %v4253 = vunpack.c.l.b16 %v3676
    %v4254 = vunpack.c.h.b16 %v3676
    %v4255 = vunpack.c.l.b16 %v3677
    %v4256 = vunpack.c.h.b16 %v3677
    %v4257 = vunpack.c.l.b16 %v3678
    %v4258 = vunpack.c.l.b16 %v3679
    %v4259 = vunpack.c.h.b16 %v3679
    %v4260 = vunpack.c.l.b16 %v3680
    %v4261 = vunpack.c.h.b16 %v3680
    %v4262 = vunpack.c.l.b16 %v3681
    %v4263 = vunpack.c.h.b16 %v3681
    %v4264 = vunpack.c.l.b16 %v3682
    %v4265 = vunpack.c.l.b16 %v3683
    %v4266 = vunpack.c.h.b16 %v3683
    %v4267 = vunpack.c.l.b16 %v3684
    %v4268 = vunpack.c.h.b16 %v3684
    %v4269 = vunpack.c.l.b16 %v3685
    %v4270 = vunpack.c.h.b16 %v3685
    %v4271 = vunpack.c.l.b16 %v3686
    %v4272 = vunpack.c.l.b16 %v3687
    %v4273 = vunpack.c.h.b16 %v3687
    %v4274 = vunpack.c.l.b16 %v3688
    %v4275 = vunpack.c.h.b16 %v3688
    %v4276 = vunpack.c.l.b16 %v3689
    %v4277 = vunpack.c.h.b16 %v3689
    %v4278 = vunpack.c.l.b16 %v3690
    %v4279 = vunpack.c.l.b16 %v3691
    %v4280 = vunpack.c.h.b16 %v3691
    %v4281 = vunpack.c.l.b16 %v3692
    %v4282 = vunpack.c.h.b16 %v3692
    %v4283 = vunpack.c.l.b16 %v3693
    %v4284 = vunpack.c.h.b16 %v3693
    %v4285 = vunpack.c.l.b16 %v3694
    %v4286 = vunpack.c.l.b16 %v3695
    %v4287 = vunpack.c.h.b16 %v3695
    %v4288 = vunpack.c.l.b16 %v3696
    %v4289 = vunpack.c.h.b16 %v3696
    %v4290 = vunpack.c.l.b16 %v3697
    %v4291 = vunpack.c.h.b16 %v3697
    %v4292 = vunpack.c.l.b16 %v3698
    %v4293 = vunpack.c.l.b16 %v3699
    %v4294 = vunpack.c.h.b16 %v3699
    %v4295 = vunpack.c.l.b16 %v3700
    %v4296 = vunpack.c.h.b16 %v3700
    %v4297 = vunpack.c.l.b16 %v3701
    %v4298 = vunpack.c.h.b16 %v3701
    %v4299 = vunpack.c.l.b16 %v3702
    %v4300 = vunpack.c.l.b16 %v3703
    %v4301 = vunpack.c.h.b16 %v3703
    %v4302 = vunpack.c.l.b16 %v3704
    %v4303 = vunpack.c.h.b16 %v3704
    %v4304 = vunpack.c.l.b16 %v3705
    %v4305 = vunpack.c.h.b16 %v3705
    %v4306 = vunpack.c.l.b16 %v3706
    %v4307 = vunpack.c.l.b16 %v3707
    %v4308 = vunpack.c.h.b16 %v3707
    %v4309 = vunpack.c.l.b16 %v3708
    %v4310 = vunpack.c.h.b16 %v3708
    %v4311 = vunpack.c.l.b16 %v3709
    %v4312 = vunpack.c.h.b16 %v3709
    %v4313 = vunpack.c.l.b16 %v3710
    %v4314 = vunpack.c.l.b16 %v3711
    %v4315 = vunpack.c.h.b16 %v3711
    %v4316 = vunpack.c.l.b16 %v3712
    %v4317 = vunpack.c.h.b16 %v3712
    %v4318 = vunpack.c.l.b16 %v3713
    %v4319 = vunpack.c.h.b16 %v3713
    %v4320 = vunpack.c.l.b16 %v3714
    %v4321 = vunpack.c.l.b16 %v3715
    %v4322 = vunpack.c.h.b16 %v3715
    %v4323 = vunpack.c.l.b16 %v3716
    %v4324 = vunpack.c.h.b16 %v3716
    %v4325 = vunpack.c.l.b16 %v3717
    %v4326 = vunpack.c.h.b16 %v3717
    %v4327 = vunpack.c.l.b16 %v3718
    %v4328 = vunpack.c.l.b16 %v3719
    %v4329 = vunpack.c.h.b16 %v3719
    %v4330 = vunpack.c.l.b16 %v3720
    %v4331 = vunpack.c.h.b16 %v3720
    %v4332 = vunpack.c.l.b16 %v3721
    %v4333 = vunpack.c.h.b16 %v3721
    %v4334 = vunpack.c.l.b16 %v3722
    %v4335 = vunpack.c.l.b16 %v3723
    %v4336 = vunpack.c.h.b16 %v3723
    %v4337 = vunpack.c.l.b16 %v3724
    %v4338 = vunpack.c.h.b16 %v3724
    %v4339 = vunpack.c.l.b16 %v3725
    %v4340 = vunpack.c.h.b16 %v3725
    %v4341 = vunpack.c.l.b16 %v3726
    %v4342 = vunpack.c.l.b16 %v3727
    %v4343 = vunpack.c.h.b16 %v3727
    %v4344 = vunpack.c.l.b16 %v3728
    %v4345 = vunpack.c.h.b16 %v3728
    %v4346 = vunpack.c.l.b16 %v3729
    %v4347 = vunpack.c.h.b16 %v3729
    %v4348 = vunpack.c.l.b16 %v3730
    %v4349 = vunpack.c.l.b16 %v3731
    %v4350 = vunpack.c.h.b16 %v3731
    %v4351 = vunpack.c.l.b16 %v3732
    %v4352 = vunpack.c.h.b16 %v3732
    %v4353 = vunpack.c.l.b16 %v3733
    %v4354 = vunpack.c.h.b16 %v3733
    %v4355 = vunpack.c.l.b16 %v3734
    %v4356 = vunpack.c.l.b16 %v3735
    %v4357 = vunpack.c.h.b16 %v3735
    %v4358 = vunpack.c.l.b16 %v3736
    %v4359 = vunpack.c.h.b16 %v3736
    %v4360 = vunpack.c.l.b16 %v3737
    %v4361 = vunpack.c.h.b16 %v3737
    %v4362 = vunpack.c.l.b16 %v3738
    %v4363 = vunpack.c.l.b16 %v3739
    %v4364 = vunpack.c.h.b16 %v3739
    %v4365 = vunpack.c.l.b16 %v3740
    %v4366 = vunpack.c.h.b16 %v3740
    %v4367 = vunpack.c.l.b16 %v3741
    %v4368 = vunpack.c.h.b16 %v3741
    %v4369 = vunpack.c.l.b16 %v3742
    %v4370 = vunpack.c.l.b16 %v3743
    %v4371 = vunpack.c.h.b16 %v3743
    %v4372 = vunpack.c.l.b16 %v3744
    %v4373 = vunpack.c.h.b16 %v3744
    %v4374 = vunpack.c.l.b16 %v3745
    %v4375 = vunpack.c.h.b16 %v3745
    %v4376 = vunpack.c.l.b16 %v3746
    %v4377 = vunpack.c.l.b16 %v3747
    %v4378 = vunpack.c.h.b16 %v3747
    %v4379 = vunpack.c.l.b16 %v3748
    %v4380 = vunpack.c.h.b16 %v3748
    %v4381 = vunpack.c.l.b16 %v3749
    %v4382 = vunpack.c.h.b16 %v3749
    %v4383 = vunpack.c.l.b16 %v3750
    %v4384 = vunpack.c.l.b16 %v3751
    %v4385 = vunpack.c.h.b16 %v3751
    %v4386 = vunpack.c.l.b16 %v3752
    %v4387 = vunpack.c.h.b16 %v3752
    %v4388 = vunpack.c.l.b16 %v3753
    %v4389 = vunpack.c.h.b16 %v3753
    %v4390 = vunpack.c.l.b16 %v3754
    %v4391 = vunpack.c.l.b16 %v3755
    %v4392 = vunpack.c.h.b16 %v3755
    %v4393 = vunpack.c.l.b16 %v3756
    %v4394 = vunpack.c.h.b16 %v3756
    %v4395 = vunpack.c.l.b16 %v3757
    %v4396 = vunpack.c.h.b16 %v3757
    %v4397 = vunpack.c.l.b16 %v3758
    %v4398 = vunpack.c.l.b16 %v3759
    %v4399 = vunpack.c.h.b16 %v3759
    %v4400 = vunpack.c.l.b16 %v3760
    %v4401 = vunpack.c.h.b16 %v3760
    %v4402 = vunpack.c.l.b16 %v3761
    %v4403 = vunpack.c.h.b16 %v3761
    %v4404 = vunpack.c.l.b16 %v3762
    %v4405 = vunpack.c.l.b16 %v3763
    %v4406 = vunpack.c.h.b16 %v3763
    %v4407 = vunpack.c.l.b16 %v3764
    %v4408 = vunpack.c.h.b16 %v3764
    %v4409 = vunpack.c.l.b16 %v3765
    %v4410 = vunpack.c.h.b16 %v3765
    %v4411 = vunpack.c.l.b16 %v3766
    %v4412 = vunpack.c.l.b16 %v3767
    %v4413 = vunpack.c.h.b16 %v3767
    %v4414 = vunpack.c.l.b16 %v3768
    %v4415 = vunpack.c.h.b16 %v3768
    %v4416 = vunpack.c.l.b16 %v3769
    %v4417 = vunpack.c.h.b16 %v3769
    %v4418 = vunpack.c.l.b16 %v3770
    %v4419 = vunpack.c.l.b16 %v3771
    %v4420 = vunpack.c.h.b16 %v3771
    %v4421 = vunpack.c.l.b16 %v3772
    %v4422 = vunpack.c.h.b16 %v3772
    %v4423 = vunpack.c.l.b16 %v3773
    %v4424 = vunpack.c.h.b16 %v3773
    %v4425 = vunpack.c.l.b16 %v3774
    %v4426 = vunpack.c.l.b16 %v3775
    %v4427 = vunpack.c.h.b16 %v3775
    %v4428 = vunpack.c.l.b16 %v3776
    %v4429 = vunpack.c.h.b16 %v3776
    %v4430 = vunpack.c.l.b16 %v3777
    %v4431 = vunpack.c.h.b16 %v3777
    %v4432 = vunpack.c.l.b16 %v3778
    %v4433 = vunpack.c.l.b16 %v3779
    %v4434 = vunpack.c.h.b16 %v3779
    %v4435 = vunpack.c.l.b16 %v3780
    %v4436 = vunpack.c.h.b16 %v3780
    %v4437 = vunpack.c.l.b16 %v3781
    %v4438 = vunpack.c.h.b16 %v3781
    %v4439 = vunpack.c.l.b16 %v3782
    %v4440 = vunpack.c.l.b16 %v3783
    %v4441 = vunpack.c.h.b16 %v3783
    %v4442 = vunpack.c.l.b16 %v3784
    %v4443 = vunpack.c.h.b16 %v3784
    %v4444 = vunpack.c.l.b16 %v3785
    %v4445 = vunpack.c.h.b16 %v3785
    %v4446 = vunpack.c.l.b16 %v3786
    %v4447 = vunpack.c.l.b16 %v3787
    %v4448 = vunpack.c.h.b16 %v3787
    %v4449 = vunpack.c.l.b16 %v3788
    %v4450 = vunpack.c.h.b16 %v3788
    %v4451 = vunpack.c.l.b16 %v3789
    %v4452 = vunpack.c.h.b16 %v3789
    %v4453 = vunpack.c.l.b16 %v3790
    %v4454 = vunpack.c.l.b16 %v3791
    %v4455 = vunpack.c.h.b16 %v3791
    %v4456 = vunpack.c.l.b16 %v3792
    %v4457 = vunpack.c.h.b16 %v3792
    %v4458 = vunpack.c.l.b16 %v3793
    %v4459 = vunpack.c.h.b16 %v3793
    %v4460 = vunpack.c.l.b16 %v3794
    %v4461 = vunpack.c.l.b16 %v3795
    %v4462 = vunpack.c.h.b16 %v3795
    %v4463 = vunpack.c.l.b16 %v3796
    %v4464 = vunpack.c.h.b16 %v3796
    %v4465 = vunpack.c.l.b16 %v3797
    %v4466 = vunpack.c.h.b16 %v3797
    %v4467 = vunpack.c.l.b16 %v3798
    %v4468 = vunpack.c.l.b16 %v3799
    %v4469 = vunpack.c.h.b16 %v3799
    %v4470 = vunpack.c.l.b16 %v3800
    %v4471 = vunpack.c.h.b16 %v3800
    %v4472 = vunpack.c.l.b16 %v3801
    %v4473 = vunpack.c.h.b16 %v3801
    %v4474 = vunpack.c.l.b16 %v3802
    %v4475 = vunpack.c.l.b16 %v3803
    %v4476 = vunpack.c.h.b16 %v3803
    %v4477 = vunpack.c.l.b16 %v3804
    %v4478 = vunpack.c.h.b16 %v3804
    %v4479 = vunpack.c.l.b16 %v3805
    %v4480 = vunpack.c.h.b16 %v3805
    %v4481 = vunpack.c.l.b16 %v3806
    %v4482 = vunpack.c.l.b16 %v3807
    %v4483 = vunpack.c.h.b16 %v3807
    %v4484 = vunpack.c.l.b16 %v3808
    %v4485 = vunpack.c.h.b16 %v3808
    %v4486 = vunpack.c.l.b16 %v3809
    %v4487 = vunpack.c.h.b16 %v3809
    %v4488 = vunpack.c.l.b16 %v3810
    %v4489 = vunpack.c.l.b16 %v3811
    %v4490 = vunpack.c.h.b16 %v3811
    %v4491 = vunpack.c.l.b16 %v3812
    %v4492 = vunpack.c.h.b16 %v3812
    %v4493 = vunpack.c.l.b16 %v3813
    %v4494 = vunpack.c.h.b16 %v3813
    %v4495 = vunpack.c.l.b16 %v3814
    %v4496 = vunpack.c.l.b16 %v3815
    %v4497 = vunpack.c.h.b16 %v3815
    %v4498 = vunpack.c.l.b16 %v3816
    %v4499 = vunpack.c.h.b16 %v3816
    %v4500 = vunpack.c.l.b16 %v3817
    %v4501 = vunpack.c.h.b16 %v3817
    %v4502 = vunpack.c.l.b16 %v3818
    %v4503 = vunpack.c.l.b16 %v3819
    %v4504 = vunpack.c.h.b16 %v3819
    %v4505 = vunpack.c.l.b16 %v3820
    %v4506 = vunpack.c.h.b16 %v3820
    %v4507 = vunpack.c.l.b16 %v3821
    %v4508 = vunpack.c.h.b16 %v3821
    %v4509 = vunpack.c.l.b16 %v3822
    %v4510 = vunpack.c.l.b16 %v3823
    %v4511 = vunpack.c.h.b16 %v3823
    %v4512 = vunpack.c.l.b16 %v3824
    %v4513 = vunpack.c.h.b16 %v3824
    %v4514 = vunpack.c.l.b16 %v3825
    %v4515 = vunpack.c.h.b16 %v3825
    %v4516 = vunpack.c.l.b16 %v3826
    %v4517 = vunpack.c.l.b16 %v3827
    %v4518 = vunpack.c.h.b16 %v3827
    %v4519 = vunpack.c.l.b16 %v3828
    %v4520 = vunpack.c.h.b16 %v3828
    %v4521 = vunpack.c.l.b16 %v3829
    %v4522 = vunpack.c.h.b16 %v3829
    %v4523 = vunpack.c.l.b16 %v3830
    %v4524 = vunpack.c.l.b16 %v3831
    %v4525 = vunpack.c.h.b16 %v3831
    %v4526 = vunpack.c.l.b16 %v3832
    %v4527 = vunpack.c.h.b16 %v3832
    %v4528 = vunpack.c.l.b16 %v3833
    %v4529 = vunpack.c.h.b16 %v3833
    %v4530 = vunpack.c.l.b16 %v3834
    %v4531 = vunpack.c.l.b16 %v3835
    %v4532 = vunpack.c.h.b16 %v3835
    %v4533 = vunpack.c.l.b16 %v3836
    %v4534 = vunpack.c.h.b16 %v3836
    %v4535 = vunpack.c.l.b16 %v3837
    %v4536 = vunpack.c.h.b16 %v3837
    %v4537 = vunpack.c.l.b16 %v3838
    %v4538 = vunpack.c.l.b16 %v3839
    %v4539 = vunpack.c.h.b16 %v3839
    %v4540 = vunpack.c.l.b16 %v3840
    %v4541 = vunpack.c.h.b16 %v3840
    %v4542 = vunpack.c.l.b16 %v3841
    %v4543 = vunpack.c.h.b16 %v3841
    %v4544 = vunpack.c.l.b16 %v3842
    %v4545 = vunpack.c.l.b16 %v3843
    %v4546 = vunpack.c.h.b16 %v3843
    %v4547 = vunpack.c.l.b16 %v3844
    %v4548 = vunpack.c.h.b16 %v3844
    %v4549 = vunpack.c.l.b16 %v3845
    %v4550 = vunpack.c.h.b16 %v3845
    %v4551 = vunpack.c.l.b16 %v3846
    %v4552 = vunpack.c.l.b16 %v3847
    %v4553 = vunpack.c.h.b16 %v3847
    %v4554 = vunpack.c.l.b16 %v3848
    %v4555 = vunpack.c.h.b16 %v3848
    %v4556 = vunpack.c.l.b16 %v3849
    %v4557 = vunpack.c.h.b16 %v3849
    %v4558 = vunpack.c.l.b16 %v3850
    %v4559 = vunpack.c.l.b16 %v3851
    %v4560 = vunpack.c.h.b16 %v3851
    %v4561 = vunpack.c.l.b16 %v3852
    %v4562 = vunpack.c.h.b16 %v3852
    %v4563 = vunpack.c.l.b16 %v3853
    %v4564 = vunpack.c.h.b16 %v3853
    %v4565 = vunpack.c.l.b16 %v3854
    %v4566 = vunpack.c.l.b16 %v3855
    %v4567 = vunpack.c.h.b16 %v3855
    %v4568 = vunpack.c.l.b16 %v3856
    %v4569 = vunpack.c.h.b16 %v3856
    %v4570 = vunpack.c.l.b16 %v3857
    %v4571 = vunpack.c.h.b16 %v3857
    %v4572 = vunpack.c.l.b16 %v3858
    %v4573 = vunpack.c.l.b16 %v3859
    %v4574 = vunpack.c.h.b16 %v3859
    %v4575 = vunpack.c.l.b16 %v3860
    %v4576 = vunpack.c.h.b16 %v3860
    %v4577 = vunpack.c.l.b16 %v3861
    %v4578 = vunpack.c.h.b16 %v3861
    %v4579 = vunpack.c.l.b16 %v3862
    %v4580 = vunpack.c.l.b16 %v3863
    %v4581 = vunpack.c.h.b16 %v3863
    %v4582 = vunpack.c.l.b16 %v3864
    %v4583 = vunpack.c.h.b16 %v3864
    %v4584 = vunpack.c.l.b16 %v3865
    %v4585 = vunpack.c.h.b16 %v3865
    %v4586 = vunpack.c.l.b16 %v3866
    %v4587 = vunpack.c.l.b16 %v3867
    %v4588 = vunpack.c.h.b16 %v3867
    %v4589 = vunpack.c.l.b16 %v3868
    %v4590 = vunpack.c.h.b16 %v3868
    %v4591 = vunpack.c.l.b16 %v3869
    %v4592 = vunpack.c.h.b16 %v3869
    %v4593 = vunpack.c.l.b16 %v3870
    %v4594 = vunpack.c.l.b16 %v3871
    %v4595 = vunpack.c.h.b16 %v3871
    %v4596 = vunpack.c.l.b16 %v3872
    %v4597 = vunpack.c.h.b16 %v3872
    %v4598 = vunpack.c.l.b16 %v3873
    %v4599 = vunpack.c.h.b16 %v3873
    %v4600 = vunpack.c.l.b16 %v3874
    %v4601 = vunpack.c.l.b16 %v3875
    %v4602 = vunpack.c.h.b16 %v3875
    %v4603 = vunpack.c.l.b16 %v3876
    %v4604 = vunpack.c.h.b16 %v3876
    %v4605 = vunpack.c.l.b16 %v3877
    %v4606 = vunpack.c.h.b16 %v3877
    %v4607 = vunpack.c.l.b16 %v3878
    %v4608 = vunpack.c.l.b16 %v3879
    %v4609 = vunpack.c.h.b16 %v3879
    %v4610 = vunpack.c.l.b16 %v3880
    %v4611 = vunpack.c.h.b16 %v3880
    %v4612 = vunpack.c.l.b16 %v3881
    %v4613 = vunpack.c.h.b16 %v3881
    %v4614 = vunpack.c.l.b16 %v3882
    %v4615 = vunpack.c.l.b16 %v3883
    %v4616 = vunpack.c.h.b16 %v3883
    %v4617 = vunpack.c.l.b16 %v3884
    %v4618 = vunpack.c.h.b16 %v3884
    %v4619 = vunpack.c.l.b16 %v3885
    %v4620 = vunpack.c.h.b16 %v3885
    %v4621 = vunpack.c.l.b16 %v3886
    %v4622 = vunpack.c.l.b16 %v3887
    %v4623 = vunpack.c.h.b16 %v3887
    %v4624 = vunpack.c.l.b16 %v3888
    %v4625 = vunpack.c.h.b16 %v3888
    %v4626 = vunpack.c.l.b16 %v3889
    %v4627 = vunpack.c.h.b16 %v3889
    %v4628 = vunpack.c.l.b16 %v3890
    %v4629 = vunpack.c.l.b16 %v3891
    %v4630 = vunpack.c.h.b16 %v3891
    %v4631 = vunpack.c.l.b16 %v3892
    %v4632 = vunpack.c.h.b16 %v3892
    %v4633 = vunpack.c.l.b16 %v3893
    %v4634 = vunpack.c.h.b16 %v3893
    %v4635 = vunpack.c.l.b16 %v3894
    %v4636 = vpack.c.b16 %v4195, %v4188
    %v4637 = vpack.c.b16 %v4196, %v4189
    %v4638 = vpack.c.b16 %v4197, %v4190
    %v4639 = vpack.c.b16 %v4198, %v4191
    %v4640 = vpack.c.b16 %v4199, %v4192
    %v4641 = vpack.c.b16 %v4200, %v4193
    %v4642 = vpack.c.b16 %v4201, %v4194
    %v4643 = vpack.c.b16 %v4209, %v4202
    %v4644 = vpack.c.b16 %v4210, %v4203
    %v4645 = vpack.c.b16 %v4211, %v4204
    %v4646 = vpack.c.b16 %v4212, %v4205
    %v4647 = vpack.c.b16 %v4213, %v4206
    %v4648 = vpack.c.b16 %v4214, %v4207
    %v4649 = vpack.c.b16 %v4215, %v4208
    %v4650 = vpack.c.b16 %v4223, %v4216
    %v4651 = vpack.c.b16 %v4224, %v4217
    %v4652 = vpack.c.b16 %v4225, %v4218
    %v4653 = vpack.c.b16 %v4226, %v4219
    %v4654 = vpack.c.b16 %v4227, %v4220
    %v4655 = vpack.c.b16 %v4228, %v4221
    %v4656 = vpack.c.b16 %v4229, %v4222
    %v4657 = vpack.c.b16 %v4237, %v4230
    %v4658 = vpack.c.b16 %v4238, %v4231
    %v4659 = vpack.c.b16 %v4239, %v4232
    %v4660 = vpack.c.b16 %v4240, %v4233
    %v4661 = vpack.c.b16 %v4241, %v4234
    %v4662 = vpack.c.b16 %v4242, %v4235
    %v4663 = vpack.c.b16 %v4243, %v4236
    %v4664 = vpack.c.b16 %v4251, %v4244
    %v4665 = vpack.c.b16 %v4252, %v4245
    %v4666 = vpack.c.b16 %v4253, %v4246
    %v4667 = vpack.c.b16 %v4254, %v4247
    %v4668 = vpack.c.b16 %v4255, %v4248
    %v4669 = vpack.c.b16 %v4256, %v4249
    %v4670 = vpack.c.b16 %v4257, %v4250
    %v4671 = vpack.c.b16 %v4265, %v4258
    %v4672 = vpack.c.b16 %v4266, %v4259
    %v4673 = vpack.c.b16 %v4267, %v4260
    %v4674 = vpack.c.b16 %v4268, %v4261
    %v4675 = vpack.c.b16 %v4269, %v4262
    %v4676 = vpack.c.b16 %v4270, %v4263
    %v4677 = vpack.c.b16 %v4271, %v4264
    %v4678 = vpack.c.b16 %v4279, %v4272
    %v4679 = vpack.c.b16 %v4280, %v4273
    %v4680 = vpack.c.b16 %v4281, %v4274
    %v4681 = vpack.c.b16 %v4282, %v4275
    %v4682 = vpack.c.b16 %v4283, %v4276
    %v4683 = vpack.c.b16 %v4284, %v4277
    %v4684 = vpack.c.b16 %v4285, %v4278
    %v4685 = vpack.c.b16 %v4293, %v4286
    %v4686 = vpack.c.b16 %v4294, %v4287
    %v4687 = vpack.c.b16 %v4295, %v4288
    %v4688 = vpack.c.b16 %v4296, %v4289
    %v4689 = vpack.c.b16 %v4297, %v4290
    %v4690 = vpack.c.b16 %v4298, %v4291
    %v4691 = vpack.c.b16 %v4299, %v4292
    %v4692 = vpack.c.b16 %v4307, %v4300
    %v4693 = vpack.c.b16 %v4308, %v4301
    %v4694 = vpack.c.b16 %v4309, %v4302
    %v4695 = vpack.c.b16 %v4310, %v4303
    %v4696 = vpack.c.b16 %v4311, %v4304
    %v4697 = vpack.c.b16 %v4312, %v4305
    %v4698 = vpack.c.b16 %v4313, %v4306
    %v4699 = vpack.c.b16 %v4321, %v4314
    %v4700 = vpack.c.b16 %v4322, %v4315
    %v4701 = vpack.c.b16 %v4323, %v4316
    %v4702 = vpack.c.b16 %v4324, %v4317
    %v4703 = vpack.c.b16 %v4325, %v4318
    %v4704 = vpack.c.b16 %v4326, %v4319
    %v4705 = vpack.c.b16 %v4327, %v4320
    %v4706 = vpack.c.b16 %v4335, %v4328
    %v4707 = vpack.c.b16 %v4336, %v4329
    %v4708 = vpack.c.b16 %v4337, %v4330
    %v4709 = vpack.c.b16 %v4338, %v4331
    %v4710 = vpack.c.b16 %v4339, %v4332
    %v4711 = vpack.c.b16 %v4340, %v4333
    %v4712 = vpack.c.b16 %v4341, %v4334
    %v4713 = vpack.c.b16 %v4349, %v4342
    %v4714 = vpack.c.b16 %v4350, %v4343
    %v4715 = vpack.c.b16 %v4351, %v4344
    %v4716 = vpack.c.b16 %v4352, %v4345
    %v4717 = vpack.c.b16 %v4353, %v4346
    %v4718 = vpack.c.b16 %v4354, %v4347
    %v4719 = vpack.c.b16 %v4355, %v4348
    %v4720 = vpack.c.b16 %v4363, %v4356
    %v4721 = vpack.c.b16 %v4364, %v4357
    %v4722 = vpack.c.b16 %v4365, %v4358
    %v4723 = vpack.c.b16 %v4366, %v4359
    %v4724 = vpack.c.b16 %v4367, %v4360
    %v4725 = vpack.c.b16 %v4368, %v4361
    %v4726 = vpack.c.b16 %v4369, %v4362
    %v4727 = vpack.c.b16 %v4377, %v4370
    %v4728 = vpack.c.b16 %v4378, %v4371
    %v4729 = vpack.c.b16 %v4379, %v4372
    %v4730 = vpack.c.b16 %v4380, %v4373
    %v4731 = vpack.c.b16 %v4381, %v4374
    %v4732 = vpack.c.b16 %v4382, %v4375
    %v4733 = vpack.c.b16 %v4383, %v4376
    %v4734 = vpack.c.b16 %v4391, %v4384
    %v4735 = vpack.c.b16 %v4392, %v4385
    %v4736 = vpack.c.b16 %v4393, %v4386
    %v4737 = vpack.c.b16 %v4394, %v4387
    %v4738 = vpack.c.b16 %v4395, %v4388
    %v4739 = vpack.c.b16 %v4396, %v4389
    %v4740 = vpack.c.b16 %v4397, %v4390
    %v4741 = vpack.c.b16 %v4405, %v4398
    %v4742 = vpack.c.b16 %v4406, %v4399
    %v4743 = vpack.c.b16 %v4407, %v4400
    %v4744 = vpack.c.b16 %v4408, %v4401
    %v4745 = vpack.c.b16 %v4409, %v4402
    %v4746 = vpack.c.b16 %v4410, %v4403
    %v4747 = vpack.c.b16 %v4411, %v4404
    %v4748 = vpack.c.b16 %v4419, %v4412
    %v4749 = vpack.c.b16 %v4420, %v4413
    %v4750 = vpack.c.b16 %v4421, %v4414
    %v4751 = vpack.c.b16 %v4422, %v4415
    %v4752 = vpack.c.b16 %v4423, %v4416
    %v4753 = vpack.c.b16 %v4424, %v4417
    %v4754 = vpack.c.b16 %v4425, %v4418
    %v4755 = vpack.c.b16 %v4433, %v4426
    %v4756 = vpack.c.b16 %v4434, %v4427
    %v4757 = vpack.c.b16 %v4435, %v4428
    %v4758 = vpack.c.b16 %v4436, %v4429
    %v4759 = vpack.c.b16 %v4437, %v4430
    %v4760 = vpack.c.b16 %v4438, %v4431
    %v4761 = vpack.c.b16 %v4439, %v4432
    %v4762 = vpack.c.b16 %v4447, %v4440
    %v4763 = vpack.c.b16 %v4448, %v4441
    %v4764 = vpack.c.b16 %v4449, %v4442
    %v4765 = vpack.c.b16 %v4450, %v4443
    %v4766 = vpack.c.b16 %v4451, %v4444
    %v4767 = vpack.c.b16 %v4452, %v4445
    %v4768 = vpack.c.b16 %v4453, %v4446
    %v4769 = vpack.c.b16 %v4461, %v4454
    %v4770 = vpack.c.b16 %v4462, %v4455
    %v4771 = vpack.c.b16 %v4463, %v4456
    %v4772 = vpack.c.b16 %v4464, %v4457
    %v4773 = vpack.c.b16 %v4465, %v4458
    %v4774 = vpack.c.b16 %v4466, %v4459
    %v4775 = vpack.c.b16 %v4467, %v4460
    %v4776 = vpack.c.b16 %v4475, %v4468
    %v4777 = vpack.c.b16 %v4476, %v4469
    %v4778 = vpack.c.b16 %v4477, %v4470
    %v4779 = vpack.c.b16 %v4478, %v4471
    %v4780 = vpack.c.b16 %v4479, %v4472
    %v4781 = vpack.c.b16 %v4480, %v4473
    %v4782 = vpack.c.b16 %v4481, %v4474
    %v4783 = vpack.c.b16 %v4489, %v4482
    %v4784 = vpack.c.b16 %v4490, %v4483
    %v4785 = vpack.c.b16 %v4491, %v4484
    %v4786 = vpack.c.b16 %v4492, %v4485
    %v4787 = vpack.c.b16 %v4493, %v4486
    %v4788 = vpack.c.b16 %v4494, %v4487
    %v4789 = vpack.c.b16 %v4495, %v4488
    %v4790 = vpack.c.b16 %v4503, %v4496
    %v4791 = vpack.c.b16 %v4504, %v4497
    %v4792 = vpack.c.b16 %v4505, %v4498
    %v4793 = vpack.c.b16 %v4506, %v4499
    %v4794 = vpack.c.b16 %v4507, %v4500
    %v4795 = vpack.c.b16 %v4508, %v4501
    %v4796 = vpack.c.b16 %v4509, %v4502
    %v4797 = vpack.c.b16 %v4517, %v4510
    %v4798 = vpack.c.b16 %v4518, %v4511
    %v4799 = vpack.c.b16 %v4519, %v4512
    %v4800 = vpack.c.b16 %v4520, %v4513
    %v4801 = vpack.c.b16 %v4521, %v4514
    %v4802 = vpack.c.b16 %v4522, %v4515
    %v4803 = vpack.c.b16 %v4523, %v4516
    %v4804 = vpack.c.b16 %v4531, %v4524
    %v4805 = vpack.c.b16 %v4532, %v4525
    %v4806 = vpack.c.b16 %v4533, %v4526
    %v4807 = vpack.c.b16 %v4534, %v4527
    %v4808 = vpack.c.b16 %v4535, %v4528
    %v4809 = vpack.c.b16 %v4536, %v4529
    %v4810 = vpack.c.b16 %v4537, %v4530
    %v4811 = vpack.c.b16 %v4545, %v4538
    %v4812 = vpack.c.b16 %v4546, %v4539
    %v4813 = vpack.c.b16 %v4547, %v4540
    %v4814 = vpack.c.b16 %v4548, %v4541
    %v4815 = vpack.c.b16 %v4549, %v4542
    %v4816 = vpack.c.b16 %v4550, %v4543
    %v4817 = vpack.c.b16 %v4551, %v4544
    %v4818 = vpack.c.b16 %v4559, %v4552
    %v4819 = vpack.c.b16 %v4560, %v4553
    %v4820 = vpack.c.b16 %v4561, %v4554
    %v4821 = vpack.c.b16 %v4562, %v4555
    %v4822 = vpack.c.b16 %v4563, %v4556
    %v4823 = vpack.c.b16 %v4564, %v4557
    %v4824 = vpack.c.b16 %v4565, %v4558
    %v4825 = vpack.c.b16 %v4573, %v4566
    %v4826 = vpack.c.b16 %v4574, %v4567
    %v4827 = vpack.c.b16 %v4575, %v4568
    %v4828 = vpack.c.b16 %v4576, %v4569
    %v4829 = vpack.c.b16 %v4577, %v4570
    %v4830 = vpack.c.b16 %v4578, %v4571
    %v4831 = vpack.c.b16 %v4579, %v4572
    %v4832 = vpack.c.b16 %v4587, %v4580
    %v4833 = vpack.c.b16 %v4588, %v4581
    %v4834 = vpack.c.b16 %v4589, %v4582
    %v4835 = vpack.c.b16 %v4590, %v4583
    %v4836 = vpack.c.b16 %v4591, %v4584
    %v4837 = vpack.c.b16 %v4592, %v4585
    %v4838 = vpack.c.b16 %v4593, %v4586
    %v4839 = vpack.c.b16 %v4601, %v4594
    %v4840 = vpack.c.b16 %v4602, %v4595
    %v4841 = vpack.c.b16 %v4603, %v4596
    %v4842 = vpack.c.b16 %v4604, %v4597
    %v4843 = vpack.c.b16 %v4605, %v4598
    %v4844 = vpack.c.b16 %v4606, %v4599
    %v4845 = vpack.c.b16 %v4607, %v4600
    %v4846 = vpack.c.b16 %v4615, %v4608
    %v4847 = vpack.c.b16 %v4616, %v4609
    %v4848 = vpack.c.b16 %v4617, %v4610
    %v4849 = vpack.c.b16 %v4618, %v4611
    %v4850 = vpack.c.b16 %v4619, %v4612
    %v4851 = vpack.c.b16 %v4620, %v4613
    %v4852 = vpack.c.b16 %v4621, %v4614
    %v4853 = vpack.c.b16 %v4629, %v4622
    %v4854 = vpack.c.b16 %v4630, %v4623
    %v4855 = vpack.c.b16 %v4631, %v4624
    %v4856 = vpack.c.b16 %v4632, %v4625
    %v4857 = vpack.c.b16 %v4633, %v4626
    %v4858 = vpack.c.b16 %v4634, %v4627
    %v4859 = vpack.c.b16 %v4635, %v4628
    %5084 = vmatprep.subr.bf16.mxu0 %v4637
    %5085 = vmatpush1.bf16.msra.mxu0 %v4636
    %5086 = vmatprep.subr.bf16.mxu0 %v4644
    %5087 = vmatpush1.bf16.msra.mxu0 %v4643
    %5088 = vmatprep.subr.bf16.mxu0 %v4651
    %5089 = vmatpush1.bf16.msra.mxu0 %v4650
    %5090 = vmatprep.subr.bf16.mxu0 %v4658
    %5091 = vmatpush1.bf16.msra.mxu0 %v4657
    %5092 = vmatprep.subr.bf16.mxu0 %v4665
    %5093 = vmatpush1.bf16.msra.mxu0 %v4664
    %5094 = vmatprep.subr.bf16.mxu0 %v4672
    %5095 = vmatpush1.bf16.msra.mxu0 %v4671
    %5096 = vmatprep.subr.bf16.mxu0 %v4679
    %5097 = vmatpush1.bf16.msra.mxu0 %v4678
    %5098 = vmatprep.subr.bf16.mxu0 %v4686
    %5099 = vmatpush1.bf16.msra.mxu0 %v4685
    %5100 = vmatprep.subr.bf16.mxu0 %v4693
    %5101 = vmatpush1.bf16.msra.mxu0 %v4692
    %5102 = vmatprep.subr.bf16.mxu0 %v4700
    %5103 = vmatpush1.bf16.msra.mxu0 %v4699
    %5104 = vmatprep.subr.bf16.mxu0 %v4707
    %5105 = vmatpush1.bf16.msra.mxu0 %v4706
    %5106 = vmatprep.subr.bf16.mxu0 %v4714
    %5107 = vmatpush1.bf16.msra.mxu0 %v4713
    %5108 = vmatprep.subr.bf16.mxu0 %v4721
    %5109 = vmatpush1.bf16.msra.mxu0 %v4720
    %5110 = vmatprep.subr.bf16.mxu0 %v4728
    %5111 = vmatpush1.bf16.msra.mxu0 %v4727
    %5112 = vmatprep.subr.bf16.mxu0 %v4735
    %5113 = vmatpush1.bf16.msra.mxu0 %v4734
    %5114 = vmatprep.subr.bf16.mxu0 %v4742
    %5115 = vmatpush1.bf16.msra.mxu0 %v4741
    %5116 = vmatprep.mubr.bf16.mxu0 %v3636
    %5117 = vmatmul.mubr.bf16.gmra.mrb[0].mxu0 %v3635
    %v5118 = vpop.f32.mrb[0].mxu0
    %v5119 = vadd.f32 %v3900, %v5118
    %v5120 = vpop.f32.mrb[0].mxu0
    %v5121 = vadd.f32 %v3904, %v5120
    %v5122 = vpop.f32.mrb[0].mxu0
    %v5123 = vadd.f32 %v3900, %v5122
    %v5124 = vpop.f32.mrb[0].mxu0
    %v5125 = vadd.f32 %v3904, %v5124
    %5126 = vdwg.mxu0
    %5127 = vmatprep.subr.bf16.mxu0 %v4749
    %5128 = vmatpush1.bf16.msra.mxu0 %v4748
    %5129 = vmatprep.subr.bf16.mxu0 %v4756
    %5130 = vmatpush1.bf16.msra.mxu0 %v4755
    %5131 = vmatprep.subr.bf16.mxu0 %v4763
    %5132 = vmatpush1.bf16.msra.mxu0 %v4762
    %5133 = vmatprep.subr.bf16.mxu0 %v4770
    %5134 = vmatpush1.bf16.msra.mxu0 %v4769
    %5135 = vmatprep.subr.bf16.mxu0 %v4777
    %5136 = vmatpush1.bf16.msra.mxu0 %v4776
    %5137 = vmatprep.subr.bf16.mxu0 %v4784
    %5138 = vmatpush1.bf16.msra.mxu0 %v4783
    %5139 = vmatprep.subr.bf16.mxu0 %v4791
    %5140 = vmatpush1.bf16.msra.mxu0 %v4790
    %5141 = vmatprep.subr.bf16.mxu0 %v4798
    %5142 = vmatpush1.bf16.msra.mxu0 %v4797
    %5143 = vmatprep.subr.bf16.mxu0 %v4805
    %5144 = vmatpush1.bf16.msra.mxu0 %v4804
    %5145 = vmatprep.subr.bf16.mxu0 %v4812
    %5146 = vmatpush1.bf16.msra.mxu0 %v4811
    %5147 = vmatprep.subr.bf16.mxu0 %v4819
    %5148 = vmatpush1.bf16.msra.mxu0 %v4818
    %5149 = vmatprep.subr.bf16.mxu0 %v4826
    %5150 = vmatpush1.bf16.msra.mxu0 %v4825
    %5151 = vmatprep.subr.bf16.mxu0 %v4833
    %5152 = vmatpush1.bf16.msra.mxu0 %v4832
    %5153 = vmatprep.subr.bf16.mxu0 %v4840
    %5154 = vmatpush1.bf16.msra.mxu0 %v4839
    %5155 = vmatprep.subr.bf16.mxu0 %v4847
    %5156 = vmatpush1.bf16.msra.mxu0 %v4846
    %5157 = vmatprep.subr.bf16.mxu0 %v4854
    %5158 = vmatpush1.bf16.msra.mxu0 %v4853
    %5159 = vmatprep.mubr.bf16.mxu0 %v3638
    %5160 = vmatmul.mubr.bf16.gmra.mrb[0].mxu0 %v3637
    %v5161 = vpop.f32.mrb[0].mxu0
    %v5162 = vadd.f32 %v5119, %v5161
    %v5163 = vpop.f32.mrb[0].mxu0
    %v5164 = vadd.f32 %v5121, %v5163
    %v5165 = vpop.f32.mrb[0].mxu0
    %v5166 = vadd.f32 %v5123, %v5165
    %v5167 = vpop.f32.mrb[0].mxu0
    %v5168 = vadd.f32 %v5125, %v5167
    %5169 = vdwg.mxu0
    %5170 = vmatprep.subr.bf16.mxu0 %v4639
    %5171 = vmatpush1.bf16.msra.mxu0 %v4638
    %5172 = vmatprep.subr.bf16.mxu0 %v4646
    %5173 = vmatpush1.bf16.msra.mxu0 %v4645
    %5174 = vmatprep.subr.bf16.mxu0 %v4653
    %5175 = vmatpush1.bf16.msra.mxu0 %v4652
    %5176 = vmatprep.subr.bf16.mxu0 %v4660
    %5177 = vmatpush1.bf16.msra.mxu0 %v4659
    %5178 = vmatprep.subr.bf16.mxu0 %v4667
    %5179 = vmatpush1.bf16.msra.mxu0 %v4666
    %5180 = vmatprep.subr.bf16.mxu0 %v4674
    %5181 = vmatpush1.bf16.msra.mxu0 %v4673
    %5182 = vmatprep.subr.bf16.mxu0 %v4681
    %5183 = vmatpush1.bf16.msra.mxu0 %v4680
    %5184 = vmatprep.subr.bf16.mxu0 %v4688
    %5185 = vmatpush1.bf16.msra.mxu0 %v4687
    %5186 = vmatprep.subr.bf16.mxu0 %v4695
    %5187 = vmatpush1.bf16.msra.mxu0 %v4694
    %5188 = vmatprep.subr.bf16.mxu0 %v4702
    %5189 = vmatpush1.bf16.msra.mxu0 %v4701
    %5190 = vmatprep.subr.bf16.mxu0 %v4709
    %5191 = vmatpush1.bf16.msra.mxu0 %v4708
    %5192 = vmatprep.subr.bf16.mxu0 %v4716
    %5193 = vmatpush1.bf16.msra.mxu0 %v4715
    %5194 = vmatprep.subr.bf16.mxu0 %v4723
    %5195 = vmatpush1.bf16.msra.mxu0 %v4722
    %5196 = vmatprep.subr.bf16.mxu0 %v4730
    %5197 = vmatpush1.bf16.msra.mxu0 %v4729
    %5198 = vmatprep.subr.bf16.mxu0 %v4737
    %5199 = vmatpush1.bf16.msra.mxu0 %v4736
    %5200 = vmatprep.subr.bf16.mxu0 %v4744
    %5201 = vmatpush1.bf16.msra.mxu0 %v4743
    %5202 = vmatprep.mubr.bf16.mxu0 %v3636
    %5203 = vmatmul.mubr.bf16.gmra.mrb[0].mxu0 %v3635
    %v5204 = vpop.f32.mrb[0].mxu0
    %v5205 = vadd.f32 %v3908, %v5204
    %v5206 = vpop.f32.mrb[0].mxu0
    %v5207 = vadd.f32 %v3912, %v5206
    %v5208 = vpop.f32.mrb[0].mxu0
    %v5209 = vadd.f32 %v3908, %v5208
    %v5210 = vpop.f32.mrb[0].mxu0
    %v5211 = vadd.f32 %v3912, %v5210
    %5212 = vdwg.mxu0
    %5213 = vmatprep.subr.bf16.mxu0 %v4751
    %5214 = vmatpush1.bf16.msra.mxu0 %v4750
    %5215 = vmatprep.subr.bf16.mxu0 %v4758
    %5216 = vmatpush1.bf16.msra.mxu0 %v4757
    %5217 = vmatprep.subr.bf16.mxu0 %v4765
    %5218 = vmatpush1.bf16.msra.mxu0 %v4764
    %5219 = vmatprep.subr.bf16.mxu0 %v4772
    %5220 = vmatpush1.bf16.msra.mxu0 %v4771
    %5221 = vmatprep.subr.bf16.mxu0 %v4779
    %5222 = vmatpush1.bf16.msra.mxu0 %v4778
    %5223 = vmatprep.subr.bf16.mxu0 %v4786
    %5224 = vmatpush1.bf16.msra.mxu0 %v4785
    %5225 = vmatprep.subr.bf16.mxu0 %v4793
    %5226 = vmatpush1.bf16.msra.mxu0 %v4792
    %5227 = vmatprep.subr.bf16.mxu0 %v4800
    %5228 = vmatpush1.bf16.msra.mxu0 %v4799
    %5229 = vmatprep.subr.bf16.mxu0 %v4807
    %5230 = vmatpush1.bf16.msra.mxu0 %v4806
    %5231 = vmatprep.subr.bf16.mxu0 %v4814
    %5232 = vmatpush1.bf16.msra.mxu0 %v4813
    %5233 = vmatprep.subr.bf16.mxu0 %v4821
    %5234 = vmatpush1.bf16.msra.mxu0 %v4820
    %5235 = vmatprep.subr.bf16.mxu0 %v4828
    %5236 = vmatpush1.bf16.msra.mxu0 %v4827
    %5237 = vmatprep.subr.bf16.mxu0 %v4835
    %5238 = vmatpush1.bf16.msra.mxu0 %v4834
    %5239 = vmatprep.subr.bf16.mxu0 %v4842
    %5240 = vmatpush1.bf16.msra.mxu0 %v4841
    %5241 = vmatprep.subr.bf16.mxu0 %v4849
    %5242 = vmatpush1.bf16.msra.mxu0 %v4848
    %5243 = vmatprep.subr.bf16.mxu0 %v4856
    %5244 = vmatpush1.bf16.msra.mxu0 %v4855
    %5245 = vmatprep.mubr.bf16.mxu0 %v3638
    %5246 = vmatmul.mubr.bf16.gmra.mrb[0].mxu0 %v3637
    %v5247 = vpop.f32.mrb[0].mxu0
    %v5248 = vadd.f32 %v5205, %v5247
    %v5249 = vpop.f32.mrb[0].mxu0
    %v5250 = vadd.f32 %v5207, %v5249
    %v5251 = vpop.f32.mrb[0].mxu0
    %v5252 = vadd.f32 %v5209, %v5251
    %v5253 = vpop.f32.mrb[0].mxu0
    %v5254 = vadd.f32 %v5211, %v5253
    %5255 = vdwg.mxu0
    %5256 = vmatprep.subr.bf16.mxu0 %v4641
    %5257 = vmatpush1.bf16.msra.mxu0 %v4640
    %5258 = vmatprep.subr.bf16.mxu0 %v4648
    %5259 = vmatpush1.bf16.msra.mxu0 %v4647
    %5260 = vmatprep.subr.bf16.mxu0 %v4655
    %5261 = vmatpush1.bf16.msra.mxu0 %v4654
    %5262 = vmatprep.subr.bf16.mxu0 %v4662
    %5263 = vmatpush1.bf16.msra.mxu0 %v4661
    %5264 = vmatprep.subr.bf16.mxu0 %v4669
    %5265 = vmatpush1.bf16.msra.mxu0 %v4668
    %5266 = vmatprep.subr.bf16.mxu0 %v4676
    %5267 = vmatpush1.bf16.msra.mxu0 %v4675
    %5268 = vmatprep.subr.bf16.mxu0 %v4683
    %5269 = vmatpush1.bf16.msra.mxu0 %v4682
    %5270 = vmatprep.subr.bf16.mxu0 %v4690
    %5271 = vmatpush1.bf16.msra.mxu0 %v4689
    %5272 = vmatprep.subr.bf16.mxu0 %v4697
    %5273 = vmatpush1.bf16.msra.mxu0 %v4696
    %5274 = vmatprep.subr.bf16.mxu0 %v4704
    %5275 = vmatpush1.bf16.msra.mxu0 %v4703
    %5276 = vmatprep.subr.bf16.mxu0 %v4711
    %5277 = vmatpush1.bf16.msra.mxu0 %v4710
    %5278 = vmatprep.subr.bf16.mxu0 %v4718
    %5279 = vmatpush1.bf16.msra.mxu0 %v4717
    %5280 = vmatprep.subr.bf16.mxu0 %v4725
    %5281 = vmatpush1.bf16.msra.mxu0 %v4724
    %5282 = vmatprep.subr.bf16.mxu0 %v4732
    %5283 = vmatpush1.bf16.msra.mxu0 %v4731
    %5284 = vmatprep.subr.bf16.mxu0 %v4739
    %5285 = vmatpush1.bf16.msra.mxu0 %v4738
    %5286 = vmatprep.subr.bf16.mxu0 %v4746
    %5287 = vmatpush1.bf16.msra.mxu0 %v4745
    %5288 = vmatprep.mubr.bf16.mxu0 %v3636
    %5289 = vmatmul.mubr.bf16.gmra.mrb[0].mxu0 %v3635
    %v5290 = vpop.f32.mrb[0].mxu0
    %v5291 = vadd.f32 %v3916, %v5290
    %v5292 = vpop.f32.mrb[0].mxu0
    %v5293 = vadd.f32 %v3920, %v5292
    %v5294 = vpop.f32.mrb[0].mxu0
    %v5295 = vadd.f32 %v3916, %v5294
    %v5296 = vpop.f32.mrb[0].mxu0
    %v5297 = vadd.f32 %v3920, %v5296
    %5298 = vdwg.mxu0
    %5299 = vmatprep.subr.bf16.mxu0 %v4753
    %5300 = vmatpush1.bf16.msra.mxu0 %v4752
    %5301 = vmatprep.subr.bf16.mxu0 %v4760
    %5302 = vmatpush1.bf16.msra.mxu0 %v4759
    %5303 = vmatprep.subr.bf16.mxu0 %v4767
    %5304 = vmatpush1.bf16.msra.mxu0 %v4766
    %5305 = vmatprep.subr.bf16.mxu0 %v4774
    %5306 = vmatpush1.bf16.msra.mxu0 %v4773
    %5307 = vmatprep.subr.bf16.mxu0 %v4781
    %5308 = vmatpush1.bf16.msra.mxu0 %v4780
    %5309 = vmatprep.subr.bf16.mxu0 %v4788
    %5310 = vmatpush1.bf16.msra.mxu0 %v4787
    %5311 = vmatprep.subr.bf16.mxu0 %v4795
    %5312 = vmatpush1.bf16.msra.mxu0 %v4794
    %5313 = vmatprep.subr.bf16.mxu0 %v4802
    %5314 = vmatpush1.bf16.msra.mxu0 %v4801
    %5315 = vmatprep.subr.bf16.mxu0 %v4809
    %5316 = vmatpush1.bf16.msra.mxu0 %v4808
    %5317 = vmatprep.subr.bf16.mxu0 %v4816
    %5318 = vmatpush1.bf16.msra.mxu0 %v4815
    %5319 = vmatprep.subr.bf16.mxu0 %v4823
    %5320 = vmatpush1.bf16.msra.mxu0 %v4822
    %5321 = vmatprep.subr.bf16.mxu0 %v4830
    %5322 = vmatpush1.bf16.msra.mxu0 %v4829
    %5323 = vmatprep.subr.bf16.mxu0 %v4837
    %5324 = vmatpush1.bf16.msra.mxu0 %v4836
    %5325 = vmatprep.subr.bf16.mxu0 %v4844
    %5326 = vmatpush1.bf16.msra.mxu0 %v4843
    %5327 = vmatprep.subr.bf16.mxu0 %v4851
    %5328 = vmatpush1.bf16.msra.mxu0 %v4850
    %5329 = vmatprep.subr.bf16.mxu0 %v4858
    %5330 = vmatpush1.bf16.msra.mxu0 %v4857
    %5331 = vmatprep.mubr.bf16.mxu0 %v3638
    %5332 = vmatmul.mubr.bf16.gmra.mrb[0].mxu0 %v3637
    %v5333 = vpop.f32.mrb[0].mxu0
    %v5334 = vadd.f32 %v5291, %v5333
    %v5335 = vpop.f32.mrb[0].mxu0
    %v5336 = vadd.f32 %v5293, %v5335
    %v5337 = vpop.f32.mrb[0].mxu0
    %v5338 = vadd.f32 %v5295, %v5337
    %v5339 = vpop.f32.mrb[0].mxu0
    %v5340 = vadd.f32 %v5297, %v5339
    %5341 = vdwg.mxu0
    %5342 = vmatprep.subr.bf16.mxu0 0
    %5343 = vmatpush1.bf16.msra.mxu0 %v4642
    %5344 = vmatprep.subr.bf16.mxu0 0
    %5345 = vmatpush1.bf16.msra.mxu0 %v4649
    %5346 = vmatprep.subr.bf16.mxu0 0
    %5347 = vmatpush1.bf16.msra.mxu0 %v4656
    %5348 = vmatprep.subr.bf16.mxu0 0
    %5349 = vmatpush1.bf16.msra.mxu0 %v4663
    %5350 = vmatprep.subr.bf16.mxu0 0
    %5351 = vmatpush1.bf16.msra.mxu0 %v4670
    %5352 = vmatprep.subr.bf16.mxu0 0
    %5353 = vmatpush1.bf16.msra.mxu0 %v4677
    %5354 = vmatprep.subr.bf16.mxu0 0
    %5355 = vmatpush1.bf16.msra.mxu0 %v4684
    %5356 = vmatprep.subr.bf16.mxu0 0
    %5357 = vmatpush1.bf16.msra.mxu0 %v4691
    %5358 = vmatprep.subr.bf16.mxu0 0
    %5359 = vmatpush1.bf16.msra.mxu0 %v4698
    %5360 = vmatprep.subr.bf16.mxu0 0
    %5361 = vmatpush1.bf16.msra.mxu0 %v4705
    %5362 = vmatprep.subr.bf16.mxu0 0
    %5363 = vmatpush1.bf16.msra.mxu0 %v4712
    %5364 = vmatprep.subr.bf16.mxu0 0
    %5365 = vmatpush1.bf16.msra.mxu0 %v4719
    %5366 = vmatprep.subr.bf16.mxu0 0
    %5367 = vmatpush1.bf16.msra.mxu0 %v4726
    %5368 = vmatprep.subr.bf16.mxu0 0
    %5369 = vmatpush1.bf16.msra.mxu0 %v4733
    %5370 = vmatprep.subr.bf16.mxu0 0
    %5371 = vmatpush1.bf16.msra.mxu0 %v4740
    %5372 = vmatprep.subr.bf16.mxu0 0
    %5373 = vmatpush1.bf16.msra.mxu0 %v4747
    %5374 = vmatprep.mubr.bf16.mxu0 %v3636
    %5375 = vmatmul.mubr.bf16.gmra.mrb[0].mxu0 %v3635
    %v5376 = vpop.f32.mrb[0].mxu0
    %v5377 = vadd.f32 %v3924, %v5376
    %v5378 = vpop.f32.mrb[0].mxu0
    %v5379 = vpop.f32.mrb[0].mxu0
    %v5380 = vadd.f32 %v3924, %v5379
    %v5381 = vpop.f32.mrb[0].mxu0
    %5382 = vdwg.mxu0
    %5383 = vmatprep.subr.bf16.mxu0 0
    %5384 = vmatpush1.bf16.msra.mxu0 %v4754
    %5385 = vmatprep.subr.bf16.mxu0 0
    %5386 = vmatpush1.bf16.msra.mxu0 %v4761
    %5387 = vmatprep.subr.bf16.mxu0 0
    %5388 = vmatpush1.bf16.msra.mxu0 %v4768
    %5389 = vmatprep.subr.bf16.mxu0 0
    %5390 = vmatpush1.bf16.msra.mxu0 %v4775
    %5391 = vmatprep.subr.bf16.mxu0 0
    %5392 = vmatpush1.bf16.msra.mxu0 %v4782
    %5393 = vmatprep.subr.bf16.mxu0 0
    %5394 = vmatpush1.bf16.msra.mxu0 %v4789
    %5395 = vmatprep.subr.bf16.mxu0 0
    %5396 = vmatpush1.bf16.msra.mxu0 %v4796
    %5397 = vmatprep.subr.bf16.mxu0 0
    %5398 = vmatpush1.bf16.msra.mxu0 %v4803
    %5399 = vmatprep.subr.bf16.mxu0 0
    %5400 = vmatpush1.bf16.msra.mxu0 %v4810
    %5401 = vmatprep.subr.bf16.mxu0 0
    %5402 = vmatpush1.bf16.msra.mxu0 %v4817
    %5403 = vmatprep.subr.bf16.mxu0 0
    %5404 = vmatpush1.bf16.msra.mxu0 %v4824
    %5405 = vmatprep.subr.bf16.mxu0 0
    %5406 = vmatpush1.bf16.msra.mxu0 %v4831
    %5407 = vmatprep.subr.bf16.mxu0 0
    %5408 = vmatpush1.bf16.msra.mxu0 %v4838
    %5409 = vmatprep.subr.bf16.mxu0 0
    %5410 = vmatpush1.bf16.msra.mxu0 %v4845
    %5411 = vmatprep.subr.bf16.mxu0 0
    %5412 = vmatpush1.bf16.msra.mxu0 %v4852
    %5413 = vmatprep.subr.bf16.mxu0 0
    %5414 = vmatpush1.bf16.msra.mxu0 %v4859
    %5415 = vmatprep.mubr.bf16.mxu0 %v3638
    %5416 = vmatmul.mubr.bf16.gmra.mrb[0].mxu0 %v3637
    %v5417 = vpop.f32.mrb[0].mxu0
    %v5418 = vadd.f32 %v5377, %v5417
    %v5419 = vpop.f32.mrb[0].mxu0
    %v5420 = vpop.f32.mrb[0].mxu0
    %v5421 = vadd.f32 %v5380, %v5420
    %v5422 = vpop.f32.mrb[0].mxu0
    %5423 = vdwg.mxu0
    %v5424 = vpack.c.bf16 %v5166, %v5162
    %v5425 = vpack.c.bf16 %v5168, %v5164
    %v5426 = vpack.c.bf16 %v5252, %v5248
    %v5427 = vpack.c.bf16 %v5254, %v5250
    %v5428 = vpack.c.bf16 %v5338, %v5334
    %v5429 = vpack.c.bf16 %v5340, %v5336
    %v5430 = vpack.c.bf16 %v5421, %v5418
    %v5438 = vunpack.c.l.b16 %v5424
    %v5439 = vunpack.c.l.b16 %v5425
    %v5440 = vunpack.c.l.b16 %v5426
    %v5441 = vunpack.c.l.b16 %v5427
    %v5442 = vunpack.c.l.b16 %v5428
    %v5443 = vunpack.c.l.b16 %v5429
    %v5444 = vunpack.c.l.b16 %v5430
    %v5445 = vunpack.c.h.b16 %v5424
    %v5446 = vunpack.c.h.b16 %v5425
    %v5447 = vunpack.c.h.b16 %v5426
    %v5448 = vunpack.c.h.b16 %v5427
    %v5449 = vunpack.c.h.b16 %v5428
    %v5450 = vunpack.c.h.b16 %v5429
    %v5451 = vunpack.c.h.b16 %v5430
    %v5452 = vpack.c.b16 %v5439, %v5438
    %v5453 = vpack.c.b16 %v5441, %v5440
    %v5454 = vpack.c.b16 %v5443, %v5442
    %v5455 = vpack.c.b16 %v5444, %v5444
    %v5456 = vpack.c.b16 %v5446, %v5445
    %v5457 = vpack.c.b16 %v5448, %v5447
    %v5458 = vpack.c.b16 %v5450, %v5449
    %v5459 = vpack.c.b16 %v5451, %v5451
    %5468 = vst [vmem:[#allocation19] sm:$0xff] %v5452
    %5469 = vst [vmem:[#allocation19 + $0x8] sm:$0xff] %v5453
    %5470 = vst [vmem:[#allocation19 + $0x10] sm:$0xff] %v5454
    %5471 = vst [vmem:[#allocation19 + $0x18] sm:$0xf] %v5455
    %5472 = vst [vmem:[#allocation19 + $0x1c] sm:$0xff] %v5456
    %5473 = vst [vmem:[#allocation19 + $0x24] sm:$0xff] %v5457
    %5474 = vst [vmem:[#allocation19 + $0x2c] sm:$0xff] %v5458
    %5475 = vst [vmem:[#allocation19 + $0x34] sm:$0xf] %v5459
    // Predicated region
    $region118: #{tpu_custom_call.1} parent=1 // pred_check
      _
    $region119: #{tpu_custom_call.1} parent=1 // pred_check_branch
      %5477 = sbr.rel (0) target = $region121
    $region120: #{tpu_custom_call.1} parent=1 // pred_region
      %s5479 = ssub.s32 896, 896
      %5480 = vsyncadd [#allocation4], %s5479
      %s5481 = sshll.u32 [#allocation19], 4
      %s5482 = int_to_ptr.vmem [resolvable:$true] %s5481
      %5487 = dma.vmem_to_hbm [thread:$0]  %s5482, 896, %s19, [#allocation4], 448, 448, 28
    $region121: #{tpu_custom_call.1} parent=1 // pred_fallthru
      _
    // Predicated region
    $region122: #{tpu_custom_call.1} parent=1 // pred_check
      _
    $region123: #{tpu_custom_call.1} parent=1 // pred_check_branch
      %5489 = sbr.rel (0) target = $region125
    $region124: #{tpu_custom_call.1} parent=1 // pred_region
      %5490 = dma.done [#allocation4], 896
    $region125: #{tpu_custom_call.1} parent=1 // pred_fallthru
      _
    %5491 = vsyncpa [#allocation3], 1
    %5492 = vsyncpa [#allocation6], 1
    %5493 = vsyncpa [#allocation9], 1
    %5494 = vsyncpa [#allocation12], 1
    %5495 = vsyncpa [#allocation15], 1
    %5496 = vsyncpa [#allocation18], 1
    %5497 = vsyncpa [#allocation4], 1

</llo_original>
